<compile_context>
chip_gen: v5e
topology: v5e:2x2
jax: 0.10.0
libtpu: 0.0.40
codegen_flags: <defaults>
</compile_context>

<pallas_src>
import math

import jax
import jax.numpy as jnp
from jax.experimental import pallas as pl
from jax.experimental.pallas import tpu as pltpu


def block_kernel(bf_ref, pos_ref, te_ref,
                 ln_g_ref, ln_b_ref,
                 w_tok_ref, b_tok_ref,
                 whh_f_ref, whh_b_ref,
                 bconv_ref,
                 wct_ref, bct_ref,
                 wlt_ref, blt_ref,
                 wat_ref, bat_ref,
                 gl_ref, bl_ref,
                 sarr_ref,
                 wfc_ref, bfc_ref,
                 logits_ref, sm0_ref):
    B, S, F = bf_ref.shape
    H = whh_f_ref.shape[0]          # lstm_hidden
    C = bconv_ref.shape[1]          # cnn_features
    KC = wct_ref.shape[0]
    K = KC // C                     # topk
    eps = 1e-5
    f32 = jnp.float32

    def layer_norm(x, g, b):
        mu = jnp.mean(x, axis=-1, keepdims=True)
        xc = x - mu
        var = jnp.mean(xc * xc, axis=-1, keepdims=True)
        return xc * jax.lax.rsqrt(var + eps) * g + b

    # ---- input embedding sum + LayerNorm ---------------------------------
    x = bf_ref[...] + pos_ref[...] + te_ref[...][:, None, :]
    xn = layer_norm(x, ln_g_ref[...][None], ln_b_ref[...][None])        # (B, S, F)
    xn2 = xn.reshape(B * S, F)

    # ---- single fused per-token matmul ------------------------------------
    # columns: [globals (H) | lstm fwd gates (4H) | lstm bwd gates (4H) | conv taps (3C)]
    Y = jnp.dot(xn2, w_tok_ref[...], preferred_element_type=f32) + b_tok_ref[...]

    go = Y[:, 0:H].reshape(B, S, H)
    avg = jnp.mean(go, axis=1)                                           # (B, H)

    gi = Y[:, H:9 * H].reshape(B, S, 8 * H)
    gi_f = gi[:, :, 0:4 * H]                                             # fwd input gates
    gi_b = gi[:, :, 4 * H:8 * H]                                         # bwd input gates

    taps = Y[:, 9 * H:9 * H + 3 * C].reshape(B, S, 3 * C)

    # ---- bidirectional LSTM: both directions fused per step ---------------
    # Only the final cell states (lstm_c[0], lstm_c[1]) are needed.
    # PyTorch gate order [i, f, g, o]; input projections are already hoisted.
    whh_f = whh_f_ref[...]
    whh_b = whh_b_ref[...]
    h = jnp.zeros((2 * B, H), f32)      # rows [0:B) = forward, [B:2B) = backward
    c = jnp.zeros((2 * B, H), f32)
    for t in range(S):                  # static unroll (S = 8)
        rec_f = jnp.dot(h[:B], whh_f, preferred_element_type=f32)
        rec_b = jnp.dot(h[B:], whh_b, preferred_element_type=f32)
        gates = jnp.concatenate([gi_f[:, t, :] + rec_f,
                                 gi_b[:, S - 1 - t, :] + rec_b], axis=0)  # (2B, 4H)
        i_g = jax.nn.sigmoid(gates[:, 0:H])
        f_g = jax.nn.sigmoid(gates[:, H:2 * H])
        g_g = jnp.tanh(gates[:, 2 * H:3 * H])
        o_g = jax.nn.sigmoid(gates[:, 3 * H:4 * H])
        c = f_g * c + i_g * g_g
        h = o_g * jnp.tanh(c)
    lstm_cat = jnp.concatenate([c[:B], c[B:]], axis=1)                   # (B, 2H)
    lstm_msg = (jnp.dot(lstm_cat, wlt_ref[...], preferred_element_type=f32)
                + blt_ref[...])                                          # (B, T)

    # ---- Conv1d(F, C, k=3, padding='same'): combine shifted tap outputs ----
    y_prev = taps[:, :, 0:C]          # tap applied to x[t-1]
    y_curr = taps[:, :, C:2 * C]      # tap applied to x[t]
    y_next = taps[:, :, 2 * C:3 * C]  # tap applied to x[t+1]
    zrow = jnp.zeros((B, 1, C), f32)
    conv = (jnp.concatenate([zrow, y_prev[:, :S - 1, :]], axis=1)
            + y_curr
            + jnp.concatenate([y_next[:, 1:, :], zrow], axis=1)
            + bconv_ref[...][None])                                      # (B, S, C)

    # ---- k-max pooling over the sequence (batch-vectorized) ---------------
    # rank[b,t,c] = #{t': v>v[t]} + #{t'<t: v==v[t]}   (earlier index wins ties)
    # slot[b,t,c] = position of t among selected indices (keeps sequence order)
    v_t = conv[:, :, None, :]                       # row index t
    v_tp = conv[:, None, :, :]                      # col index t'
    tt = jax.lax.broadcasted_iota(jnp.int32, (B, S, S, C), 1)
    ttp = jax.lax.broadcasted_iota(jnp.int32, (B, S, S, C), 2)
    beats = (v_tp > v_t) | ((v_tp == v_t) & (ttp < tt))
    rank = jnp.sum(beats.astype(jnp.int32), axis=2)                      # (B, S, C)
    selected = rank < K
    below = selected[:, None, :, :] & (ttp < tt)
    slot = jnp.sum(below.astype(jnp.int32), axis=2)                      # (B, S, C)

    # Gather the K selected values per channel into a lane-flattened (B, K*C)
    # layout, then apply conv_turn as ONE matmul.
    val_blocks = []
    for j in range(K):                                                   # static (K = 5)
        take = jnp.where(selected & (slot == j), conv, 0.0)
        val_blocks.append(jnp.sum(take, axis=1))                         # (B, C)
    vals_flat = jnp.concatenate(val_blocks, axis=1)                      # (B, K*C)
    conv_msg = (jnp.dot(vals_flat, wct_ref[...], preferred_element_type=f32)
                + bct_ref[...])                                          # (B, T)

    avg_msg = jnp.dot(avg, wat_ref[...], preferred_element_type=f32) + bat_ref[...]

    # ---- scoring: one stacked LayerNorm + lane reduction -------------------
    # scores @ rate_matrix summed over its 4 columns == dot with column-summed
    # rate vector (sarr_ref), then / sqrt(3); dropout is identity at eval.
    stacked = jnp.concatenate([conv_msg, lstm_msg, avg_msg], axis=0)     # (3B, T)
    ln_s = layer_norm(stacked, gl_ref[...], bl_ref[...])
    inv_sqrt_n = 1.0 / math.sqrt(3.0)
    w_all = jnp.sum(ln_s * sarr_ref[...], axis=1, keepdims=True) * inv_sqrt_n  # (3B,1)
    w_conv = w_all[0:B]
    w_lstm = w_all[B:2 * B]
    w_avg = w_all[2 * B:3 * B]

    # softmax over the three messages (dim=-1) -> merged message -> fc
    mmax = jnp.maximum(jnp.maximum(w_conv, w_lstm), w_avg)
    e_c = jnp.exp(w_conv - mmax)
    e_l = jnp.exp(w_lstm - mmax)
    e_a = jnp.exp(w_avg - mmax)
    inv_d = pl.reciprocal(e_c + e_l + e_a, approx=True)                  # (B, 1)
    merged = (conv_msg * (e_c * inv_d) + lstm_msg * (e_l * inv_d)
              + avg_msg * (e_a * inv_d))                                 # (B, T)
    logits_ref[...] = (jnp.dot(merged, wfc_ref[...], preferred_element_type=f32)
                       + bfc_ref[...])

    # second output: softmax(weighted, dim=0)  (over the batch axis),
    # assembled into one (B, 3) value -> single full store.
    col = jax.lax.broadcasted_iota(jnp.int32, (B, 3), 1)
    W = (jnp.where(col == 0, w_conv, 0.0)
         + jnp.where(col == 1, w_lstm, 0.0)
         + jnp.where(col == 2, w_avg, 0.0))                              # (B, 3)
    bmax = jnp.max(W, axis=0, keepdims=True)
    e0 = jnp.exp(W - bmax)
    sm0_ref[...] = e0 * pl.reciprocal(jnp.sum(e0, axis=0, keepdims=True), approx=True)


def make_params(key, F=128, H=128, C=128, topk=5, T=128, ncls=2):
    ks = list(jax.random.split(key, 22))

    def nrm(k, shape, s=0.08):
        return (s * jax.random.normal(k, shape)).astype(jnp.float32)

    p = {}
    # layernorm (applied to batch_feature; turn_dim == use_features == 128)
    p["ln_g"] = jnp.ones((1, F), jnp.float32)
    p["ln_b"] = jnp.zeros((1, F), jnp.float32)
    # globals: Linear(F, H)
    p["wg"] = nrm(ks[0], (F, H)); p["bg"] = nrm(ks[1], (1, H), 0.02)
    # LSTM forward / backward (PyTorch gate order i,f,g,o); bias = b_ih + b_hh fused
    p["wih_f"] = nrm(ks[2], (F, 4 * H)); p["whh_f"] = nrm(ks[3], (H, 4 * H))
    p["bias_f"] = nrm(ks[4], (1, 4 * H), 0.02)
    p["wih_b"] = nrm(ks[5], (F, 4 * H)); p["whh_b"] = nrm(ks[6], (H, 4 * H))
    p["bias_b"] = nrm(ks[7], (1, 4 * H), 0.02)
    # Conv1d(F, C, 3, padding='same'): taps for x[t-1], x[t], x[t+1]
    p["w0"] = nrm(ks[8], (F, C)); p["w1"] = nrm(ks[9], (F, C)); p["w2"] = nrm(ks[10], (F, C))
    p["bconv"] = nrm(ks[11], (1, C), 0.02)
    # conv_turn: Linear(topk*C, T); rearranged so wct[j, c, o] = W[o, c*topk + j]
    w_conv_turn = nrm(ks[12], (T, C * topk))
    p["wct"] = jnp.transpose(w_conv_turn.reshape(T, C, topk), (2, 1, 0))   # (topk, C, T)
    p["bct"] = nrm(ks[13], (1, T), 0.02)
    # lstm_turn: Linear(2H, T); avg_turn: Linear(H, T)
    p["wlt"] = nrm(ks[14], (2 * H, T)); p["blt"] = nrm(ks[15], (1, T), 0.02)
    p["wat"] = nrm(ks[16], (H, T)); p["bat"] = nrm(ks[17], (1, T), 0.02)
    # layer_norm_l
    p["gl"] = jnp.ones((1, T), jnp.float32); p["bl"] = jnp.zeros((1, T), jnp.float32)
    # scores_arrays = rate_turn(eye(T)) = W_rate.T + b_rate   (computed as glue)
    w_rate = nrm(ks[18], (4, T)); b_rate = nrm(ks[19], (1, 4), 0.02)
    p["sarr"] = jnp.transpose(w_rate) + b_rate                              # (T, 4)
    # fc: Linear(T, class_num)
    p["wfc"] = nrm(ks[20], (T, ncls)); p["bfc"] = nrm(ks[21], (1, ncls), 0.02)
    return p


def block_forward(batch_feature, pos_embedding, type_embed, p):
    B, S, F = batch_feature.shape
    H = p["whh_f"].shape[0]
    C = p["bconv"].shape[1]
    K, _, T = p["wct"].shape
    ncls = p["wfc"].shape[1]
    f32 = jnp.float32

    # ---- fold all per-token projections into ONE (F, 9H + 3C) weight ------
    # columns: [globals | lstm fwd gates | lstm bwd gates | conv taps (t-1, t, t+1)]
    w_token = jnp.concatenate(
        [p["wg"], p["wih_f"], p["wih_b"], p["w0"], p["w1"], p["w2"]], axis=1)
    b_token = jnp.concatenate(
        [p["bg"], p["bias_f"], p["bias_b"], jnp.zeros((1, 3 * C), f32)], axis=1)
    # conv_turn weights flattened so a single (B, K*C) @ (K*C, T) matmul applies them
    wct_flat = p["wct"].reshape(K * C, T)
    # rate matrix column-summed (the reference sums scores over dim=-1 anyway)
    sarr_vec = jnp.sum(p["sarr"], axis=1).reshape(1, T)

    inputs = [batch_feature, pos_embedding, type_embed,
              p["ln_g"], p["ln_b"],
              w_token, b_token,
              p["whh_f"], p["whh_b"],
              p["bconv"],
              wct_flat, p["bct"],
              p["wlt"], p["blt"],
              p["wat"], p["bat"],
              p["gl"], p["bl"],
              sarr_vec,
              p["wfc"], p["bfc"]]

    out_shape = (jax.ShapeDtypeStruct((B, ncls), f32),   # logits
                 jax.ShapeDtypeStruct((B, 3), f32))      # softmax(weighted, dim=0)

    in_specs = [pl.BlockSpec(a.shape, (lambda i, n=a.ndim: (0,) * n)) for a in inputs]
    out_specs = tuple(pl.BlockSpec(s.shape, (lambda i, n=len(s.shape): (0,) * n))
                      for s in out_shape)

    grid_spec = pltpu.PrefetchScalarGridSpec(
        num_scalar_prefetch=0, grid=(1,),
        in_specs=in_specs, out_specs=out_specs)

    fn = pl.pallas_call(
        block_kernel,
        out_shape=out_shape,
        grid_spec=grid_spec,
        compiler_params=pltpu.CompilerParams(dimension_semantics=("arbitrary",)))
    return fn(*inputs)


if __name__ == "__main__":
    key = jax.random.PRNGKey(0)
    k_bf, k_pos, k_te, k_p = jax.random.split(key, 4)

    B, S, F = 2, 8, 128          # batch=2, seq=8, use_features=turn_dim=128 (module-fixed)
    batch_feature = jax.random.normal(k_bf, (B, S, F), jnp.float32)
    pos_embedding = jax.random.normal(k_pos, (B, S, F), jnp.float32)
    type_embed = jax.random.normal(k_te, (B, F), jnp.float32)   # already-embedded types

    params = make_params(k_p, F=F)
    fwd = jax.jit(block_forward)
    logits, weighted_softmax_dim0 = jax.block_until_ready(
        fwd(batch_feature, pos_embedding, type_embed, params))

    assert logits.shape == (B, 2)
    assert weighted_softmax_dim0.shape == (B, 3)
    assert bool(jnp.all(jnp.isfinite(logits)))
    assert bool(jnp.all(jnp.isfinite(weighted_softmax_dim0)))
    print("KERNEL_OK")
</pallas_src>

<mosaic_0001>
module attributes {stable_mosaic.version = 11 : i64} {
  func.func @block_kernel(%arg0: i32, %arg1: memref<2x8x128xf32, #tpu.memory_space<vmem>>, %arg2: memref<2x8x128xf32, #tpu.memory_space<vmem>>, %arg3: memref<2x128xf32, #tpu.memory_space<vmem>>, %arg4: memref<1x128xf32, #tpu.memory_space<vmem>>, %arg5: memref<1x128xf32, #tpu.memory_space<vmem>>, %arg6: memref<128x1536xf32, #tpu.memory_space<vmem>>, %arg7: memref<1x1536xf32, #tpu.memory_space<vmem>>, %arg8: memref<128x512xf32, #tpu.memory_space<vmem>>, %arg9: memref<128x512xf32, #tpu.memory_space<vmem>>, %arg10: memref<1x128xf32, #tpu.memory_space<vmem>>, %arg11: memref<640x128xf32, #tpu.memory_space<vmem>>, %arg12: memref<1x128xf32, #tpu.memory_space<vmem>>, %arg13: memref<256x128xf32, #tpu.memory_space<vmem>>, %arg14: memref<1x128xf32, #tpu.memory_space<vmem>>, %arg15: memref<128x128xf32, #tpu.memory_space<vmem>>, %arg16: memref<1x128xf32, #tpu.memory_space<vmem>>, %arg17: memref<1x128xf32, #tpu.memory_space<vmem>>, %arg18: memref<1x128xf32, #tpu.memory_space<vmem>>, %arg19: memref<1x128xf32, #tpu.memory_space<vmem>>, %arg20: memref<128x2xf32, #tpu.memory_space<vmem>>, %arg21: memref<1x2xf32, #tpu.memory_space<vmem>>, %arg22: memref<2x2xf32, #tpu.memory_space<vmem>>, %arg23: memref<2x3xf32, #tpu.memory_space<vmem>>) attributes {dimension_semantics = [#tpu.dimension_semantics<arbitrary>], iteration_bounds = array<i64: 1>, scalar_prefetch = 0 : i64, scratch_operands = 0 : i64, tpu.core_type = #tpu.core_type<tc>, window_params = [{pipeline_mode = #tpu.pipeline_mode<synchronous>, transform_indices = @transform_0, window_bounds = array<i64: 2, 8, 128>}, {pipeline_mode = #tpu.pipeline_mode<synchronous>, transform_indices = @transform_1, window_bounds = array<i64: 2, 8, 128>}, {pipeline_mode = #tpu.pipeline_mode<synchronous>, transform_indices = @transform_2, window_bounds = array<i64: 2, 128>}, {pipeline_mode = #tpu.pipeline_mode<synchronous>, transform_indices = @transform_3, window_bounds = array<i64: 1, 128>}, {pipeline_mode = #tpu.pipeline_mode<synchronous>, transform_indices = @transform_4, window_bounds = array<i64: 1, 128>}, {pipeline_mode = #tpu.pipeline_mode<synchronous>, transform_indices = @transform_5, window_bounds = array<i64: 128, 1536>}, {pipeline_mode = #tpu.pipeline_mode<synchronous>, transform_indices = @transform_6, window_bounds = array<i64: 1, 1536>}, {pipeline_mode = #tpu.pipeline_mode<synchronous>, transform_indices = @transform_7, window_bounds = array<i64: 128, 512>}, {pipeline_mode = #tpu.pipeline_mode<synchronous>, transform_indices = @transform_8, window_bounds = array<i64: 128, 512>}, {pipeline_mode = #tpu.pipeline_mode<synchronous>, transform_indices = @transform_9, window_bounds = array<i64: 1, 128>}, {pipeline_mode = #tpu.pipeline_mode<synchronous>, transform_indices = @transform_10, window_bounds = array<i64: 640, 128>}, {pipeline_mode = #tpu.pipeline_mode<synchronous>, transform_indices = @transform_11, window_bounds = array<i64: 1, 128>}, {pipeline_mode = #tpu.pipeline_mode<synchronous>, transform_indices = @transform_12, window_bounds = array<i64: 256, 128>}, {pipeline_mode = #tpu.pipeline_mode<synchronous>, transform_indices = @transform_13, window_bounds = array<i64: 1, 128>}, {pipeline_mode = #tpu.pipeline_mode<synchronous>, transform_indices = @transform_14, window_bounds = array<i64: 128, 128>}, {pipeline_mode = #tpu.pipeline_mode<synchronous>, transform_indices = @transform_15, window_bounds = array<i64: 1, 128>}, {pipeline_mode = #tpu.pipeline_mode<synchronous>, transform_indices = @transform_16, window_bounds = array<i64: 1, 128>}, {pipeline_mode = #tpu.pipeline_mode<synchronous>, transform_indices = @transform_17, window_bounds = array<i64: 1, 128>}, {pipeline_mode = #tpu.pipeline_mode<synchronous>, transform_indices = @transform_18, window_bounds = array<i64: 1, 128>}, {pipeline_mode = #tpu.pipeline_mode<synchronous>, transform_indices = @transform_19, window_bounds = array<i64: 128, 2>}, {pipeline_mode = #tpu.pipeline_mode<synchronous>, transform_indices = @transform_20, window_bounds = array<i64: 1, 2>}, {pipeline_mode = #tpu.pipeline_mode<synchronous>, transform_indices = @transform_21, window_bounds = array<i64: 2, 2>}, {pipeline_mode = #tpu.pipeline_mode<synchronous>, transform_indices = @transform_22, window_bounds = array<i64: 2, 3>}]} {
    %c0 = arith.constant 0 : index
    %c0_0 = arith.constant 0 : index
    %c0_1 = arith.constant 0 : index
    %0 = vector.load %arg1[%c0, %c0_0, %c0_1] : memref<2x8x128xf32, #tpu.memory_space<vmem>>, vector<2x8x128xf32>
    %c0_2 = arith.constant 0 : index
    %c0_3 = arith.constant 0 : index
    %c0_4 = arith.constant 0 : index
    %1 = vector.load %arg2[%c0_2, %c0_3, %c0_4] : memref<2x8x128xf32, #tpu.memory_space<vmem>>, vector<2x8x128xf32>
    %2 = arith.addf %0, %1 : vector<2x8x128xf32>
    %c0_5 = arith.constant 0 : index
    %c0_6 = arith.constant 0 : index
    %3 = vector.load %arg3[%c0_5, %c0_6] : memref<2x128xf32, #tpu.memory_space<vmem>>, vector<2x128xf32>
    %4 = vector.shape_cast %3 : vector<2x128xf32> to vector<2x1x128xf32>
    %5 = vector.broadcast %4 : vector<2x1x128xf32> to vector<2x8x128xf32>
    %6 = arith.addf %2, %5 : vector<2x8x128xf32>
    %c0_7 = arith.constant 0 : index
    %c0_8 = arith.constant 0 : index
    %7 = vector.load %arg4[%c0_7, %c0_8] : memref<1x128xf32, #tpu.memory_space<vmem>>, vector<1x128xf32>
    %8 = vector.shape_cast %7 : vector<1x128xf32> to vector<1x1x128xf32>
    %c0_9 = arith.constant 0 : index
    %c0_10 = arith.constant 0 : index
    %9 = vector.load %arg5[%c0_9, %c0_10] : memref<1x128xf32, #tpu.memory_space<vmem>>, vector<1x128xf32>
    %10 = vector.shape_cast %9 : vector<1x128xf32> to vector<1x1x128xf32>
    %cst = arith.constant dense<0.000000e+00> : vector<2x8xf32>
    %11 = vector.multi_reduction <add>, %6, %cst [2] : vector<2x8x128xf32> to vector<2x8xf32>
    %12 = vector.shape_cast %11 : vector<2x8xf32> to vector<2x8x1xf32>
    %cst_11 = arith.constant 1.280000e+02 : f32
    %13 = vector.broadcast %cst_11 : f32 to vector<2x8x1xf32>
    %14 = arith.divf %12, %13 : vector<2x8x1xf32>
    %15 = vector.broadcast %14 : vector<2x8x1xf32> to vector<2x8x128xf32>
    %16 = arith.subf %6, %15 : vector<2x8x128xf32>
    %17 = arith.mulf %16, %16 : vector<2x8x128xf32>
    %cst_12 = arith.constant dense<0.000000e+00> : vector<2x8xf32>
    %18 = vector.multi_reduction <add>, %17, %cst_12 [2] : vector<2x8x128xf32> to vector<2x8xf32>
    %19 = vector.shape_cast %18 : vector<2x8xf32> to vector<2x8x1xf32>
    %cst_13 = arith.constant 1.280000e+02 : f32
    %20 = vector.broadcast %cst_13 : f32 to vector<2x8x1xf32>
    %21 = arith.divf %19, %20 : vector<2x8x1xf32>
    %cst_14 = arith.constant 9.99999974E-6 : f32
    %22 = vector.broadcast %cst_14 : f32 to vector<2x8x1xf32>
    %23 = arith.addf %21, %22 : vector<2x8x1xf32>
    %24 = math.rsqrt %23 : vector<2x8x1xf32>
    %25 = vector.broadcast %24 : vector<2x8x1xf32> to vector<2x8x128xf32>
    %26 = arith.mulf %16, %25 : vector<2x8x128xf32>
    %27 = vector.broadcast %8 : vector<1x1x128xf32> to vector<2x8x128xf32>
    %28 = arith.mulf %26, %27 : vector<2x8x128xf32>
    %29 = vector.broadcast %10 : vector<1x1x128xf32> to vector<2x8x128xf32>
    %30 = arith.addf %28, %29 : vector<2x8x128xf32>
    %31 = vector.shape_cast %30 : vector<2x8x128xf32> to vector<16x128xf32>
    %c0_15 = arith.constant 0 : index
    %c0_16 = arith.constant 0 : index
    %32 = vector.load %arg6[%c0_15, %c0_16] : memref<128x1536xf32, #tpu.memory_space<vmem>>, vector<128x1536xf32>
    %cst_17 = arith.constant dense<0.000000e+00> : vector<16x1536xf32>
    %33 = tpu.matmul %31, %32, %cst_17 {dimension_numbers = #tpu.dot_dimension_numbers<[1], [0], [0], [1], [0, 0, 1, 1], [], []>} : vector<16x128xf32>, vector<128x1536xf32>, vector<16x1536xf32> -> vector<16x1536xf32>
    %c0_18 = arith.constant 0 : index
    %c0_19 = arith.constant 0 : index
    %34 = vector.load %arg7[%c0_18, %c0_19] : memref<1x1536xf32, #tpu.memory_space<vmem>>, vector<1x1536xf32>
    %35 = vector.broadcast %34 : vector<1x1536xf32> to vector<16x1536xf32>
    %36 = arith.addf %33, %35 : vector<16x1536xf32>
    %37 = vector.extract_strided_slice %36 {offsets = [0, 0], sizes = [16, 128], strides = [1, 1]} : vector<16x1536xf32> to vector<16x128xf32>
    %38 = vector.shape_cast %37 : vector<16x128xf32> to vector<2x8x128xf32>
    %cst_20 = arith.constant dense<0.000000e+00> : vector<2x128xf32>
    %39 = vector.multi_reduction <add>, %38, %cst_20 [1] : vector<2x8x128xf32> to vector<2x128xf32>
    %cst_21 = arith.constant 8.000000e+00 : f32
    %40 = vector.broadcast %cst_21 : f32 to vector<2x128xf32>
    %41 = arith.divf %39, %40 : vector<2x128xf32>
    %42 = vector.extract_strided_slice %36 {offsets = [0, 128], sizes = [16, 1024], strides = [1, 1]} : vector<16x1536xf32> to vector<16x1024xf32>
    %43 = vector.shape_cast %42 : vector<16x1024xf32> to vector<2x8x1024xf32>
    %44 = vector.extract_strided_slice %43 {offsets = [0, 0, 0], sizes = [2, 8, 512], strides = [1, 1, 1]} : vector<2x8x1024xf32> to vector<2x8x512xf32>
    %45 = vector.extract_strided_slice %43 {offsets = [0, 0, 512], sizes = [2, 8, 512], strides = [1, 1, 1]} : vector<2x8x1024xf32> to vector<2x8x512xf32>
    %46 = vector.extract_strided_slice %36 {offsets = [0, 1152], sizes = [16, 384], strides = [1, 1]} : vector<16x1536xf32> to vector<16x384xf32>
    %47 = vector.shape_cast %46 : vector<16x384xf32> to vector<2x8x384xf32>
    %c0_22 = arith.constant 0 : index
    %c0_23 = arith.constant 0 : index
    %48 = vector.load %arg8[%c0_22, %c0_23] : memref<128x512xf32, #tpu.memory_space<vmem>>, vector<128x512xf32>
    %c0_24 = arith.constant 0 : index
    %c0_25 = arith.constant 0 : index
    %49 = vector.load %arg9[%c0_24, %c0_25] : memref<128x512xf32, #tpu.memory_space<vmem>>, vector<128x512xf32>
    %cst_26 = arith.constant 0.000000e+00 : f32
    %50 = vector.broadcast %cst_26 : f32 to vector<4x128xf32>
    %cst_27 = arith.constant 0.000000e+00 : f32
    %51 = vector.broadcast %cst_27 : f32 to vector<4x128xf32>
    %52 = vector.extract_strided_slice %50 {offsets = [0, 0], sizes = [2, 128], strides = [1, 1]} : vector<4x128xf32> to vector<2x128xf32>
    %cst_28 = arith.constant dense<0.000000e+00> : vector<2x512xf32>
    %53 = tpu.matmul %52, %48, %cst_28 {dimension_numbers = #tpu.dot_dimension_numbers<[1], [0], [0], [1], [0, 0, 1, 1], [], []>} : vector<2x128xf32>, vector<128x512xf32>, vector<2x512xf32> -> vector<2x512xf32>
    %54 = vector.extract_strided_slice %50 {offsets = [2, 0], sizes = [2, 128], strides = [1, 1]} : vector<4x128xf32> to vector<2x128xf32>
    %cst_29 = arith.constant dense<0.000000e+00> : vector<2x512xf32>
    %55 = tpu.matmul %54, %49, %cst_29 {dimension_numbers = #tpu.dot_dimension_numbers<[1], [0], [0], [1], [0, 0, 1, 1], [], []>} : vector<2x128xf32>, vector<128x512xf32>, vector<2x512xf32> -> vector<2x512xf32>
    %56 = vector.extract_strided_slice %44 {offsets = [0, 0, 0], sizes = [2, 1, 512], strides = [1, 1, 1]} : vector<2x8x512xf32> to vector<2x1x512xf32>
    %57 = vector.shape_cast %56 : vector<2x1x512xf32> to vector<2x512xf32>
    %58 = arith.addf %57, %53 : vector<2x512xf32>
    %59 = vector.extract_strided_slice %45 {offsets = [0, 7, 0], sizes = [2, 1, 512], strides = [1, 1, 1]} : vector<2x8x512xf32> to vector<2x1x512xf32>
    %60 = vector.shape_cast %59 : vector<2x1x512xf32> to vector<2x512xf32>
    %61 = arith.addf %60, %55 : vector<2x512xf32>
    %62 = tpu.concatenate %58, %61 in 0 : vector<2x512xf32>, vector<2x512xf32> -> vector<4x512xf32>
    %63 = vector.extract_strided_slice %62 {offsets = [0, 0], sizes = [4, 128], strides = [1, 1]} : vector<4x512xf32> to vector<4x128xf32>
    %64 = arith.negf %63 : vector<4x128xf32>
    %65 = math.exp %64 : vector<4x128xf32>
    %cst_30 = arith.constant 1.000000e+00 : f32
    %66 = vector.broadcast %cst_30 : f32 to vector<4x128xf32>
    %67 = arith.addf %66, %65 : vector<4x128xf32>
    %68 = arith.divf %66, %67 : vector<4x128xf32>
    %69 = vector.extract_strided_slice %62 {offsets = [0, 128], sizes = [4, 128], strides = [1, 1]} : vector<4x512xf32> to vector<4x128xf32>
    %70 = arith.negf %69 : vector<4x128xf32>
    %71 = math.exp %70 : vector<4x128xf32>
    %cst_31 = arith.constant 1.000000e+00 : f32
    %72 = vector.broadcast %cst_31 : f32 to vector<4x128xf32>
    %73 = arith.addf %72, %71 : vector<4x128xf32>
    %74 = arith.divf %72, %73 : vector<4x128xf32>
    %75 = vector.extract_strided_slice %62 {offsets = [0, 256], sizes = [4, 128], strides = [1, 1]} : vector<4x512xf32> to vector<4x128xf32>
    %76 = math.tanh %75 : vector<4x128xf32>
    %77 = vector.extract_strided_slice %62 {offsets = [0, 384], sizes = [4, 128], strides = [1, 1]} : vector<4x512xf32> to vector<4x128xf32>
    %78 = arith.negf %77 : vector<4x128xf32>
    %79 = math.exp %78 : vector<4x128xf32>
    %cst_32 = arith.constant 1.000000e+00 : f32
    %80 = vector.broadcast %cst_32 : f32 to vector<4x128xf32>
    %81 = arith.addf %80, %79 : vector<4x128xf32>
    %82 = arith.divf %80, %81 : vector<4x128xf32>
    %83 = arith.mulf %74, %51 : vector<4x128xf32>
    %84 = arith.mulf %68, %76 : vector<4x128xf32>
    %85 = arith.addf %83, %84 : vector<4x128xf32>
    %86 = math.tanh %85 : vector<4x128xf32>
    %87 = arith.mulf %82, %86 : vector<4x128xf32>
    %88 = vector.extract_strided_slice %87 {offsets = [0, 0], sizes = [2, 128], strides = [1, 1]} : vector<4x128xf32> to vector<2x128xf32>
    %cst_33 = arith.constant dense<0.000000e+00> : vector<2x512xf32>
    %89 = tpu.matmul %88, %48, %cst_33 {dimension_numbers = #tpu.dot_dimension_numbers<[1], [0], [0], [1], [0, 0, 1, 1], [], []>} : vector<2x128xf32>, vector<128x512xf32>, vector<2x512xf32> -> vector<2x512xf32>
    %90 = vector.extract_strided_slice %87 {offsets = [2, 0], sizes = [2, 128], strides = [1, 1]} : vector<4x128xf32> to vector<2x128xf32>
    %cst_34 = arith.constant dense<0.000000e+00> : vector<2x512xf32>
    %91 = tpu.matmul %90, %49, %cst_34 {dimension_numbers = #tpu.dot_dimension_numbers<[1], [0], [0], [1], [0, 0, 1, 1], [], []>} : vector<2x128xf32>, vector<128x512xf32>, vector<2x512xf32> -> vector<2x512xf32>
    %92 = vector.extract_strided_slice %44 {offsets = [0, 1, 0], sizes = [2, 1, 512], strides = [1, 1, 1]} : vector<2x8x512xf32> to vector<2x1x512xf32>
    %93 = vector.shape_cast %92 : vector<2x1x512xf32> to vector<2x512xf32>
    %94 = arith.addf %93, %89 : vector<2x512xf32>
    %95 = vector.extract_strided_slice %45 {offsets = [0, 6, 0], sizes = [2, 1, 512], strides = [1, 1, 1]} : vector<2x8x512xf32> to vector<2x1x512xf32>
    %96 = vector.shape_cast %95 : vector<2x1x512xf32> to vector<2x512xf32>
    %97 = arith.addf %96, %91 : vector<2x512xf32>
    %98 = tpu.concatenate %94, %97 in 0 : vector<2x512xf32>, vector<2x512xf32> -> vector<4x512xf32>
    %99 = vector.extract_strided_slice %98 {offsets = [0, 0], sizes = [4, 128], strides = [1, 1]} : vector<4x512xf32> to vector<4x128xf32>
    %100 = arith.negf %99 : vector<4x128xf32>
    %101 = math.exp %100 : vector<4x128xf32>
    %cst_35 = arith.constant 1.000000e+00 : f32
    %102 = vector.broadcast %cst_35 : f32 to vector<4x128xf32>
    %103 = arith.addf %102, %101 : vector<4x128xf32>
    %104 = arith.divf %102, %103 : vector<4x128xf32>
    %105 = vector.extract_strided_slice %98 {offsets = [0, 128], sizes = [4, 128], strides = [1, 1]} : vector<4x512xf32> to vector<4x128xf32>
    %106 = arith.negf %105 : vector<4x128xf32>
    %107 = math.exp %106 : vector<4x128xf32>
    %cst_36 = arith.constant 1.000000e+00 : f32
    %108 = vector.broadcast %cst_36 : f32 to vector<4x128xf32>
    %109 = arith.addf %108, %107 : vector<4x128xf32>
    %110 = arith.divf %108, %109 : vector<4x128xf32>
    %111 = vector.extract_strided_slice %98 {offsets = [0, 256], sizes = [4, 128], strides = [1, 1]} : vector<4x512xf32> to vector<4x128xf32>
    %112 = math.tanh %111 : vector<4x128xf32>
    %113 = vector.extract_strided_slice %98 {offsets = [0, 384], sizes = [4, 128], strides = [1, 1]} : vector<4x512xf32> to vector<4x128xf32>
    %114 = arith.negf %113 : vector<4x128xf32>
    %115 = math.exp %114 : vector<4x128xf32>
    %cst_37 = arith.constant 1.000000e+00 : f32
    %116 = vector.broadcast %cst_37 : f32 to vector<4x128xf32>
    %117 = arith.addf %116, %115 : vector<4x128xf32>
    %118 = arith.divf %116, %117 : vector<4x128xf32>
    %119 = arith.mulf %110, %85 : vector<4x128xf32>
    %120 = arith.mulf %104, %112 : vector<4x128xf32>
    %121 = arith.addf %119, %120 : vector<4x128xf32>
    %122 = math.tanh %121 : vector<4x128xf32>
    %123 = arith.mulf %118, %122 : vector<4x128xf32>
    %124 = vector.extract_strided_slice %123 {offsets = [0, 0], sizes = [2, 128], strides = [1, 1]} : vector<4x128xf32> to vector<2x128xf32>
    %cst_38 = arith.constant dense<0.000000e+00> : vector<2x512xf32>
    %125 = tpu.matmul %124, %48, %cst_38 {dimension_numbers = #tpu.dot_dimension_numbers<[1], [0], [0], [1], [0, 0, 1, 1], [], []>} : vector<2x128xf32>, vector<128x512xf32>, vector<2x512xf32> -> vector<2x512xf32>
    %126 = vector.extract_strided_slice %123 {offsets = [2, 0], sizes = [2, 128], strides = [1, 1]} : vector<4x128xf32> to vector<2x128xf32>
    %cst_39 = arith.constant dense<0.000000e+00> : vector<2x512xf32>
    %127 = tpu.matmul %126, %49, %cst_39 {dimension_numbers = #tpu.dot_dimension_numbers<[1], [0], [0], [1], [0, 0, 1, 1], [], []>} : vector<2x128xf32>, vector<128x512xf32>, vector<2x512xf32> -> vector<2x512xf32>
    %128 = vector.extract_strided_slice %44 {offsets = [0, 2, 0], sizes = [2, 1, 512], strides = [1, 1, 1]} : vector<2x8x512xf32> to vector<2x1x512xf32>
    %129 = vector.shape_cast %128 : vector<2x1x512xf32> to vector<2x512xf32>
    %130 = arith.addf %129, %125 : vector<2x512xf32>
    %131 = vector.extract_strided_slice %45 {offsets = [0, 5, 0], sizes = [2, 1, 512], strides = [1, 1, 1]} : vector<2x8x512xf32> to vector<2x1x512xf32>
    %132 = vector.shape_cast %131 : vector<2x1x512xf32> to vector<2x512xf32>
    %133 = arith.addf %132, %127 : vector<2x512xf32>
    %134 = tpu.concatenate %130, %133 in 0 : vector<2x512xf32>, vector<2x512xf32> -> vector<4x512xf32>
    %135 = vector.extract_strided_slice %134 {offsets = [0, 0], sizes = [4, 128], strides = [1, 1]} : vector<4x512xf32> to vector<4x128xf32>
    %136 = arith.negf %135 : vector<4x128xf32>
    %137 = math.exp %136 : vector<4x128xf32>
    %cst_40 = arith.constant 1.000000e+00 : f32
    %138 = vector.broadcast %cst_40 : f32 to vector<4x128xf32>
    %139 = arith.addf %138, %137 : vector<4x128xf32>
    %140 = arith.divf %138, %139 : vector<4x128xf32>
    %141 = vector.extract_strided_slice %134 {offsets = [0, 128], sizes = [4, 128], strides = [1, 1]} : vector<4x512xf32> to vector<4x128xf32>
    %142 = arith.negf %141 : vector<4x128xf32>
    %143 = math.exp %142 : vector<4x128xf32>
    %cst_41 = arith.constant 1.000000e+00 : f32
    %144 = vector.broadcast %cst_41 : f32 to vector<4x128xf32>
    %145 = arith.addf %144, %143 : vector<4x128xf32>
    %146 = arith.divf %144, %145 : vector<4x128xf32>
    %147 = vector.extract_strided_slice %134 {offsets = [0, 256], sizes = [4, 128], strides = [1, 1]} : vector<4x512xf32> to vector<4x128xf32>
    %148 = math.tanh %147 : vector<4x128xf32>
    %149 = vector.extract_strided_slice %134 {offsets = [0, 384], sizes = [4, 128], strides = [1, 1]} : vector<4x512xf32> to vector<4x128xf32>
    %150 = arith.negf %149 : vector<4x128xf32>
    %151 = math.exp %150 : vector<4x128xf32>
    %cst_42 = arith.constant 1.000000e+00 : f32
    %152 = vector.broadcast %cst_42 : f32 to vector<4x128xf32>
    %153 = arith.addf %152, %151 : vector<4x128xf32>
    %154 = arith.divf %152, %153 : vector<4x128xf32>
    %155 = arith.mulf %146, %121 : vector<4x128xf32>
    %156 = arith.mulf %140, %148 : vector<4x128xf32>
    %157 = arith.addf %155, %156 : vector<4x128xf32>
    %158 = math.tanh %157 : vector<4x128xf32>
    %159 = arith.mulf %154, %158 : vector<4x128xf32>
    %160 = vector.extract_strided_slice %159 {offsets = [0, 0], sizes = [2, 128], strides = [1, 1]} : vector<4x128xf32> to vector<2x128xf32>
    %cst_43 = arith.constant dense<0.000000e+00> : vector<2x512xf32>
    %161 = tpu.matmul %160, %48, %cst_43 {dimension_numbers = #tpu.dot_dimension_numbers<[1], [0], [0], [1], [0, 0, 1, 1], [], []>} : vector<2x128xf32>, vector<128x512xf32>, vector<2x512xf32> -> vector<2x512xf32>
    %162 = vector.extract_strided_slice %159 {offsets = [2, 0], sizes = [2, 128], strides = [1, 1]} : vector<4x128xf32> to vector<2x128xf32>
    %cst_44 = arith.constant dense<0.000000e+00> : vector<2x512xf32>
    %163 = tpu.matmul %162, %49, %cst_44 {dimension_numbers = #tpu.dot_dimension_numbers<[1], [0], [0], [1], [0, 0, 1, 1], [], []>} : vector<2x128xf32>, vector<128x512xf32>, vector<2x512xf32> -> vector<2x512xf32>
    %164 = vector.extract_strided_slice %44 {offsets = [0, 3, 0], sizes = [2, 1, 512], strides = [1, 1, 1]} : vector<2x8x512xf32> to vector<2x1x512xf32>
    %165 = vector.shape_cast %164 : vector<2x1x512xf32> to vector<2x512xf32>
    %166 = arith.addf %165, %161 : vector<2x512xf32>
    %167 = vector.extract_strided_slice %45 {offsets = [0, 4, 0], sizes = [2, 1, 512], strides = [1, 1, 1]} : vector<2x8x512xf32> to vector<2x1x512xf32>
    %168 = vector.shape_cast %167 : vector<2x1x512xf32> to vector<2x512xf32>
    %169 = arith.addf %168, %163 : vector<2x512xf32>
    %170 = tpu.concatenate %166, %169 in 0 : vector<2x512xf32>, vector<2x512xf32> -> vector<4x512xf32>
    %171 = vector.extract_strided_slice %170 {offsets = [0, 0], sizes = [4, 128], strides = [1, 1]} : vector<4x512xf32> to vector<4x128xf32>
    %172 = arith.negf %171 : vector<4x128xf32>
    %173 = math.exp %172 : vector<4x128xf32>
    %cst_45 = arith.constant 1.000000e+00 : f32
    %174 = vector.broadcast %cst_45 : f32 to vector<4x128xf32>
    %175 = arith.addf %174, %173 : vector<4x128xf32>
    %176 = arith.divf %174, %175 : vector<4x128xf32>
    %177 = vector.extract_strided_slice %170 {offsets = [0, 128], sizes = [4, 128], strides = [1, 1]} : vector<4x512xf32> to vector<4x128xf32>
    %178 = arith.negf %177 : vector<4x128xf32>
    %179 = math.exp %178 : vector<4x128xf32>
    %cst_46 = arith.constant 1.000000e+00 : f32
    %180 = vector.broadcast %cst_46 : f32 to vector<4x128xf32>
    %181 = arith.addf %180, %179 : vector<4x128xf32>
    %182 = arith.divf %180, %181 : vector<4x128xf32>
    %183 = vector.extract_strided_slice %170 {offsets = [0, 256], sizes = [4, 128], strides = [1, 1]} : vector<4x512xf32> to vector<4x128xf32>
    %184 = math.tanh %183 : vector<4x128xf32>
    %185 = vector.extract_strided_slice %170 {offsets = [0, 384], sizes = [4, 128], strides = [1, 1]} : vector<4x512xf32> to vector<4x128xf32>
    %186 = arith.negf %185 : vector<4x128xf32>
    %187 = math.exp %186 : vector<4x128xf32>
    %cst_47 = arith.constant 1.000000e+00 : f32
    %188 = vector.broadcast %cst_47 : f32 to vector<4x128xf32>
    %189 = arith.addf %188, %187 : vector<4x128xf32>
    %190 = arith.divf %188, %189 : vector<4x128xf32>
    %191 = arith.mulf %182, %157 : vector<4x128xf32>
    %192 = arith.mulf %176, %184 : vector<4x128xf32>
    %193 = arith.addf %191, %192 : vector<4x128xf32>
    %194 = math.tanh %193 : vector<4x128xf32>
    %195 = arith.mulf %190, %194 : vector<4x128xf32>
    %196 = vector.extract_strided_slice %195 {offsets = [0, 0], sizes = [2, 128], strides = [1, 1]} : vector<4x128xf32> to vector<2x128xf32>
    %cst_48 = arith.constant dense<0.000000e+00> : vector<2x512xf32>
    %197 = tpu.matmul %196, %48, %cst_48 {dimension_numbers = #tpu.dot_dimension_numbers<[1], [0], [0], [1], [0, 0, 1, 1], [], []>} : vector<2x128xf32>, vector<128x512xf32>, vector<2x512xf32> -> vector<2x512xf32>
    %198 = vector.extract_strided_slice %195 {offsets = [2, 0], sizes = [2, 128], strides = [1, 1]} : vector<4x128xf32> to vector<2x128xf32>
    %cst_49 = arith.constant dense<0.000000e+00> : vector<2x512xf32>
    %199 = tpu.matmul %198, %49, %cst_49 {dimension_numbers = #tpu.dot_dimension_numbers<[1], [0], [0], [1], [0, 0, 1, 1], [], []>} : vector<2x128xf32>, vector<128x512xf32>, vector<2x512xf32> -> vector<2x512xf32>
    %200 = vector.extract_strided_slice %44 {offsets = [0, 4, 0], sizes = [2, 1, 512], strides = [1, 1, 1]} : vector<2x8x512xf32> to vector<2x1x512xf32>
    %201 = vector.shape_cast %200 : vector<2x1x512xf32> to vector<2x512xf32>
    %202 = arith.addf %201, %197 : vector<2x512xf32>
    %203 = vector.extract_strided_slice %45 {offsets = [0, 3, 0], sizes = [2, 1, 512], strides = [1, 1, 1]} : vector<2x8x512xf32> to vector<2x1x512xf32>
    %204 = vector.shape_cast %203 : vector<2x1x512xf32> to vector<2x512xf32>
    %205 = arith.addf %204, %199 : vector<2x512xf32>
    %206 = tpu.concatenate %202, %205 in 0 : vector<2x512xf32>, vector<2x512xf32> -> vector<4x512xf32>
    %207 = vector.extract_strided_slice %206 {offsets = [0, 0], sizes = [4, 128], strides = [1, 1]} : vector<4x512xf32> to vector<4x128xf32>
    %208 = arith.negf %207 : vector<4x128xf32>
    %209 = math.exp %208 : vector<4x128xf32>
    %cst_50 = arith.constant 1.000000e+00 : f32
    %210 = vector.broadcast %cst_50 : f32 to vector<4x128xf32>
    %211 = arith.addf %210, %209 : vector<4x128xf32>
    %212 = arith.divf %210, %211 : vector<4x128xf32>
    %213 = vector.extract_strided_slice %206 {offsets = [0, 128], sizes = [4, 128], strides = [1, 1]} : vector<4x512xf32> to vector<4x128xf32>
    %214 = arith.negf %213 : vector<4x128xf32>
    %215 = math.exp %214 : vector<4x128xf32>
    %cst_51 = arith.constant 1.000000e+00 : f32
    %216 = vector.broadcast %cst_51 : f32 to vector<4x128xf32>
    %217 = arith.addf %216, %215 : vector<4x128xf32>
    %218 = arith.divf %216, %217 : vector<4x128xf32>
    %219 = vector.extract_strided_slice %206 {offsets = [0, 256], sizes = [4, 128], strides = [1, 1]} : vector<4x512xf32> to vector<4x128xf32>
    %220 = math.tanh %219 : vector<4x128xf32>
    %221 = vector.extract_strided_slice %206 {offsets = [0, 384], sizes = [4, 128], strides = [1, 1]} : vector<4x512xf32> to vector<4x128xf32>
    %222 = arith.negf %221 : vector<4x128xf32>
    %223 = math.exp %222 : vector<4x128xf32>
    %cst_52 = arith.constant 1.000000e+00 : f32
    %224 = vector.broadcast %cst_52 : f32 to vector<4x128xf32>
    %225 = arith.addf %224, %223 : vector<4x128xf32>
    %226 = arith.divf %224, %225 : vector<4x128xf32>
    %227 = arith.mulf %218, %193 : vector<4x128xf32>
    %228 = arith.mulf %212, %220 : vector<4x128xf32>
    %229 = arith.addf %227, %228 : vector<4x128xf32>
    %230 = math.tanh %229 : vector<4x128xf32>
    %231 = arith.mulf %226, %230 : vector<4x128xf32>
    %232 = vector.extract_strided_slice %231 {offsets = [0, 0], sizes = [2, 128], strides = [1, 1]} : vector<4x128xf32> to vector<2x128xf32>
    %cst_53 = arith.constant dense<0.000000e+00> : vector<2x512xf32>
    %233 = tpu.matmul %232, %48, %cst_53 {dimension_numbers = #tpu.dot_dimension_numbers<[1], [0], [0], [1], [0, 0, 1, 1], [], []>} : vector<2x128xf32>, vector<128x512xf32>, vector<2x512xf32> -> vector<2x512xf32>
    %234 = vector.extract_strided_slice %231 {offsets = [2, 0], sizes = [2, 128], strides = [1, 1]} : vector<4x128xf32> to vector<2x128xf32>
    %cst_54 = arith.constant dense<0.000000e+00> : vector<2x512xf32>
    %235 = tpu.matmul %234, %49, %cst_54 {dimension_numbers = #tpu.dot_dimension_numbers<[1], [0], [0], [1], [0, 0, 1, 1], [], []>} : vector<2x128xf32>, vector<128x512xf32>, vector<2x512xf32> -> vector<2x512xf32>
    %236 = vector.extract_strided_slice %44 {offsets = [0, 5, 0], sizes = [2, 1, 512], strides = [1, 1, 1]} : vector<2x8x512xf32> to vector<2x1x512xf32>
    %237 = vector.shape_cast %236 : vector<2x1x512xf32> to vector<2x512xf32>
    %238 = arith.addf %237, %233 : vector<2x512xf32>
    %239 = vector.extract_strided_slice %45 {offsets = [0, 2, 0], sizes = [2, 1, 512], strides = [1, 1, 1]} : vector<2x8x512xf32> to vector<2x1x512xf32>
    %240 = vector.shape_cast %239 : vector<2x1x512xf32> to vector<2x512xf32>
    %241 = arith.addf %240, %235 : vector<2x512xf32>
    %242 = tpu.concatenate %238, %241 in 0 : vector<2x512xf32>, vector<2x512xf32> -> vector<4x512xf32>
    %243 = vector.extract_strided_slice %242 {offsets = [0, 0], sizes = [4, 128], strides = [1, 1]} : vector<4x512xf32> to vector<4x128xf32>
    %244 = arith.negf %243 : vector<4x128xf32>
    %245 = math.exp %244 : vector<4x128xf32>
    %cst_55 = arith.constant 1.000000e+00 : f32
    %246 = vector.broadcast %cst_55 : f32 to vector<4x128xf32>
    %247 = arith.addf %246, %245 : vector<4x128xf32>
    %248 = arith.divf %246, %247 : vector<4x128xf32>
    %249 = vector.extract_strided_slice %242 {offsets = [0, 128], sizes = [4, 128], strides = [1, 1]} : vector<4x512xf32> to vector<4x128xf32>
    %250 = arith.negf %249 : vector<4x128xf32>
    %251 = math.exp %250 : vector<4x128xf32>
    %cst_56 = arith.constant 1.000000e+00 : f32
    %252 = vector.broadcast %cst_56 : f32 to vector<4x128xf32>
    %253 = arith.addf %252, %251 : vector<4x128xf32>
    %254 = arith.divf %252, %253 : vector<4x128xf32>
    %255 = vector.extract_strided_slice %242 {offsets = [0, 256], sizes = [4, 128], strides = [1, 1]} : vector<4x512xf32> to vector<4x128xf32>
    %256 = math.tanh %255 : vector<4x128xf32>
    %257 = vector.extract_strided_slice %242 {offsets = [0, 384], sizes = [4, 128], strides = [1, 1]} : vector<4x512xf32> to vector<4x128xf32>
    %258 = arith.negf %257 : vector<4x128xf32>
    %259 = math.exp %258 : vector<4x128xf32>
    %cst_57 = arith.constant 1.000000e+00 : f32
    %260 = vector.broadcast %cst_57 : f32 to vector<4x128xf32>
    %261 = arith.addf %260, %259 : vector<4x128xf32>
    %262 = arith.divf %260, %261 : vector<4x128xf32>
    %263 = arith.mulf %254, %229 : vector<4x128xf32>
    %264 = arith.mulf %248, %256 : vector<4x128xf32>
    %265 = arith.addf %263, %264 : vector<4x128xf32>
    %266 = math.tanh %265 : vector<4x128xf32>
    %267 = arith.mulf %262, %266 : vector<4x128xf32>
    %268 = vector.extract_strided_slice %267 {offsets = [0, 0], sizes = [2, 128], strides = [1, 1]} : vector<4x128xf32> to vector<2x128xf32>
    %cst_58 = arith.constant dense<0.000000e+00> : vector<2x512xf32>
    %269 = tpu.matmul %268, %48, %cst_58 {dimension_numbers = #tpu.dot_dimension_numbers<[1], [0], [0], [1], [0, 0, 1, 1], [], []>} : vector<2x128xf32>, vector<128x512xf32>, vector<2x512xf32> -> vector<2x512xf32>
    %270 = vector.extract_strided_slice %267 {offsets = [2, 0], sizes = [2, 128], strides = [1, 1]} : vector<4x128xf32> to vector<2x128xf32>
    %cst_59 = arith.constant dense<0.000000e+00> : vector<2x512xf32>
    %271 = tpu.matmul %270, %49, %cst_59 {dimension_numbers = #tpu.dot_dimension_numbers<[1], [0], [0], [1], [0, 0, 1, 1], [], []>} : vector<2x128xf32>, vector<128x512xf32>, vector<2x512xf32> -> vector<2x512xf32>
    %272 = vector.extract_strided_slice %44 {offsets = [0, 6, 0], sizes = [2, 1, 512], strides = [1, 1, 1]} : vector<2x8x512xf32> to vector<2x1x512xf32>
    %273 = vector.shape_cast %272 : vector<2x1x512xf32> to vector<2x512xf32>
    %274 = arith.addf %273, %269 : vector<2x512xf32>
    %275 = vector.extract_strided_slice %45 {offsets = [0, 1, 0], sizes = [2, 1, 512], strides = [1, 1, 1]} : vector<2x8x512xf32> to vector<2x1x512xf32>
    %276 = vector.shape_cast %275 : vector<2x1x512xf32> to vector<2x512xf32>
    %277 = arith.addf %276, %271 : vector<2x512xf32>
    %278 = tpu.concatenate %274, %277 in 0 : vector<2x512xf32>, vector<2x512xf32> -> vector<4x512xf32>
    %279 = vector.extract_strided_slice %278 {offsets = [0, 0], sizes = [4, 128], strides = [1, 1]} : vector<4x512xf32> to vector<4x128xf32>
    %280 = arith.negf %279 : vector<4x128xf32>
    %281 = math.exp %280 : vector<4x128xf32>
    %cst_60 = arith.constant 1.000000e+00 : f32
    %282 = vector.broadcast %cst_60 : f32 to vector<4x128xf32>
    %283 = arith.addf %282, %281 : vector<4x128xf32>
    %284 = arith.divf %282, %283 : vector<4x128xf32>
    %285 = vector.extract_strided_slice %278 {offsets = [0, 128], sizes = [4, 128], strides = [1, 1]} : vector<4x512xf32> to vector<4x128xf32>
    %286 = arith.negf %285 : vector<4x128xf32>
    %287 = math.exp %286 : vector<4x128xf32>
    %cst_61 = arith.constant 1.000000e+00 : f32
    %288 = vector.broadcast %cst_61 : f32 to vector<4x128xf32>
    %289 = arith.addf %288, %287 : vector<4x128xf32>
    %290 = arith.divf %288, %289 : vector<4x128xf32>
    %291 = vector.extract_strided_slice %278 {offsets = [0, 256], sizes = [4, 128], strides = [1, 1]} : vector<4x512xf32> to vector<4x128xf32>
    %292 = math.tanh %291 : vector<4x128xf32>
    %293 = vector.extract_strided_slice %278 {offsets = [0, 384], sizes = [4, 128], strides = [1, 1]} : vector<4x512xf32> to vector<4x128xf32>
    %294 = arith.negf %293 : vector<4x128xf32>
    %295 = math.exp %294 : vector<4x128xf32>
    %cst_62 = arith.constant 1.000000e+00 : f32
    %296 = vector.broadcast %cst_62 : f32 to vector<4x128xf32>
    %297 = arith.addf %296, %295 : vector<4x128xf32>
    %298 = arith.divf %296, %297 : vector<4x128xf32>
    %299 = arith.mulf %290, %265 : vector<4x128xf32>
    %300 = arith.mulf %284, %292 : vector<4x128xf32>
    %301 = arith.addf %299, %300 : vector<4x128xf32>
    %302 = math.tanh %301 : vector<4x128xf32>
    %303 = arith.mulf %298, %302 : vector<4x128xf32>
    %304 = vector.extract_strided_slice %303 {offsets = [0, 0], sizes = [2, 128], strides = [1, 1]} : vector<4x128xf32> to vector<2x128xf32>
    %cst_63 = arith.constant dense<0.000000e+00> : vector<2x512xf32>
    %305 = tpu.matmul %304, %48, %cst_63 {dimension_numbers = #tpu.dot_dimension_numbers<[1], [0], [0], [1], [0, 0, 1, 1], [], []>} : vector<2x128xf32>, vector<128x512xf32>, vector<2x512xf32> -> vector<2x512xf32>
    %306 = vector.extract_strided_slice %303 {offsets = [2, 0], sizes = [2, 128], strides = [1, 1]} : vector<4x128xf32> to vector<2x128xf32>
    %cst_64 = arith.constant dense<0.000000e+00> : vector<2x512xf32>
    %307 = tpu.matmul %306, %49, %cst_64 {dimension_numbers = #tpu.dot_dimension_numbers<[1], [0], [0], [1], [0, 0, 1, 1], [], []>} : vector<2x128xf32>, vector<128x512xf32>, vector<2x512xf32> -> vector<2x512xf32>
    %308 = vector.extract_strided_slice %44 {offsets = [0, 7, 0], sizes = [2, 1, 512], strides = [1, 1, 1]} : vector<2x8x512xf32> to vector<2x1x512xf32>
    %309 = vector.shape_cast %308 : vector<2x1x512xf32> to vector<2x512xf32>
    %310 = arith.addf %309, %305 : vector<2x512xf32>
    %311 = vector.extract_strided_slice %45 {offsets = [0, 0, 0], sizes = [2, 1, 512], strides = [1, 1, 1]} : vector<2x8x512xf32> to vector<2x1x512xf32>
    %312 = vector.shape_cast %311 : vector<2x1x512xf32> to vector<2x512xf32>
    %313 = arith.addf %312, %307 : vector<2x512xf32>
    %314 = tpu.concatenate %310, %313 in 0 : vector<2x512xf32>, vector<2x512xf32> -> vector<4x512xf32>
    %315 = vector.extract_strided_slice %314 {offsets = [0, 0], sizes = [4, 128], strides = [1, 1]} : vector<4x512xf32> to vector<4x128xf32>
    %316 = arith.negf %315 : vector<4x128xf32>
    %317 = math.exp %316 : vector<4x128xf32>
    %cst_65 = arith.constant 1.000000e+00 : f32
    %318 = vector.broadcast %cst_65 : f32 to vector<4x128xf32>
    %319 = arith.addf %318, %317 : vector<4x128xf32>
    %320 = arith.divf %318, %319 : vector<4x128xf32>
    %321 = vector.extract_strided_slice %314 {offsets = [0, 128], sizes = [4, 128], strides = [1, 1]} : vector<4x512xf32> to vector<4x128xf32>
    %322 = arith.negf %321 : vector<4x128xf32>
    %323 = math.exp %322 : vector<4x128xf32>
    %cst_66 = arith.constant 1.000000e+00 : f32
    %324 = vector.broadcast %cst_66 : f32 to vector<4x128xf32>
    %325 = arith.addf %324, %323 : vector<4x128xf32>
    %326 = arith.divf %324, %325 : vector<4x128xf32>
    %327 = vector.extract_strided_slice %314 {offsets = [0, 256], sizes = [4, 128], strides = [1, 1]} : vector<4x512xf32> to vector<4x128xf32>
    %328 = math.tanh %327 : vector<4x128xf32>
    %329 = arith.mulf %326, %301 : vector<4x128xf32>
    %330 = arith.mulf %320, %328 : vector<4x128xf32>
    %331 = arith.addf %329, %330 : vector<4x128xf32>
    %332 = vector.extract_strided_slice %331 {offsets = [0, 0], sizes = [2, 128], strides = [1, 1]} : vector<4x128xf32> to vector<2x128xf32>
    %333 = vector.extract_strided_slice %331 {offsets = [2, 0], sizes = [2, 128], strides = [1, 1]} : vector<4x128xf32> to vector<2x128xf32>
    %334 = tpu.concatenate %332, %333 in 1 : vector<2x128xf32>, vector<2x128xf32> -> vector<2x256xf32>
    %c0_67 = arith.constant 0 : index
    %c0_68 = arith.constant 0 : index
    %335 = vector.load %arg13[%c0_67, %c0_68] : memref<256x128xf32, #tpu.memory_space<vmem>>, vector<256x128xf32>
    %cst_69 = arith.constant dense<0.000000e+00> : vector<2x128xf32>
    %336 = tpu.matmul %334, %335, %cst_69 {dimension_numbers = #tpu.dot_dimension_numbers<[1], [0], [0], [1], [0, 0, 1, 1], [], []>} : vector<2x256xf32>, vector<256x128xf32>, vector<2x128xf32> -> vector<2x128xf32>
    %c0_70 = arith.constant 0 : index
    %c0_71 = arith.constant 0 : index
    %337 = vector.load %arg14[%c0_70, %c0_71] : memref<1x128xf32, #tpu.memory_space<vmem>>, vector<1x128xf32>
    %338 = vector.broadcast %337 : vector<1x128xf32> to vector<2x128xf32>
    %339 = arith.addf %336, %338 : vector<2x128xf32>
    %340 = vector.extract_strided_slice %47 {offsets = [0, 0, 0], sizes = [2, 8, 128], strides = [1, 1, 1]} : vector<2x8x384xf32> to vector<2x8x128xf32>
    %341 = vector.extract_strided_slice %47 {offsets = [0, 0, 128], sizes = [2, 8, 128], strides = [1, 1, 1]} : vector<2x8x384xf32> to vector<2x8x128xf32>
    %342 = vector.extract_strided_slice %47 {offsets = [0, 0, 256], sizes = [2, 8, 128], strides = [1, 1, 1]} : vector<2x8x384xf32> to vector<2x8x128xf32>
    %cst_72 = arith.constant 0.000000e+00 : f32
    %343 = vector.broadcast %cst_72 : f32 to vector<2x1x128xf32>
    %344 = vector.extract_strided_slice %340 {offsets = [0, 0, 0], sizes = [2, 7, 128], strides = [1, 1, 1]} : vector<2x8x128xf32> to vector<2x7x128xf32>
    %345 = tpu.concatenate %343, %344 in 1 : vector<2x1x128xf32>, vector<2x7x128xf32> -> vector<2x8x128xf32>
    %346 = arith.addf %345, %341 : vector<2x8x128xf32>
    %347 = vector.extract_strided_slice %342 {offsets = [0, 1, 0], sizes = [2, 7, 128], strides = [1, 1, 1]} : vector<2x8x128xf32> to vector<2x7x128xf32>
    %348 = tpu.concatenate %347, %343 in 1 : vector<2x7x128xf32>, vector<2x1x128xf32> -> vector<2x8x128xf32>
    %349 = arith.addf %346, %348 : vector<2x8x128xf32>
    %c0_73 = arith.constant 0 : index
    %c0_74 = arith.constant 0 : index
    %350 = vector.load %arg10[%c0_73, %c0_74] : memref<1x128xf32, #tpu.memory_space<vmem>>, vector<1x128xf32>
    %351 = vector.shape_cast %350 : vector<1x128xf32> to vector<1x1x128xf32>
    %352 = vector.broadcast %351 : vector<1x1x128xf32> to vector<2x8x128xf32>
    %353 = arith.addf %349, %352 : vector<2x8x128xf32>
    %354 = vector.shape_cast %353 : vector<2x8x128xf32> to vector<2x8x1x128xf32>
    %355 = vector.shape_cast %353 : vector<2x8x128xf32> to vector<2x1x8x128xf32>
    %356 = tpu.iota {dimensions = array<i32: 1>} : vector<2x8x8x128xi32>
    %357 = tpu.iota {dimensions = array<i32: 2>} : vector<2x8x8x128xi32>
    %358 = vector.broadcast %355 : vector<2x1x8x128xf32> to vector<2x8x8x128xf32>
    %359 = vector.broadcast %354 : vector<2x8x1x128xf32> to vector<2x8x8x128xf32>
    %360 = arith.cmpf ogt, %358, %359 : vector<2x8x8x128xf32>
    %361 = vector.broadcast %355 : vector<2x1x8x128xf32> to vector<2x8x8x128xf32>
    %362 = vector.broadcast %354 : vector<2x8x1x128xf32> to vector<2x8x8x128xf32>
    %363 = arith.cmpf oeq, %361, %362 : vector<2x8x8x128xf32>
    %364 = arith.cmpi slt, %357, %356 : vector<2x8x8x128xi32>
    %365 = arith.andi %363, %364 : vector<2x8x8x128xi1>
    %366 = arith.ori %360, %365 : vector<2x8x8x128xi1>
    %367 = arith.extui %366 : vector<2x8x8x128xi1> to vector<2x8x8x128xi32>
    %cst_75 = arith.constant dense<0> : vector<2x8x128xi32>
    %368 = vector.multi_reduction <add>, %367, %cst_75 [2] : vector<2x8x8x128xi32> to vector<2x8x128xi32>
    %c5_i32 = arith.constant 5 : i32
    %369 = vector.broadcast %c5_i32 : i32 to vector<2x8x128xi32>
    %370 = arith.cmpi slt, %368, %369 : vector<2x8x128xi32>
    %371 = vector.shape_cast %370 : vector<2x8x128xi1> to vector<2x1x8x128xi1>
    %372 = arith.cmpi slt, %357, %356 : vector<2x8x8x128xi32>
    %373 = vector.broadcast %371 : vector<2x1x8x128xi1> to vector<2x8x8x128xi1>
    %374 = arith.andi %373, %372 : vector<2x8x8x128xi1>
    %375 = arith.extui %374 : vector<2x8x8x128xi1> to vector<2x8x8x128xi32>
    %cst_76 = arith.constant dense<0> : vector<2x8x128xi32>
    %376 = vector.multi_reduction <add>, %375, %cst_76 [2] : vector<2x8x8x128xi32> to vector<2x8x128xi32>
    %c0_i32 = arith.constant 0 : i32
    %377 = vector.broadcast %c0_i32 : i32 to vector<2x8x128xi32>
    %378 = arith.cmpi eq, %376, %377 : vector<2x8x128xi32>
    %379 = arith.andi %370, %378 : vector<2x8x128xi1>
    %cst_77 = arith.constant 0.000000e+00 : f32
    %380 = vector.broadcast %cst_77 : f32 to vector<2x8x128xf32>
    %381 = arith.select %379, %353, %380 : vector<2x8x128xi1>, vector<2x8x128xf32>
    %cst_78 = arith.constant dense<0.000000e+00> : vector<2x128xf32>
    %382 = vector.multi_reduction <add>, %381, %cst_78 [1] : vector<2x8x128xf32> to vector<2x128xf32>
    %c1_i32 = arith.constant 1 : i32
    %383 = vector.broadcast %c1_i32 : i32 to vector<2x8x128xi32>
    %384 = arith.cmpi eq, %376, %383 : vector<2x8x128xi32>
    %385 = arith.andi %370, %384 : vector<2x8x128xi1>
    %cst_79 = arith.constant 0.000000e+00 : f32
    %386 = vector.broadcast %cst_79 : f32 to vector<2x8x128xf32>
    %387 = arith.select %385, %353, %386 : vector<2x8x128xi1>, vector<2x8x128xf32>
    %cst_80 = arith.constant dense<0.000000e+00> : vector<2x128xf32>
    %388 = vector.multi_reduction <add>, %387, %cst_80 [1] : vector<2x8x128xf32> to vector<2x128xf32>
    %c2_i32 = arith.constant 2 : i32
    %389 = vector.broadcast %c2_i32 : i32 to vector<2x8x128xi32>
    %390 = arith.cmpi eq, %376, %389 : vector<2x8x128xi32>
    %391 = arith.andi %370, %390 : vector<2x8x128xi1>
    %cst_81 = arith.constant 0.000000e+00 : f32
    %392 = vector.broadcast %cst_81 : f32 to vector<2x8x128xf32>
    %393 = arith.select %391, %353, %392 : vector<2x8x128xi1>, vector<2x8x128xf32>
    %cst_82 = arith.constant dense<0.000000e+00> : vector<2x128xf32>
    %394 = vector.multi_reduction <add>, %393, %cst_82 [1] : vector<2x8x128xf32> to vector<2x128xf32>
    %c3_i32 = arith.constant 3 : i32
    %395 = vector.broadcast %c3_i32 : i32 to vector<2x8x128xi32>
    %396 = arith.cmpi eq, %376, %395 : vector<2x8x128xi32>
    %397 = arith.andi %370, %396 : vector<2x8x128xi1>
    %cst_83 = arith.constant 0.000000e+00 : f32
    %398 = vector.broadcast %cst_83 : f32 to vector<2x8x128xf32>
    %399 = arith.select %397, %353, %398 : vector<2x8x128xi1>, vector<2x8x128xf32>
    %cst_84 = arith.constant dense<0.000000e+00> : vector<2x128xf32>
    %400 = vector.multi_reduction <add>, %399, %cst_84 [1] : vector<2x8x128xf32> to vector<2x128xf32>
    %c4_i32 = arith.constant 4 : i32
    %401 = vector.broadcast %c4_i32 : i32 to vector<2x8x128xi32>
    %402 = arith.cmpi eq, %376, %401 : vector<2x8x128xi32>
    %403 = arith.andi %370, %402 : vector<2x8x128xi1>
    %cst_85 = arith.constant 0.000000e+00 : f32
    %404 = vector.broadcast %cst_85 : f32 to vector<2x8x128xf32>
    %405 = arith.select %403, %353, %404 : vector<2x8x128xi1>, vector<2x8x128xf32>
    %cst_86 = arith.constant dense<0.000000e+00> : vector<2x128xf32>
    %406 = vector.multi_reduction <add>, %405, %cst_86 [1] : vector<2x8x128xf32> to vector<2x128xf32>
    %407 = tpu.concatenate %382, %388, %394, %400, %406 in 1 : vector<2x128xf32>, vector<2x128xf32>, vector<2x128xf32>, vector<2x128xf32>, vector<2x128xf32> -> vector<2x640xf32>
    %c0_87 = arith.constant 0 : index
    %c0_88 = arith.constant 0 : index
    %408 = vector.load %arg11[%c0_87, %c0_88] : memref<640x128xf32, #tpu.memory_space<vmem>>, vector<640x128xf32>
    %cst_89 = arith.constant dense<0.000000e+00> : vector<2x128xf32>
    %409 = tpu.matmul %407, %408, %cst_89 {dimension_numbers = #tpu.dot_dimension_numbers<[1], [0], [0], [1], [0, 0, 1, 1], [], []>} : vector<2x640xf32>, vector<640x128xf32>, vector<2x128xf32> -> vector<2x128xf32>
    %c0_90 = arith.constant 0 : index
    %c0_91 = arith.constant 0 : index
    %410 = vector.load %arg12[%c0_90, %c0_91] : memref<1x128xf32, #tpu.memory_space<vmem>>, vector<1x128xf32>
    %411 = vector.broadcast %410 : vector<1x128xf32> to vector<2x128xf32>
    %412 = arith.addf %409, %411 : vector<2x128xf32>
    %c0_92 = arith.constant 0 : index
    %c0_93 = arith.constant 0 : index
    %413 = vector.load %arg15[%c0_92, %c0_93] : memref<128x128xf32, #tpu.memory_space<vmem>>, vector<128x128xf32>
    %cst_94 = arith.constant dense<0.000000e+00> : vector<2x128xf32>
    %414 = tpu.matmul %41, %413, %cst_94 {dimension_numbers = #tpu.dot_dimension_numbers<[1], [0], [0], [1], [0, 0, 1, 1], [], []>} : vector<2x128xf32>, vector<128x128xf32>, vector<2x128xf32> -> vector<2x128xf32>
    %c0_95 = arith.constant 0 : index
    %c0_96 = arith.constant 0 : index
    %415 = vector.load %arg16[%c0_95, %c0_96] : memref<1x128xf32, #tpu.memory_space<vmem>>, vector<1x128xf32>
    %416 = vector.broadcast %415 : vector<1x128xf32> to vector<2x128xf32>
    %417 = arith.addf %414, %416 : vector<2x128xf32>
    %418 = tpu.concatenate %412, %339, %417 in 0 : vector<2x128xf32>, vector<2x128xf32>, vector<2x128xf32> -> vector<6x128xf32>
    %c0_97 = arith.constant 0 : index
    %c0_98 = arith.constant 0 : index
    %419 = vector.load %arg17[%c0_97, %c0_98] : memref<1x128xf32, #tpu.memory_space<vmem>>, vector<1x128xf32>
    %c0_99 = arith.constant 0 : index
    %c0_100 = arith.constant 0 : index
    %420 = vector.load %arg18[%c0_99, %c0_100] : memref<1x128xf32, #tpu.memory_space<vmem>>, vector<1x128xf32>
    %cst_101 = arith.constant dense<0.000000e+00> : vector<6xf32>
    %421 = vector.multi_reduction <add>, %418, %cst_101 [1] : vector<6x128xf32> to vector<6xf32>
    %422 = vector.shape_cast %421 : vector<6xf32> to vector<6x1xf32>
    %cst_102 = arith.constant 1.280000e+02 : f32
    %423 = vector.broadcast %cst_102 : f32 to vector<6x1xf32>
    %424 = arith.divf %422, %423 : vector<6x1xf32>
    %425 = vector.broadcast %424 : vector<6x1xf32> to vector<6x128xf32>
    %426 = arith.subf %418, %425 : vector<6x128xf32>
    %427 = arith.mulf %426, %426 : vector<6x128xf32>
    %cst_103 = arith.constant dense<0.000000e+00> : vector<6xf32>
    %428 = vector.multi_reduction <add>, %427, %cst_103 [1] : vector<6x128xf32> to vector<6xf32>
    %429 = vector.shape_cast %428 : vector<6xf32> to vector<6x1xf32>
    %cst_104 = arith.constant 1.280000e+02 : f32
    %430 = vector.broadcast %cst_104 : f32 to vector<6x1xf32>
    %431 = arith.divf %429, %430 : vector<6x1xf32>
    %cst_105 = arith.constant 9.99999974E-6 : f32
    %432 = vector.broadcast %cst_105 : f32 to vector<6x1xf32>
    %433 = arith.addf %431, %432 : vector<6x1xf32>
    %434 = math.rsqrt %433 : vector<6x1xf32>
    %435 = vector.broadcast %434 : vector<6x1xf32> to vector<6x128xf32>
    %436 = arith.mulf %426, %435 : vector<6x128xf32>
    %437 = vector.broadcast %419 : vector<1x128xf32> to vector<6x128xf32>
    %438 = arith.mulf %436, %437 : vector<6x128xf32>
    %439 = vector.broadcast %420 : vector<1x128xf32> to vector<6x128xf32>
    %440 = arith.addf %438, %439 : vector<6x128xf32>
    %c0_106 = arith.constant 0 : index
    %c0_107 = arith.constant 0 : index
    %441 = vector.load %arg19[%c0_106, %c0_107] : memref<1x128xf32, #tpu.memory_space<vmem>>, vector<1x128xf32>
    %442 = vector.broadcast %441 : vector<1x128xf32> to vector<6x128xf32>
    %443 = arith.mulf %440, %442 : vector<6x128xf32>
    %cst_108 = arith.constant dense<0.000000e+00> : vector<6xf32>
    %444 = vector.multi_reduction <add>, %443, %cst_108 [1] : vector<6x128xf32> to vector<6xf32>
    %445 = vector.shape_cast %444 : vector<6xf32> to vector<6x1xf32>
    %cst_109 = arith.constant 0.577350259 : f32
    %446 = vector.broadcast %cst_109 : f32 to vector<6x1xf32>
    %447 = arith.mulf %445, %446 : vector<6x1xf32>
    %448 = vector.extract_strided_slice %447 {offsets = [0, 0], sizes = [2, 1], strides = [1, 1]} : vector<6x1xf32> to vector<2x1xf32>
    %449 = vector.extract_strided_slice %447 {offsets = [2, 0], sizes = [2, 1], strides = [1, 1]} : vector<6x1xf32> to vector<2x1xf32>
    %450 = vector.extract_strided_slice %447 {offsets = [4, 0], sizes = [2, 1], strides = [1, 1]} : vector<6x1xf32> to vector<2x1xf32>
    %451 = arith.maximumf %448, %449 : vector<2x1xf32>
    %452 = arith.maximumf %451, %450 : vector<2x1xf32>
    %453 = arith.subf %448, %452 : vector<2x1xf32>
    %454 = math.exp %453 : vector<2x1xf32>
    %455 = arith.subf %449, %452 : vector<2x1xf32>
    %456 = math.exp %455 : vector<2x1xf32>
    %457 = arith.subf %450, %452 : vector<2x1xf32>
    %458 = math.exp %457 : vector<2x1xf32>
    %459 = arith.addf %454, %456 : vector<2x1xf32>
    %460 = arith.addf %459, %458 : vector<2x1xf32>
    %461 = tpu.reciprocal %460 {approx = true} : vector<2x1xf32> -> vector<2x1xf32>
    %462 = arith.mulf %454, %461 : vector<2x1xf32>
    %463 = vector.broadcast %462 : vector<2x1xf32> to vector<2x128xf32>
    %464 = arith.mulf %412, %463 : vector<2x128xf32>
    %465 = arith.mulf %456, %461 : vector<2x1xf32>
    %466 = vector.broadcast %465 : vector<2x1xf32> to vector<2x128xf32>
    %467 = arith.mulf %339, %466 : vector<2x128xf32>
    %468 = arith.addf %464, %467 : vector<2x128xf32>
    %469 = arith.mulf %458, %461 : vector<2x1xf32>
    %470 = vector.broadcast %469 : vector<2x1xf32> to vector<2x128xf32>
    %471 = arith.mulf %417, %470 : vector<2x128xf32>
    %472 = arith.addf %468, %471 : vector<2x128xf32>
    %c0_110 = arith.constant 0 : index
    %c0_111 = arith.constant 0 : index
    %473 = vector.load %arg20[%c0_110, %c0_111] : memref<128x2xf32, #tpu.memory_space<vmem>>, vector<128x2xf32>
    %cst_112 = arith.constant dense<0.000000e+00> : vector<2x2xf32>
    %474 = tpu.matmul %472, %473, %cst_112 {dimension_numbers = #tpu.dot_dimension_numbers<[1], [0], [0], [1], [0, 0, 1, 1], [], []>} : vector<2x128xf32>, vector<128x2xf32>, vector<2x2xf32> -> vector<2x2xf32>
    %c0_113 = arith.constant 0 : index
    %c0_114 = arith.constant 0 : index
    %475 = vector.load %arg21[%c0_113, %c0_114] : memref<1x2xf32, #tpu.memory_space<vmem>>, vector<1x2xf32>
    %476 = vector.broadcast %475 : vector<1x2xf32> to vector<2x2xf32>
    %477 = arith.addf %474, %476 : vector<2x2xf32>
    %c0_115 = arith.constant 0 : index
    %c0_116 = arith.constant 0 : index
    %478 = vector.load %arg22[%c0_115, %c0_116] : memref<2x2xf32, #tpu.memory_space<vmem>>, vector<2x2xf32>
    tpu.vector_store %arg22[%c0_115, %c0_116], %477 {strides = array<i32>} : memref<2x2xf32, #tpu.memory_space<vmem>>, vector<2x2xf32>,
    %479 = tpu.iota {dimensions = array<i32: 1>} : vector<2x3xi32>
    %c0_i32_117 = arith.constant 0 : i32
    %480 = vector.broadcast %c0_i32_117 : i32 to vector<2x3xi32>
    %481 = arith.cmpi eq, %479, %480 : vector<2x3xi32>
    %cst_118 = arith.constant 0.000000e+00 : f32
    %482 = vector.shape_cast %448 : vector<2x1xf32> to vector<2x1xf32>
    %483 = vector.broadcast %482 : vector<2x1xf32> to vector<2x3xf32>
    %484 = vector.broadcast %cst_118 : f32 to vector<2x3xf32>
    %485 = arith.select %481, %483, %484 : vector<2x3xi1>, vector<2x3xf32>
    %c1_i32_119 = arith.constant 1 : i32
    %486 = vector.broadcast %c1_i32_119 : i32 to vector<2x3xi32>
    %487 = arith.cmpi eq, %479, %486 : vector<2x3xi32>
    %cst_120 = arith.constant 0.000000e+00 : f32
    %488 = vector.shape_cast %449 : vector<2x1xf32> to vector<2x1xf32>
    %489 = vector.broadcast %488 : vector<2x1xf32> to vector<2x3xf32>
    %490 = vector.broadcast %cst_120 : f32 to vector<2x3xf32>
    %491 = arith.select %487, %489, %490 : vector<2x3xi1>, vector<2x3xf32>
    %492 = arith.addf %485, %491 : vector<2x3xf32>
    %c2_i32_121 = arith.constant 2 : i32
    %493 = vector.broadcast %c2_i32_121 : i32 to vector<2x3xi32>
    %494 = arith.cmpi eq, %479, %493 : vector<2x3xi32>
    %cst_122 = arith.constant 0.000000e+00 : f32
    %495 = vector.shape_cast %450 : vector<2x1xf32> to vector<2x1xf32>
    %496 = vector.broadcast %495 : vector<2x1xf32> to vector<2x3xf32>
    %497 = vector.broadcast %cst_122 : f32 to vector<2x3xf32>
    %498 = arith.select %494, %496, %497 : vector<2x3xi1>, vector<2x3xf32>
    %499 = arith.addf %492, %498 : vector<2x3xf32>
    %cst_123 = arith.constant dense<0xFF800000> : vector<3xf32>
    %500 = vector.multi_reduction <maximumf>, %499, %cst_123 [0] : vector<2x3xf32> to vector<3xf32>
    %501 = vector.shape_cast %500 : vector<3xf32> to vector<1x3xf32>
    %502 = vector.broadcast %501 : vector<1x3xf32> to vector<2x3xf32>
    %503 = arith.subf %499, %502 : vector<2x3xf32>
    %504 = math.exp %503 : vector<2x3xf32>
    %cst_124 = arith.constant dense<0.000000e+00> : vector<3xf32>
    %505 = vector.multi_reduction <add>, %504, %cst_124 [0] : vector<2x3xf32> to vector<3xf32>
    %506 = vector.shape_cast %505 : vector<3xf32> to vector<1x3xf32>
    %507 = tpu.reciprocal %506 {approx = true} : vector<1x3xf32> -> vector<1x3xf32>
    %508 = vector.broadcast %507 : vector<1x3xf32> to vector<2x3xf32>
    %509 = arith.mulf %504, %508 : vector<2x3xf32>
    %c0_125 = arith.constant 0 : index
    %c0_126 = arith.constant 0 : index
    %510 = vector.load %arg23[%c0_125, %c0_126] : memref<2x3xf32, #tpu.memory_space<vmem>>, vector<2x3xf32>
    tpu.vector_store %arg23[%c0_125, %c0_126], %509 {strides = array<i32>} : memref<2x3xf32, #tpu.memory_space<vmem>>, vector<2x3xf32>,
    return
  }
  func.func @transform_0(%arg0: i32) -> (i32, i32, i32) {
    %c0_i32 = arith.constant 0 : i32
    %c0_i32_0 = arith.constant 0 : i32
    %c0_i32_1 = arith.constant 0 : i32
    %c0_i32_2 = arith.constant 0 : i32
    return %c0_i32, %c0_i32_0, %c0_i32_1 : i32, i32, i32
  }
  func.func @transform_1(%arg0: i32) -> (i32, i32, i32) {
    %c0_i32 = arith.constant 0 : i32
    %c0_i32_0 = arith.constant 0 : i32
    %c0_i32_1 = arith.constant 0 : i32
    %c0_i32_2 = arith.constant 0 : i32
    return %c0_i32, %c0_i32_0, %c0_i32_1 : i32, i32, i32
  }
  func.func @transform_2(%arg0: i32) -> (i32, i32) {
    %c0_i32 = arith.constant 0 : i32
    %c0_i32_0 = arith.constant 0 : i32
    %c0_i32_1 = arith.constant 0 : i32
    return %c0_i32, %c0_i32_0 : i32, i32
  }
  func.func @transform_3(%arg0: i32) -> (i32, i32) {
    %c0_i32 = arith.constant 0 : i32
    %c0_i32_0 = arith.constant 0 : i32
    %c0_i32_1 = arith.constant 0 : i32
    return %c0_i32, %c0_i32_0 : i32, i32
  }
  func.func @transform_4(%arg0: i32) -> (i32, i32) {
    %c0_i32 = arith.constant 0 : i32
    %c0_i32_0 = arith.constant 0 : i32
    %c0_i32_1 = arith.constant 0 : i32
    return %c0_i32, %c0_i32_0 : i32, i32
  }
  func.func @transform_5(%arg0: i32) -> (i32, i32) {
    %c0_i32 = arith.constant 0 : i32
    %c0_i32_0 = arith.constant 0 : i32
    %c0_i32_1 = arith.constant 0 : i32
    return %c0_i32, %c0_i32_0 : i32, i32
  }
  func.func @transform_6(%arg0: i32) -> (i32, i32) {
    %c0_i32 = arith.constant 0 : i32
    %c0_i32_0 = arith.constant 0 : i32
    %c0_i32_1 = arith.constant 0 : i32
    return %c0_i32, %c0_i32_0 : i32, i32
  }
  func.func @transform_7(%arg0: i32) -> (i32, i32) {
    %c0_i32 = arith.constant 0 : i32
    %c0_i32_0 = arith.constant 0 : i32
    %c0_i32_1 = arith.constant 0 : i32
    return %c0_i32, %c0_i32_0 : i32, i32
  }
  func.func @transform_8(%arg0: i32) -> (i32, i32) {
    %c0_i32 = arith.constant 0 : i32
    %c0_i32_0 = arith.constant 0 : i32
    %c0_i32_1 = arith.constant 0 : i32
    return %c0_i32, %c0_i32_0 : i32, i32
  }
  func.func @transform_9(%arg0: i32) -> (i32, i32) {
    %c0_i32 = arith.constant 0 : i32
    %c0_i32_0 = arith.constant 0 : i32
    %c0_i32_1 = arith.constant 0 : i32
    return %c0_i32, %c0_i32_0 : i32, i32
  }
  func.func @transform_10(%arg0: i32) -> (i32, i32) {
    %c0_i32 = arith.constant 0 : i32
    %c0_i32_0 = arith.constant 0 : i32
    %c0_i32_1 = arith.constant 0 : i32
    return %c0_i32, %c0_i32_0 : i32, i32
  }
  func.func @transform_11(%arg0: i32) -> (i32, i32) {
    %c0_i32 = arith.constant 0 : i32
    %c0_i32_0 = arith.constant 0 : i32
    %c0_i32_1 = arith.constant 0 : i32
    return %c0_i32, %c0_i32_0 : i32, i32
  }
  func.func @transform_12(%arg0: i32) -> (i32, i32) {
    %c0_i32 = arith.constant 0 : i32
    %c0_i32_0 = arith.constant 0 : i32
    %c0_i32_1 = arith.constant 0 : i32
    return %c0_i32, %c0_i32_0 : i32, i32
  }
  func.func @transform_13(%arg0: i32) -> (i32, i32) {
    %c0_i32 = arith.constant 0 : i32
    %c0_i32_0 = arith.constant 0 : i32
    %c0_i32_1 = arith.constant 0 : i32
    return %c0_i32, %c0_i32_0 : i32, i32
  }
  func.func @transform_14(%arg0: i32) -> (i32, i32) {
    %c0_i32 = arith.constant 0 : i32
    %c0_i32_0 = arith.constant 0 : i32
    %c0_i32_1 = arith.constant 0 : i32
    return %c0_i32, %c0_i32_0 : i32, i32
  }
  func.func @transform_15(%arg0: i32) -> (i32, i32) {
    %c0_i32 = arith.constant 0 : i32
    %c0_i32_0 = arith.constant 0 : i32
    %c0_i32_1 = arith.constant 0 : i32
    return %c0_i32, %c0_i32_0 : i32, i32
  }
  func.func @transform_16(%arg0: i32) -> (i32, i32) {
    %c0_i32 = arith.constant 0 : i32
    %c0_i32_0 = arith.constant 0 : i32
    %c0_i32_1 = arith.constant 0 : i32
    return %c0_i32, %c0_i32_0 : i32, i32
  }
  func.func @transform_17(%arg0: i32) -> (i32, i32) {
    %c0_i32 = arith.constant 0 : i32
    %c0_i32_0 = arith.constant 0 : i32
    %c0_i32_1 = arith.constant 0 : i32
    return %c0_i32, %c0_i32_0 : i32, i32
  }
  func.func @transform_18(%arg0: i32) -> (i32, i32) {
    %c0_i32 = arith.constant 0 : i32
    %c0_i32_0 = arith.constant 0 : i32
    %c0_i32_1 = arith.constant 0 : i32
    return %c0_i32, %c0_i32_0 : i32, i32
  }
  func.func @transform_19(%arg0: i32) -> (i32, i32) {
    %c0_i32 = arith.constant 0 : i32
    %c0_i32_0 = arith.constant 0 : i32
    %c0_i32_1 = arith.constant 0 : i32
    return %c0_i32, %c0_i32_0 : i32, i32
  }
  func.func @transform_20(%arg0: i32) -> (i32, i32) {
    %c0_i32 = arith.constant 0 : i32
    %c0_i32_0 = arith.constant 0 : i32
    %c0_i32_1 = arith.constant 0 : i32
    return %c0_i32, %c0_i32_0 : i32, i32
  }
  func.func @transform_21(%arg0: i32) -> (i32, i32) {
    %c0_i32 = arith.constant 0 : i32
    %c0_i32_0 = arith.constant 0 : i32
    %c0_i32_1 = arith.constant 0 : i32
    return %c0_i32, %c0_i32_0 : i32, i32
  }
  func.func @transform_22(%arg0: i32) -> (i32, i32) {
    %c0_i32 = arith.constant 0 : i32
    %c0_i32_0 = arith.constant 0 : i32
    %c0_i32_1 = arith.constant 0 : i32
    return %c0_i32, %c0_i32_0 : i32, i32
  }
}

</mosaic_0001>

<llo_original>
// kernel: block_forward.1
$region0: #{block_forward.1}
  #allocation0 [shape = 'u32[]', space=smem, size = 0x4, offset = 0x4, fixed_abs, tag = 'smem constant byte address 0x4 - core index']
  #allocation1 [shape = 'u32[72,128]{1,0:T(1,128)}', space=vmem, size = 0x9000, scoped, tag = 'internal scratch']
  %s0 = inlined_call_operand.vmem [shape: f32[2,8,128], index: 0, kind: input, shape index: {}]
  %s1 = inlined_call_operand.vmem [shape: f32[2,8,128], index: 1, kind: input, shape index: {}]
  %s2 = inlined_call_operand.vmem [shape: f32[2,128], index: 2, kind: input, shape index: {}]
  %s3 = inlined_call_operand.vmem [shape: f32[1,128], index: 3, kind: input, shape index: {}]
  %s4 = inlined_call_operand.vmem [shape: f32[1,128], index: 4, kind: input, shape index: {}]
  %s5 = inlined_call_operand.vmem [shape: f32[128,1536], index: 5, kind: input, shape index: {}]
  %s6 = inlined_call_operand.vmem [shape: f32[1,1536], index: 6, kind: input, shape index: {}]
  %s7 = inlined_call_operand.vmem [shape: f32[128,512], index: 7, kind: input, shape index: {}]
  %s8 = inlined_call_operand.vmem [shape: f32[128,512], index: 8, kind: input, shape index: {}]
  %s9 = inlined_call_operand.vmem [shape: f32[1,128], index: 9, kind: input, shape index: {}]
  %s10 = inlined_call_operand.vmem [shape: f32[640,128], index: 10, kind: input, shape index: {}]
  %s11 = inlined_call_operand.vmem [shape: f32[1,128], index: 11, kind: input, shape index: {}]
  %s12 = inlined_call_operand.vmem [shape: f32[256,128], index: 12, kind: input, shape index: {}]
  %s13 = inlined_call_operand.vmem [shape: f32[1,128], index: 13, kind: input, shape index: {}]
  %s14 = inlined_call_operand.vmem [shape: f32[128,128], index: 14, kind: input, shape index: {}]
  %s15 = inlined_call_operand.vmem [shape: f32[1,128], index: 15, kind: input, shape index: {}]
  %s16 = inlined_call_operand.vmem [shape: f32[1,128], index: 16, kind: input, shape index: {}]
  %s17 = inlined_call_operand.vmem [shape: f32[1,128], index: 17, kind: input, shape index: {}]
  %s18 = inlined_call_operand.vmem [shape: f32[1,128], index: 18, kind: input, shape index: {}]
  %s19 = inlined_call_operand.vmem [shape: f32[128,2], index: 19, kind: input, shape index: {}]
  %s20 = inlined_call_operand.vmem [shape: f32[1,2], index: 20, kind: input, shape index: {}]
  %s21 = inlined_call_operand.hbm [shape: f32[2,2], index: 21, kind: output, shape index: {0}]
  %s22 = inlined_call_operand.hbm [shape: f32[2,3], index: 22, kind: output, shape index: {1}]
  %23 = xla_tuple %s21, %s22
  %s24 = sld [smem:[#allocation0]]
  $region102: #{block_forward.1} parent=0
    _
  %s26 = ssub.s32 1, %s24
  %s27 = scalar_select 0, %s26, %s24
  $region1: #{block_forward.1} parent=0
    #allocation2 [shape = 'u8[1024]{0}', space=vmem, size = 0x400, scoped, tag = 'output window, operand 0, single buffered']
    #allocation3 [shape = 's32[1]{0}', space=sflag, size = 0x4, scoped, tag = 'scoped memory for block_forward.1']
    #allocation4 [shape = 'u8[1024]{0}', space=vmem, size = 0x400, scoped, tag = 'output window, operand 1, single buffered']
    #allocation5 [shape = 's32[1]{0}', space=sflag, size = 0x4, scoped, tag = 'scoped memory for block_forward.1']
    %28 = vsyncpa [#allocation3], 0
    %29 = vsyncpa [#allocation5], 0
    // Predicated region
    $region2: #{block_forward.1} parent=1 // pred_check
      _
    $region3: #{block_forward.1} parent=1 // pred_check_branch
      %31 = sbr.rel (0) target = $region5
    $region4: #{block_forward.1} parent=1 // pred_region
      _
    $region5: #{block_forward.1} parent=1 // pred_fallthru
      _
    // Predicated region
    $region6: #{block_forward.1} parent=1 // pred_check
      _
    $region7: #{block_forward.1} parent=1 // pred_check_branch
      %33 = sbr.rel (0) target = $region9
    $region8: #{block_forward.1} parent=1 // pred_region
      _
    $region9: #{block_forward.1} parent=1 // pred_fallthru
      _
    // Predicated region
    $region10: #{block_forward.1} parent=1 // pred_check
      _
    $region11: #{block_forward.1} parent=1 // pred_check_branch
      %35 = sbr.rel (0) target = $region13
    $region12: #{block_forward.1} parent=1 // pred_region
      _
    $region13: #{block_forward.1} parent=1 // pred_fallthru
      _
    // Predicated region
    $region14: #{block_forward.1} parent=1 // pred_check
      _
    $region15: #{block_forward.1} parent=1 // pred_check_branch
      %37 = sbr.rel (0) target = $region17
    $region16: #{block_forward.1} parent=1 // pred_region
      _
    $region17: #{block_forward.1} parent=1 // pred_fallthru
      _
    // Predicated region
    $region18: #{block_forward.1} parent=1 // pred_check
      _
    $region19: #{block_forward.1} parent=1 // pred_check_branch
      %39 = sbr.rel (0) target = $region21
    $region20: #{block_forward.1} parent=1 // pred_region
      _
    $region21: #{block_forward.1} parent=1 // pred_fallthru
      _
    // Predicated region
    $region22: #{block_forward.1} parent=1 // pred_check
      _
    $region23: #{block_forward.1} parent=1 // pred_check_branch
      %41 = sbr.rel (0) target = $region25
    $region24: #{block_forward.1} parent=1 // pred_region
      _
    $region25: #{block_forward.1} parent=1 // pred_fallthru
      _
    // Predicated region
    $region26: #{block_forward.1} parent=1 // pred_check
      _
    $region27: #{block_forward.1} parent=1 // pred_check_branch
      %43 = sbr.rel (0) target = $region29
    $region28: #{block_forward.1} parent=1 // pred_region
      _
    $region29: #{block_forward.1} parent=1 // pred_fallthru
      _
    // Predicated region
    $region30: #{block_forward.1} parent=1 // pred_check
      _
    $region31: #{block_forward.1} parent=1 // pred_check_branch
      %45 = sbr.rel (0) target = $region33
    $region32: #{block_forward.1} parent=1 // pred_region
      _
    $region33: #{block_forward.1} parent=1 // pred_fallthru
      _
    // Predicated region
    $region34: #{block_forward.1} parent=1 // pred_check
      _
    $region35: #{block_forward.1} parent=1 // pred_check_branch
      %47 = sbr.rel (0) target = $region37
    $region36: #{block_forward.1} parent=1 // pred_region
      _
    $region37: #{block_forward.1} parent=1 // pred_fallthru
      _
    // Predicated region
    $region38: #{block_forward.1} parent=1 // pred_check
      _
    $region39: #{block_forward.1} parent=1 // pred_check_branch
      %49 = sbr.rel (0) target = $region41
    $region40: #{block_forward.1} parent=1 // pred_region
      _
    $region41: #{block_forward.1} parent=1 // pred_fallthru
      _
    // Predicated region
    $region42: #{block_forward.1} parent=1 // pred_check
      _
    $region43: #{block_forward.1} parent=1 // pred_check_branch
      %51 = sbr.rel (0) target = $region45
    $region44: #{block_forward.1} parent=1 // pred_region
      _
    $region45: #{block_forward.1} parent=1 // pred_fallthru
      _
    // Predicated region
    $region46: #{block_forward.1} parent=1 // pred_check
      _
    $region47: #{block_forward.1} parent=1 // pred_check_branch
      %53 = sbr.rel (0) target = $region49
    $region48: #{block_forward.1} parent=1 // pred_region
      _
    $region49: #{block_forward.1} parent=1 // pred_fallthru
      _
    // Predicated region
    $region50: #{block_forward.1} parent=1 // pred_check
      _
    $region51: #{block_forward.1} parent=1 // pred_check_branch
      %55 = sbr.rel (0) target = $region53
    $region52: #{block_forward.1} parent=1 // pred_region
      _
    $region53: #{block_forward.1} parent=1 // pred_fallthru
      _
    // Predicated region
    $region54: #{block_forward.1} parent=1 // pred_check
      _
    $region55: #{block_forward.1} parent=1 // pred_check_branch
      %57 = sbr.rel (0) target = $region57
    $region56: #{block_forward.1} parent=1 // pred_region
      _
    $region57: #{block_forward.1} parent=1 // pred_fallthru
      _
    // Predicated region
    $region58: #{block_forward.1} parent=1 // pred_check
      _
    $region59: #{block_forward.1} parent=1 // pred_check_branch
      %59 = sbr.rel (0) target = $region61
    $region60: #{block_forward.1} parent=1 // pred_region
      _
    $region61: #{block_forward.1} parent=1 // pred_fallthru
      _
    // Predicated region
    $region62: #{block_forward.1} parent=1 // pred_check
      _
    $region63: #{block_forward.1} parent=1 // pred_check_branch
      %61 = sbr.rel (0) target = $region65
    $region64: #{block_forward.1} parent=1 // pred_region
      _
    $region65: #{block_forward.1} parent=1 // pred_fallthru
      _
    // Predicated region
    $region66: #{block_forward.1} parent=1 // pred_check
      _
    $region67: #{block_forward.1} parent=1 // pred_check_branch
      %63 = sbr.rel (0) target = $region69
    $region68: #{block_forward.1} parent=1 // pred_region
      _
    $region69: #{block_forward.1} parent=1 // pred_fallthru
      _
    // Predicated region
    $region70: #{block_forward.1} parent=1 // pred_check
      _
    $region71: #{block_forward.1} parent=1 // pred_check_branch
      %65 = sbr.rel (0) target = $region73
    $region72: #{block_forward.1} parent=1 // pred_region
      _
    $region73: #{block_forward.1} parent=1 // pred_fallthru
      _
    // Predicated region
    $region74: #{block_forward.1} parent=1 // pred_check
      _
    $region75: #{block_forward.1} parent=1 // pred_check_branch
      %67 = sbr.rel (0) target = $region77
    $region76: #{block_forward.1} parent=1 // pred_region
      _
    $region77: #{block_forward.1} parent=1 // pred_fallthru
      _
    // Predicated region
    $region78: #{block_forward.1} parent=1 // pred_check
      _
    $region79: #{block_forward.1} parent=1 // pred_check_branch
      %69 = sbr.rel (0) target = $region81
    $region80: #{block_forward.1} parent=1 // pred_region
      _
    $region81: #{block_forward.1} parent=1 // pred_fallthru
      _
    // Predicated region
    $region82: #{block_forward.1} parent=1 // pred_check
      _
    $region83: #{block_forward.1} parent=1 // pred_check_branch
      %71 = sbr.rel (0) target = $region85
    $region84: #{block_forward.1} parent=1 // pred_region
      _
    $region85: #{block_forward.1} parent=1 // pred_fallthru
      _
    %v72 = vld [vmem:[%s0] sm:$0xff]
    %v73 = vld [vmem:[%s0 + $0x8] sm:$0xff]
    %v74 = vld [vmem:[%s1] sm:$0xff]
    %v75 = vld [vmem:[%s1 + $0x8] sm:$0xff]
    %v76 = vadd.f32 %v72, %v74
    %v77 = vadd.f32 %v73, %v75
    %v78 = vld [vmem:[%s2] sm:$0x3]
    %v80 = vrot.slane %v78, 1
    %v81 = vperm.slane %v78, 0
    %v82 = vperm.slane %v80, 0
    %v85 = vadd.f32 %v76, %v81
    %v86 = vadd.f32 %v77, %v82
    %v87 = vld [vmem:[%s3] sm:$0x1]
    %v88 = vld [vmem:[%s4] sm:$0x1]
    %89 = vadd.xlane.f32.xlu0 %v85
    %v90 = vpop.xlane.xlu0 %89
    %91 = vadd.xlane.f32.xlu0 %v86
    %v92 = vpop.xlane.xlu0 %91
    %v93 = vrcp.pop 128.0
    %v94 = vmul.f32 128.0, %v93
    %v95 = vsub.f32 1.0, %v94
    %v96 = vmul.f32 %v93, %v95
    %v97 = vadd.f32 %v93, %v96
    %vm98 = vweird.f32 %v93
    %v99 = vsel %vm98, %v93, %v97
    %v100 = vmul.f32 %v90, %v99
    %v101 = vmul.f32 %v92, %v99
    %v102 = vsub.f32 %v85, %v100
    %v103 = vsub.f32 %v86, %v101
    %v104 = vmul.f32 %v102, %v102
    %v105 = vmul.f32 %v103, %v103
    %106 = vadd.xlane.f32.xlu0 %v104
    %v107 = vpop.xlane.xlu0 %106
    %108 = vadd.xlane.f32.xlu0 %v105
    %v109 = vpop.xlane.xlu0 %108
    %v110 = vmul.f32 %v107, %v99
    %v111 = vmul.f32 %v109, %v99
    %v112 = vadd.f32 %v110, 1e-05
    %v113 = vadd.f32 %v111, 1e-05
    %v114 = vrsqrt.pop %v112
    %v115 = vmul.f32 %v114, %v112
    %v116 = vmul.f32 %v115, %v114
    %v117 = vmul.f32 0.5, %v116
    %v118 = vsub.f32 1.5, %v117
    %v119 = vmul.f32 %v114, %v118
    %vm120 = vweird.f32 %v112
    %vm121 = vweird.f32 %v114
    %vm122 = vmor %vm120, %vm121
    %v123 = vsel %vm122, %v114, %v119
    %v124 = vrsqrt.pop %v113
    %v125 = vmul.f32 %v124, %v113
    %v126 = vmul.f32 %v125, %v124
    %v127 = vmul.f32 0.5, %v126
    %v128 = vsub.f32 1.5, %v127
    %v129 = vmul.f32 %v124, %v128
    %vm130 = vweird.f32 %v113
    %vm131 = vweird.f32 %v124
    %vm132 = vmor %vm130, %vm131
    %v133 = vsel %vm132, %v124, %v129
    %v134 = vmul.f32 %v102, %v123
    %v135 = vmul.f32 %v103, %v133
    %v137 = vperm.slane %v87, 0
    %v139 = vmul.f32 %v134, %v137
    %v140 = vmul.f32 %v135, %v137
    %v142 = vperm.slane %v88, 0
    %v144 = vadd.f32 %v139, %v142
    %v145 = vadd.f32 %v140, %v142
    %v146 = vld [vmem:[%s5] sm:$0xff]
    %v147 = vld [vmem:[%s5 + $0x8] sm:$0xff]
    %v148 = vld [vmem:[%s5 + $0x10] sm:$0xff]
    %v149 = vld [vmem:[%s5 + $0x18] sm:$0xff]
    %v150 = vld [vmem:[%s5 + $0x20] sm:$0xff]
    %v151 = vld [vmem:[%s5 + $0x28] sm:$0xff]
    %v152 = vld [vmem:[%s5 + $0x30] sm:$0xff]
    %v153 = vld [vmem:[%s5 + $0x38] sm:$0xff]
    %v154 = vld [vmem:[%s5 + $0x40] sm:$0xff]
    %v155 = vld [vmem:[%s5 + $0x48] sm:$0xff]
    %v156 = vld [vmem:[%s5 + $0x50] sm:$0xff]
    %v157 = vld [vmem:[%s5 + $0x58] sm:$0xff]
    %v158 = vld [vmem:[%s5 + $0x60] sm:$0xff]
    %v159 = vld [vmem:[%s5 + $0x68] sm:$0xff]
    %v160 = vld [vmem:[%s5 + $0x70] sm:$0xff]
    %v161 = vld [vmem:[%s5 + $0x78] sm:$0xff]
    %v162 = vld [vmem:[%s5 + $0x80] sm:$0xff]
    %v163 = vld [vmem:[%s5 + $0x88] sm:$0xff]
    %v164 = vld [vmem:[%s5 + $0x90] sm:$0xff]
    %v165 = vld [vmem:[%s5 + $0x98] sm:$0xff]
    %v166 = vld [vmem:[%s5 + $0xa0] sm:$0xff]
    %v167 = vld [vmem:[%s5 + $0xa8] sm:$0xff]
    %v168 = vld [vmem:[%s5 + $0xb0] sm:$0xff]
    %v169 = vld [vmem:[%s5 + $0xb8] sm:$0xff]
    %v170 = vld [vmem:[%s5 + $0xc0] sm:$0xff]
    %v171 = vld [vmem:[%s5 + $0xc8] sm:$0xff]
    %v172 = vld [vmem:[%s5 + $0xd0] sm:$0xff]
    %v173 = vld [vmem:[%s5 + $0xd8] sm:$0xff]
    %v174 = vld [vmem:[%s5 + $0xe0] sm:$0xff]
    %v175 = vld [vmem:[%s5 + $0xe8] sm:$0xff]
    %v176 = vld [vmem:[%s5 + $0xf0] sm:$0xff]
    %v177 = vld [vmem:[%s5 + $0xf8] sm:$0xff]
    %v178 = vld [vmem:[%s5 + $0x100] sm:$0xff]
    %v179 = vld [vmem:[%s5 + $0x108] sm:$0xff]
    %v180 = vld [vmem:[%s5 + $0x110] sm:$0xff]
    %v181 = vld [vmem:[%s5 + $0x118] sm:$0xff]
    %v182 = vld [vmem:[%s5 + $0x120] sm:$0xff]
    %v183 = vld [vmem:[%s5 + $0x128] sm:$0xff]
    %v184 = vld [vmem:[%s5 + $0x130] sm:$0xff]
    %v185 = vld [vmem:[%s5 + $0x138] sm:$0xff]
    %v186 = vld [vmem:[%s5 + $0x140] sm:$0xff]
    %v187 = vld [vmem:[%s5 + $0x148] sm:$0xff]
    %v188 = vld [vmem:[%s5 + $0x150] sm:$0xff]
    %v189 = vld [vmem:[%s5 + $0x158] sm:$0xff]
    %v190 = vld [vmem:[%s5 + $0x160] sm:$0xff]
    %v191 = vld [vmem:[%s5 + $0x168] sm:$0xff]
    %v192 = vld [vmem:[%s5 + $0x170] sm:$0xff]
    %v193 = vld [vmem:[%s5 + $0x178] sm:$0xff]
    %v194 = vld [vmem:[%s5 + $0x180] sm:$0xff]
    %v195 = vld [vmem:[%s5 + $0x188] sm:$0xff]
    %v196 = vld [vmem:[%s5 + $0x190] sm:$0xff]
    %v197 = vld [vmem:[%s5 + $0x198] sm:$0xff]
    %v198 = vld [vmem:[%s5 + $0x1a0] sm:$0xff]
    %v199 = vld [vmem:[%s5 + $0x1a8] sm:$0xff]
    %v200 = vld [vmem:[%s5 + $0x1b0] sm:$0xff]
    %v201 = vld [vmem:[%s5 + $0x1b8] sm:$0xff]
    %v202 = vld [vmem:[%s5 + $0x1c0] sm:$0xff]
    %v203 = vld [vmem:[%s5 + $0x1c8] sm:$0xff]
    %v204 = vld [vmem:[%s5 + $0x1d0] sm:$0xff]
    %v205 = vld [vmem:[%s5 + $0x1d8] sm:$0xff]
    %v206 = vld [vmem:[%s5 + $0x1e0] sm:$0xff]
    %v207 = vld [vmem:[%s5 + $0x1e8] sm:$0xff]
    %v208 = vld [vmem:[%s5 + $0x1f0] sm:$0xff]
    %v209 = vld [vmem:[%s5 + $0x1f8] sm:$0xff]
    %v210 = vld [vmem:[%s5 + $0x200] sm:$0xff]
    %v211 = vld [vmem:[%s5 + $0x208] sm:$0xff]
    %v212 = vld [vmem:[%s5 + $0x210] sm:$0xff]
    %v213 = vld [vmem:[%s5 + $0x218] sm:$0xff]
    %v214 = vld [vmem:[%s5 + $0x220] sm:$0xff]
    %v215 = vld [vmem:[%s5 + $0x228] sm:$0xff]
    %v216 = vld [vmem:[%s5 + $0x230] sm:$0xff]
    %v217 = vld [vmem:[%s5 + $0x238] sm:$0xff]
    %v218 = vld [vmem:[%s5 + $0x240] sm:$0xff]
    %v219 = vld [vmem:[%s5 + $0x248] sm:$0xff]
    %v220 = vld [vmem:[%s5 + $0x250] sm:$0xff]
    %v221 = vld [vmem:[%s5 + $0x258] sm:$0xff]
    %v222 = vld [vmem:[%s5 + $0x260] sm:$0xff]
    %v223 = vld [vmem:[%s5 + $0x268] sm:$0xff]
    %v224 = vld [vmem:[%s5 + $0x270] sm:$0xff]
    %v225 = vld [vmem:[%s5 + $0x278] sm:$0xff]
    %v226 = vld [vmem:[%s5 + $0x280] sm:$0xff]
    %v227 = vld [vmem:[%s5 + $0x288] sm:$0xff]
    %v228 = vld [vmem:[%s5 + $0x290] sm:$0xff]
    %v229 = vld [vmem:[%s5 + $0x298] sm:$0xff]
    %v230 = vld [vmem:[%s5 + $0x2a0] sm:$0xff]
    %v231 = vld [vmem:[%s5 + $0x2a8] sm:$0xff]
    %v232 = vld [vmem:[%s5 + $0x2b0] sm:$0xff]
    %v233 = vld [vmem:[%s5 + $0x2b8] sm:$0xff]
    %v234 = vld [vmem:[%s5 + $0x2c0] sm:$0xff]
    %v235 = vld [vmem:[%s5 + $0x2c8] sm:$0xff]
    %v236 = vld [vmem:[%s5 + $0x2d0] sm:$0xff]
    %v237 = vld [vmem:[%s5 + $0x2d8] sm:$0xff]
    %v238 = vld [vmem:[%s5 + $0x2e0] sm:$0xff]
    %v239 = vld [vmem:[%s5 + $0x2e8] sm:$0xff]
    %v240 = vld [vmem:[%s5 + $0x2f0] sm:$0xff]
    %v241 = vld [vmem:[%s5 + $0x2f8] sm:$0xff]
    %v242 = vld [vmem:[%s5 + $0x300] sm:$0xff]
    %v243 = vld [vmem:[%s5 + $0x308] sm:$0xff]
    %v244 = vld [vmem:[%s5 + $0x310] sm:$0xff]
    %v245 = vld [vmem:[%s5 + $0x318] sm:$0xff]
    %v246 = vld [vmem:[%s5 + $0x320] sm:$0xff]
    %v247 = vld [vmem:[%s5 + $0x328] sm:$0xff]
    %v248 = vld [vmem:[%s5 + $0x330] sm:$0xff]
    %v249 = vld [vmem:[%s5 + $0x338] sm:$0xff]
    %v250 = vld [vmem:[%s5 + $0x340] sm:$0xff]
    %v251 = vld [vmem:[%s5 + $0x348] sm:$0xff]
    %v252 = vld [vmem:[%s5 + $0x350] sm:$0xff]
    %v253 = vld [vmem:[%s5 + $0x358] sm:$0xff]
    %v254 = vld [vmem:[%s5 + $0x360] sm:$0xff]
    %v255 = vld [vmem:[%s5 + $0x368] sm:$0xff]
    %v256 = vld [vmem:[%s5 + $0x370] sm:$0xff]
    %v257 = vld [vmem:[%s5 + $0x378] sm:$0xff]
    %v258 = vld [vmem:[%s5 + $0x380] sm:$0xff]
    %v259 = vld [vmem:[%s5 + $0x388] sm:$0xff]
    %v260 = vld [vmem:[%s5 + $0x390] sm:$0xff]
    %v261 = vld [vmem:[%s5 + $0x398] sm:$0xff]
    %v262 = vld [vmem:[%s5 + $0x3a0] sm:$0xff]
    %v263 = vld [vmem:[%s5 + $0x3a8] sm:$0xff]
    %v264 = vld [vmem:[%s5 + $0x3b0] sm:$0xff]
    %v265 = vld [vmem:[%s5 + $0x3b8] sm:$0xff]
    %v266 = vld [vmem:[%s5 + $0x3c0] sm:$0xff]
    %v267 = vld [vmem:[%s5 + $0x3c8] sm:$0xff]
    %v268 = vld [vmem:[%s5 + $0x3d0] sm:$0xff]
    %v269 = vld [vmem:[%s5 + $0x3d8] sm:$0xff]
    %v270 = vld [vmem:[%s5 + $0x3e0] sm:$0xff]
    %v271 = vld [vmem:[%s5 + $0x3e8] sm:$0xff]
    %v272 = vld [vmem:[%s5 + $0x3f0] sm:$0xff]
    %v273 = vld [vmem:[%s5 + $0x3f8] sm:$0xff]
    %v274 = vld [vmem:[%s5 + $0x400] sm:$0xff]
    %v275 = vld [vmem:[%s5 + $0x408] sm:$0xff]
    %v276 = vld [vmem:[%s5 + $0x410] sm:$0xff]
    %v277 = vld [vmem:[%s5 + $0x418] sm:$0xff]
    %v278 = vld [vmem:[%s5 + $0x420] sm:$0xff]
    %v279 = vld [vmem:[%s5 + $0x428] sm:$0xff]
    %v280 = vld [vmem:[%s5 + $0x430] sm:$0xff]
    %v281 = vld [vmem:[%s5 + $0x438] sm:$0xff]
    %v282 = vld [vmem:[%s5 + $0x440] sm:$0xff]
    %v283 = vld [vmem:[%s5 + $0x448] sm:$0xff]
    %v284 = vld [vmem:[%s5 + $0x450] sm:$0xff]
    %v285 = vld [vmem:[%s5 + $0x458] sm:$0xff]
    %v286 = vld [vmem:[%s5 + $0x460] sm:$0xff]
    %v287 = vld [vmem:[%s5 + $0x468] sm:$0xff]
    %v288 = vld [vmem:[%s5 + $0x470] sm:$0xff]
    %v289 = vld [vmem:[%s5 + $0x478] sm:$0xff]
    %v290 = vld [vmem:[%s5 + $0x480] sm:$0xff]
    %v291 = vld [vmem:[%s5 + $0x488] sm:$0xff]
    %v292 = vld [vmem:[%s5 + $0x490] sm:$0xff]
    %v293 = vld [vmem:[%s5 + $0x498] sm:$0xff]
    %v294 = vld [vmem:[%s5 + $0x4a0] sm:$0xff]
    %v295 = vld [vmem:[%s5 + $0x4a8] sm:$0xff]
    %v296 = vld [vmem:[%s5 + $0x4b0] sm:$0xff]
    %v297 = vld [vmem:[%s5 + $0x4b8] sm:$0xff]
    %v298 = vld [vmem:[%s5 + $0x4c0] sm:$0xff]
    %v299 = vld [vmem:[%s5 + $0x4c8] sm:$0xff]
    %v300 = vld [vmem:[%s5 + $0x4d0] sm:$0xff]
    %v301 = vld [vmem:[%s5 + $0x4d8] sm:$0xff]
    %v302 = vld [vmem:[%s5 + $0x4e0] sm:$0xff]
    %v303 = vld [vmem:[%s5 + $0x4e8] sm:$0xff]
    %v304 = vld [vmem:[%s5 + $0x4f0] sm:$0xff]
    %v305 = vld [vmem:[%s5 + $0x4f8] sm:$0xff]
    %v306 = vld [vmem:[%s5 + $0x500] sm:$0xff]
    %v307 = vld [vmem:[%s5 + $0x508] sm:$0xff]
    %v308 = vld [vmem:[%s5 + $0x510] sm:$0xff]
    %v309 = vld [vmem:[%s5 + $0x518] sm:$0xff]
    %v310 = vld [vmem:[%s5 + $0x520] sm:$0xff]
    %v311 = vld [vmem:[%s5 + $0x528] sm:$0xff]
    %v312 = vld [vmem:[%s5 + $0x530] sm:$0xff]
    %v313 = vld [vmem:[%s5 + $0x538] sm:$0xff]
    %v314 = vld [vmem:[%s5 + $0x540] sm:$0xff]
    %v315 = vld [vmem:[%s5 + $0x548] sm:$0xff]
    %v316 = vld [vmem:[%s5 + $0x550] sm:$0xff]
    %v317 = vld [vmem:[%s5 + $0x558] sm:$0xff]
    %v318 = vld [vmem:[%s5 + $0x560] sm:$0xff]
    %v319 = vld [vmem:[%s5 + $0x568] sm:$0xff]
    %v320 = vld [vmem:[%s5 + $0x570] sm:$0xff]
    %v321 = vld [vmem:[%s5 + $0x578] sm:$0xff]
    %v322 = vld [vmem:[%s5 + $0x580] sm:$0xff]
    %v323 = vld [vmem:[%s5 + $0x588] sm:$0xff]
    %v324 = vld [vmem:[%s5 + $0x590] sm:$0xff]
    %v325 = vld [vmem:[%s5 + $0x598] sm:$0xff]
    %v326 = vld [vmem:[%s5 + $0x5a0] sm:$0xff]
    %v327 = vld [vmem:[%s5 + $0x5a8] sm:$0xff]
    %v328 = vld [vmem:[%s5 + $0x5b0] sm:$0xff]
    %v329 = vld [vmem:[%s5 + $0x5b8] sm:$0xff]
    %v330 = vld [vmem:[%s5 + $0x5c0] sm:$0xff]
    %v331 = vld [vmem:[%s5 + $0x5c8] sm:$0xff]
    %v332 = vld [vmem:[%s5 + $0x5d0] sm:$0xff]
    %v333 = vld [vmem:[%s5 + $0x5d8] sm:$0xff]
    %v334 = vld [vmem:[%s5 + $0x5e0] sm:$0xff]
    %v335 = vld [vmem:[%s5 + $0x5e8] sm:$0xff]
    %v336 = vld [vmem:[%s5 + $0x5f0] sm:$0xff]
    %v337 = vld [vmem:[%s5 + $0x5f8] sm:$0xff]
    %v338 = vld [vmem:[%s6] sm:$0xff]
    %v339 = vld [vmem:[%s6 + $0x8] sm:$0xf]
    %v342 = vperm.slane %v338, 0
    %v343 = vperm.slane %v338, 1
    %v344 = vperm.slane %v338, 2
    %v345 = vperm.slane %v338, 3
    %v346 = vperm.slane %v338, 4
    %v347 = vperm.slane %v338, 5
    %v348 = vperm.slane %v338, 6
    %v349 = vperm.slane %v338, 7
    %v350 = vperm.slane %v339, 0
    %v351 = vperm.slane %v339, 1
    %v352 = vperm.slane %v339, 2
    %v353 = vperm.slane %v339, 3
    %366 = vmatpush.msra.mxu0 %v326
    %367 = vmatpush.msra.mxu0 %v314
    %368 = vmatpush.msra.mxu0 %v302
    %369 = vmatpush.msra.mxu0 %v290
    %370 = vmatpush.msra.mxu0 %v278
    %371 = vmatpush.msra.mxu0 %v266
    %372 = vmatpush.msra.mxu0 %v254
    %373 = vmatpush.msra.mxu0 %v242
    %374 = vmatpush.msra.mxu0 %v230
    %375 = vmatpush.msra.mxu0 %v218
    %376 = vmatpush.msra.mxu0 %v206
    %377 = vmatpush.msra.mxu0 %v194
    %378 = vmatpush.msra.mxu0 %v182
    %379 = vmatpush.msra.mxu0 %v170
    %380 = vmatpush.msra.mxu0 %v158
    %381 = vmatpush.msra.mxu0 %v146
    %382 = vmatmul.f32.gmra.mxu0 %v144
    %v383 = vpop.f32.mrf.mxu0
    %v384 = vadd.f32 %v342, %v383
    %385 = vmatmul.f32.gmra.mxu0 %v145
    %v386 = vpop.f32.mrf.mxu0
    %v387 = vadd.f32 %v342, %v386
    %388 = vdwg.mxu0
    %389 = vmatpush.msra.mxu0 %v327
    %390 = vmatpush.msra.mxu0 %v315
    %391 = vmatpush.msra.mxu0 %v303
    %392 = vmatpush.msra.mxu0 %v291
    %393 = vmatpush.msra.mxu0 %v279
    %394 = vmatpush.msra.mxu0 %v267
    %395 = vmatpush.msra.mxu0 %v255
    %396 = vmatpush.msra.mxu0 %v243
    %397 = vmatpush.msra.mxu0 %v231
    %398 = vmatpush.msra.mxu0 %v219
    %399 = vmatpush.msra.mxu0 %v207
    %400 = vmatpush.msra.mxu0 %v195
    %401 = vmatpush.msra.mxu0 %v183
    %402 = vmatpush.msra.mxu0 %v171
    %403 = vmatpush.msra.mxu0 %v159
    %404 = vmatpush.msra.mxu0 %v147
    %405 = vmatmul.f32.gmra.mxu0 %v144
    %v406 = vpop.f32.mrf.mxu0
    %v407 = vadd.f32 %v343, %v406
    %408 = vmatmul.f32.gmra.mxu0 %v145
    %v409 = vpop.f32.mrf.mxu0
    %v410 = vadd.f32 %v343, %v409
    %411 = vdwg.mxu0
    %412 = vmatpush.msra.mxu0 %v328
    %413 = vmatpush.msra.mxu0 %v316
    %414 = vmatpush.msra.mxu0 %v304
    %415 = vmatpush.msra.mxu0 %v292
    %416 = vmatpush.msra.mxu0 %v280
    %417 = vmatpush.msra.mxu0 %v268
    %418 = vmatpush.msra.mxu0 %v256
    %419 = vmatpush.msra.mxu0 %v244
    %420 = vmatpush.msra.mxu0 %v232
    %421 = vmatpush.msra.mxu0 %v220
    %422 = vmatpush.msra.mxu0 %v208
    %423 = vmatpush.msra.mxu0 %v196
    %424 = vmatpush.msra.mxu0 %v184
    %425 = vmatpush.msra.mxu0 %v172
    %426 = vmatpush.msra.mxu0 %v160
    %427 = vmatpush.msra.mxu0 %v148
    %428 = vmatmul.f32.gmra.mxu0 %v144
    %v429 = vpop.f32.mrf.mxu0
    %v430 = vadd.f32 %v344, %v429
    %431 = vmatmul.f32.gmra.mxu0 %v145
    %v432 = vpop.f32.mrf.mxu0
    %v433 = vadd.f32 %v344, %v432
    %434 = vdwg.mxu0
    %435 = vmatpush.msra.mxu0 %v329
    %436 = vmatpush.msra.mxu0 %v317
    %437 = vmatpush.msra.mxu0 %v305
    %438 = vmatpush.msra.mxu0 %v293
    %439 = vmatpush.msra.mxu0 %v281
    %440 = vmatpush.msra.mxu0 %v269
    %441 = vmatpush.msra.mxu0 %v257
    %442 = vmatpush.msra.mxu0 %v245
    %443 = vmatpush.msra.mxu0 %v233
    %444 = vmatpush.msra.mxu0 %v221
    %445 = vmatpush.msra.mxu0 %v209
    %446 = vmatpush.msra.mxu0 %v197
    %447 = vmatpush.msra.mxu0 %v185
    %448 = vmatpush.msra.mxu0 %v173
    %449 = vmatpush.msra.mxu0 %v161
    %450 = vmatpush.msra.mxu0 %v149
    %451 = vmatmul.f32.gmra.mxu0 %v144
    %v452 = vpop.f32.mrf.mxu0
    %v453 = vadd.f32 %v345, %v452
    %454 = vmatmul.f32.gmra.mxu0 %v145
    %v455 = vpop.f32.mrf.mxu0
    %v456 = vadd.f32 %v345, %v455
    %457 = vdwg.mxu0
    %458 = vmatpush.msra.mxu0 %v330
    %459 = vmatpush.msra.mxu0 %v318
    %460 = vmatpush.msra.mxu0 %v306
    %461 = vmatpush.msra.mxu0 %v294
    %462 = vmatpush.msra.mxu0 %v282
    %463 = vmatpush.msra.mxu0 %v270
    %464 = vmatpush.msra.mxu0 %v258
    %465 = vmatpush.msra.mxu0 %v246
    %466 = vmatpush.msra.mxu0 %v234
    %467 = vmatpush.msra.mxu0 %v222
    %468 = vmatpush.msra.mxu0 %v210
    %469 = vmatpush.msra.mxu0 %v198
    %470 = vmatpush.msra.mxu0 %v186
    %471 = vmatpush.msra.mxu0 %v174
    %472 = vmatpush.msra.mxu0 %v162
    %473 = vmatpush.msra.mxu0 %v150
    %474 = vmatmul.f32.gmra.mxu0 %v144
    %v475 = vpop.f32.mrf.mxu0
    %v476 = vadd.f32 %v346, %v475
    %477 = vmatmul.f32.gmra.mxu0 %v145
    %v478 = vpop.f32.mrf.mxu0
    %v479 = vadd.f32 %v346, %v478
    %480 = vdwg.mxu0
    %481 = vmatpush.msra.mxu0 %v331
    %482 = vmatpush.msra.mxu0 %v319
    %483 = vmatpush.msra.mxu0 %v307
    %484 = vmatpush.msra.mxu0 %v295
    %485 = vmatpush.msra.mxu0 %v283
    %486 = vmatpush.msra.mxu0 %v271
    %487 = vmatpush.msra.mxu0 %v259
    %488 = vmatpush.msra.mxu0 %v247
    %489 = vmatpush.msra.mxu0 %v235
    %490 = vmatpush.msra.mxu0 %v223
    %491 = vmatpush.msra.mxu0 %v211
    %492 = vmatpush.msra.mxu0 %v199
    %493 = vmatpush.msra.mxu0 %v187
    %494 = vmatpush.msra.mxu0 %v175
    %495 = vmatpush.msra.mxu0 %v163
    %496 = vmatpush.msra.mxu0 %v151
    %497 = vmatmul.f32.gmra.mxu0 %v144
    %v498 = vpop.f32.mrf.mxu0
    %v499 = vadd.f32 %v347, %v498
    %500 = vmatmul.f32.gmra.mxu0 %v145
    %v501 = vpop.f32.mrf.mxu0
    %v502 = vadd.f32 %v347, %v501
    %503 = vdwg.mxu0
    %504 = vmatpush.msra.mxu0 %v332
    %505 = vmatpush.msra.mxu0 %v320
    %506 = vmatpush.msra.mxu0 %v308
    %507 = vmatpush.msra.mxu0 %v296
    %508 = vmatpush.msra.mxu0 %v284
    %509 = vmatpush.msra.mxu0 %v272
    %510 = vmatpush.msra.mxu0 %v260
    %511 = vmatpush.msra.mxu0 %v248
    %512 = vmatpush.msra.mxu0 %v236
    %513 = vmatpush.msra.mxu0 %v224
    %514 = vmatpush.msra.mxu0 %v212
    %515 = vmatpush.msra.mxu0 %v200
    %516 = vmatpush.msra.mxu0 %v188
    %517 = vmatpush.msra.mxu0 %v176
    %518 = vmatpush.msra.mxu0 %v164
    %519 = vmatpush.msra.mxu0 %v152
    %520 = vmatmul.f32.gmra.mxu0 %v144
    %v521 = vpop.f32.mrf.mxu0
    %v522 = vadd.f32 %v348, %v521
    %523 = vmatmul.f32.gmra.mxu0 %v145
    %v524 = vpop.f32.mrf.mxu0
    %v525 = vadd.f32 %v348, %v524
    %526 = vdwg.mxu0
    %527 = vmatpush.msra.mxu0 %v333
    %528 = vmatpush.msra.mxu0 %v321
    %529 = vmatpush.msra.mxu0 %v309
    %530 = vmatpush.msra.mxu0 %v297
    %531 = vmatpush.msra.mxu0 %v285
    %532 = vmatpush.msra.mxu0 %v273
    %533 = vmatpush.msra.mxu0 %v261
    %534 = vmatpush.msra.mxu0 %v249
    %535 = vmatpush.msra.mxu0 %v237
    %536 = vmatpush.msra.mxu0 %v225
    %537 = vmatpush.msra.mxu0 %v213
    %538 = vmatpush.msra.mxu0 %v201
    %539 = vmatpush.msra.mxu0 %v189
    %540 = vmatpush.msra.mxu0 %v177
    %541 = vmatpush.msra.mxu0 %v165
    %542 = vmatpush.msra.mxu0 %v153
    %543 = vmatmul.f32.gmra.mxu0 %v144
    %v544 = vpop.f32.mrf.mxu0
    %v545 = vadd.f32 %v349, %v544
    %546 = vmatmul.f32.gmra.mxu0 %v145
    %v547 = vpop.f32.mrf.mxu0
    %v548 = vadd.f32 %v349, %v547
    %549 = vdwg.mxu0
    %550 = vmatpush.msra.mxu0 %v334
    %551 = vmatpush.msra.mxu0 %v322
    %552 = vmatpush.msra.mxu0 %v310
    %553 = vmatpush.msra.mxu0 %v298
    %554 = vmatpush.msra.mxu0 %v286
    %555 = vmatpush.msra.mxu0 %v274
    %556 = vmatpush.msra.mxu0 %v262
    %557 = vmatpush.msra.mxu0 %v250
    %558 = vmatpush.msra.mxu0 %v238
    %559 = vmatpush.msra.mxu0 %v226
    %560 = vmatpush.msra.mxu0 %v214
    %561 = vmatpush.msra.mxu0 %v202
    %562 = vmatpush.msra.mxu0 %v190
    %563 = vmatpush.msra.mxu0 %v178
    %564 = vmatpush.msra.mxu0 %v166
    %565 = vmatpush.msra.mxu0 %v154
    %566 = vmatmul.f32.gmra.mxu0 %v144
    %v567 = vpop.f32.mrf.mxu0
    %v568 = vadd.f32 %v350, %v567
    %569 = vmatmul.f32.gmra.mxu0 %v145
    %v570 = vpop.f32.mrf.mxu0
    %v571 = vadd.f32 %v350, %v570
    %572 = vdwg.mxu0
    %573 = vmatpush.msra.mxu0 %v335
    %574 = vmatpush.msra.mxu0 %v323
    %575 = vmatpush.msra.mxu0 %v311
    %576 = vmatpush.msra.mxu0 %v299
    %577 = vmatpush.msra.mxu0 %v287
    %578 = vmatpush.msra.mxu0 %v275
    %579 = vmatpush.msra.mxu0 %v263
    %580 = vmatpush.msra.mxu0 %v251
    %581 = vmatpush.msra.mxu0 %v239
    %582 = vmatpush.msra.mxu0 %v227
    %583 = vmatpush.msra.mxu0 %v215
    %584 = vmatpush.msra.mxu0 %v203
    %585 = vmatpush.msra.mxu0 %v191
    %586 = vmatpush.msra.mxu0 %v179
    %587 = vmatpush.msra.mxu0 %v167
    %588 = vmatpush.msra.mxu0 %v155
    %589 = vmatmul.f32.gmra.mxu0 %v144
    %v590 = vpop.f32.mrf.mxu0
    %v591 = vadd.f32 %v351, %v590
    %592 = vmatmul.f32.gmra.mxu0 %v145
    %v593 = vpop.f32.mrf.mxu0
    %v594 = vadd.f32 %v351, %v593
    %595 = vdwg.mxu0
    %596 = vmatpush.msra.mxu0 %v336
    %597 = vmatpush.msra.mxu0 %v324
    %598 = vmatpush.msra.mxu0 %v312
    %599 = vmatpush.msra.mxu0 %v300
    %600 = vmatpush.msra.mxu0 %v288
    %601 = vmatpush.msra.mxu0 %v276
    %602 = vmatpush.msra.mxu0 %v264
    %603 = vmatpush.msra.mxu0 %v252
    %604 = vmatpush.msra.mxu0 %v240
    %605 = vmatpush.msra.mxu0 %v228
    %606 = vmatpush.msra.mxu0 %v216
    %607 = vmatpush.msra.mxu0 %v204
    %608 = vmatpush.msra.mxu0 %v192
    %609 = vmatpush.msra.mxu0 %v180
    %610 = vmatpush.msra.mxu0 %v168
    %611 = vmatpush.msra.mxu0 %v156
    %612 = vmatmul.f32.gmra.mxu0 %v144
    %v613 = vpop.f32.mrf.mxu0
    %v614 = vadd.f32 %v352, %v613
    %615 = vmatmul.f32.gmra.mxu0 %v145
    %v616 = vpop.f32.mrf.mxu0
    %v617 = vadd.f32 %v352, %v616
    %618 = vdwg.mxu0
    %619 = vmatpush.msra.mxu0 %v337
    %620 = vmatpush.msra.mxu0 %v325
    %621 = vmatpush.msra.mxu0 %v313
    %622 = vmatpush.msra.mxu0 %v301
    %623 = vmatpush.msra.mxu0 %v289
    %624 = vmatpush.msra.mxu0 %v277
    %625 = vmatpush.msra.mxu0 %v265
    %626 = vmatpush.msra.mxu0 %v253
    %627 = vmatpush.msra.mxu0 %v241
    %628 = vmatpush.msra.mxu0 %v229
    %629 = vmatpush.msra.mxu0 %v217
    %630 = vmatpush.msra.mxu0 %v205
    %631 = vmatpush.msra.mxu0 %v193
    %632 = vmatpush.msra.mxu0 %v181
    %633 = vmatpush.msra.mxu0 %v169
    %634 = vmatpush.msra.mxu0 %v157
    %635 = vmatmul.f32.gmra.mxu0 %v144
    %v636 = vpop.f32.mrf.mxu0
    %v637 = vadd.f32 %v353, %v636
    %638 = vmatmul.f32.gmra.mxu0 %v145
    %v639 = vpop.f32.mrf.mxu0
    %v640 = vadd.f32 %v353, %v639
    %641 = vdwg.mxu0
    %v642 = vrot.slane %v384, 4
    %v643 = vadd.f32 %v384, %v642
    %v644 = vrot.slane %v643, 2
    %v645 = vadd.f32 %v643, %v644
    %v646 = vrot.slane %v645, 1
    %v647 = vadd.f32 %v645, %v646
    %v648 = vrot.slane %v387, 4
    %v649 = vadd.f32 %v387, %v648
    %v650 = vrot.slane %v649, 2
    %v651 = vadd.f32 %v649, %v650
    %v652 = vrot.slane %v651, 1
    %v653 = vadd.f32 %v651, %v652
    %v654 = vrcp.pop 8.0
    %v655 = vmul.f32 8.0, %v654
    %v656 = vsub.f32 1.0, %v655
    %v657 = vmul.f32 %v654, %v656
    %v658 = vadd.f32 %v654, %v657
    %vm659 = vweird.f32 %v654
    %v660 = vsel %vm659, %v654, %v658
    %v661 = vmul.f32 %v647, %v660
    %v662 = vmul.f32 %v653, %v660
    %v663 = vld [vmem:[%s7] sm:$0xff]
    %v664 = vld [vmem:[%s7 + $0x8] sm:$0xff]
    %v665 = vld [vmem:[%s7 + $0x10] sm:$0xff]
    %v666 = vld [vmem:[%s7 + $0x18] sm:$0xff]
    %v667 = vld [vmem:[%s7 + $0x20] sm:$0xff]
    %v668 = vld [vmem:[%s7 + $0x28] sm:$0xff]
    %v669 = vld [vmem:[%s7 + $0x30] sm:$0xff]
    %v670 = vld [vmem:[%s7 + $0x38] sm:$0xff]
    %v671 = vld [vmem:[%s7 + $0x40] sm:$0xff]
    %v672 = vld [vmem:[%s7 + $0x48] sm:$0xff]
    %v673 = vld [vmem:[%s7 + $0x50] sm:$0xff]
    %v674 = vld [vmem:[%s7 + $0x58] sm:$0xff]
    %v675 = vld [vmem:[%s7 + $0x60] sm:$0xff]
    %v676 = vld [vmem:[%s7 + $0x68] sm:$0xff]
    %v677 = vld [vmem:[%s7 + $0x70] sm:$0xff]
    %v678 = vld [vmem:[%s7 + $0x78] sm:$0xff]
    %v679 = vld [vmem:[%s7 + $0x80] sm:$0xff]
    %v680 = vld [vmem:[%s7 + $0x88] sm:$0xff]
    %v681 = vld [vmem:[%s7 + $0x90] sm:$0xff]
    %v682 = vld [vmem:[%s7 + $0x98] sm:$0xff]
    %v683 = vld [vmem:[%s7 + $0xa0] sm:$0xff]
    %v684 = vld [vmem:[%s7 + $0xa8] sm:$0xff]
    %v685 = vld [vmem:[%s7 + $0xb0] sm:$0xff]
    %v686 = vld [vmem:[%s7 + $0xb8] sm:$0xff]
    %v687 = vld [vmem:[%s7 + $0xc0] sm:$0xff]
    %v688 = vld [vmem:[%s7 + $0xc8] sm:$0xff]
    %v689 = vld [vmem:[%s7 + $0xd0] sm:$0xff]
    %v690 = vld [vmem:[%s7 + $0xd8] sm:$0xff]
    %v691 = vld [vmem:[%s7 + $0xe0] sm:$0xff]
    %v692 = vld [vmem:[%s7 + $0xe8] sm:$0xff]
    %v693 = vld [vmem:[%s7 + $0xf0] sm:$0xff]
    %v694 = vld [vmem:[%s7 + $0xf8] sm:$0xff]
    %v695 = vld [vmem:[%s7 + $0x100] sm:$0xff]
    %v696 = vld [vmem:[%s7 + $0x108] sm:$0xff]
    %v697 = vld [vmem:[%s7 + $0x110] sm:$0xff]
    %v698 = vld [vmem:[%s7 + $0x118] sm:$0xff]
    %v699 = vld [vmem:[%s7 + $0x120] sm:$0xff]
    %v700 = vld [vmem:[%s7 + $0x128] sm:$0xff]
    %v701 = vld [vmem:[%s7 + $0x130] sm:$0xff]
    %v702 = vld [vmem:[%s7 + $0x138] sm:$0xff]
    %v703 = vld [vmem:[%s7 + $0x140] sm:$0xff]
    %v704 = vld [vmem:[%s7 + $0x148] sm:$0xff]
    %v705 = vld [vmem:[%s7 + $0x150] sm:$0xff]
    %v706 = vld [vmem:[%s7 + $0x158] sm:$0xff]
    %v707 = vld [vmem:[%s7 + $0x160] sm:$0xff]
    %v708 = vld [vmem:[%s7 + $0x168] sm:$0xff]
    %v709 = vld [vmem:[%s7 + $0x170] sm:$0xff]
    %v710 = vld [vmem:[%s7 + $0x178] sm:$0xff]
    %v711 = vld [vmem:[%s7 + $0x180] sm:$0xff]
    %v712 = vld [vmem:[%s7 + $0x188] sm:$0xff]
    %v713 = vld [vmem:[%s7 + $0x190] sm:$0xff]
    %v714 = vld [vmem:[%s7 + $0x198] sm:$0xff]
    %v715 = vld [vmem:[%s7 + $0x1a0] sm:$0xff]
    %v716 = vld [vmem:[%s7 + $0x1a8] sm:$0xff]
    %v717 = vld [vmem:[%s7 + $0x1b0] sm:$0xff]
    %v718 = vld [vmem:[%s7 + $0x1b8] sm:$0xff]
    %v719 = vld [vmem:[%s7 + $0x1c0] sm:$0xff]
    %v720 = vld [vmem:[%s7 + $0x1c8] sm:$0xff]
    %v721 = vld [vmem:[%s7 + $0x1d0] sm:$0xff]
    %v722 = vld [vmem:[%s7 + $0x1d8] sm:$0xff]
    %v723 = vld [vmem:[%s7 + $0x1e0] sm:$0xff]
    %v724 = vld [vmem:[%s7 + $0x1e8] sm:$0xff]
    %v725 = vld [vmem:[%s7 + $0x1f0] sm:$0xff]
    %v726 = vld [vmem:[%s7 + $0x1f8] sm:$0xff]
    %v727 = vld [vmem:[%s8] sm:$0xff]
    %v728 = vld [vmem:[%s8 + $0x8] sm:$0xff]
    %v729 = vld [vmem:[%s8 + $0x10] sm:$0xff]
    %v730 = vld [vmem:[%s8 + $0x18] sm:$0xff]
    %v731 = vld [vmem:[%s8 + $0x20] sm:$0xff]
    %v732 = vld [vmem:[%s8 + $0x28] sm:$0xff]
    %v733 = vld [vmem:[%s8 + $0x30] sm:$0xff]
    %v734 = vld [vmem:[%s8 + $0x38] sm:$0xff]
    %v735 = vld [vmem:[%s8 + $0x40] sm:$0xff]
    %v736 = vld [vmem:[%s8 + $0x48] sm:$0xff]
    %v737 = vld [vmem:[%s8 + $0x50] sm:$0xff]
    %v738 = vld [vmem:[%s8 + $0x58] sm:$0xff]
    %v739 = vld [vmem:[%s8 + $0x60] sm:$0xff]
    %v740 = vld [vmem:[%s8 + $0x68] sm:$0xff]
    %v741 = vld [vmem:[%s8 + $0x70] sm:$0xff]
    %v742 = vld [vmem:[%s8 + $0x78] sm:$0xff]
    %v743 = vld [vmem:[%s8 + $0x80] sm:$0xff]
    %v744 = vld [vmem:[%s8 + $0x88] sm:$0xff]
    %v745 = vld [vmem:[%s8 + $0x90] sm:$0xff]
    %v746 = vld [vmem:[%s8 + $0x98] sm:$0xff]
    %v747 = vld [vmem:[%s8 + $0xa0] sm:$0xff]
    %v748 = vld [vmem:[%s8 + $0xa8] sm:$0xff]
    %v749 = vld [vmem:[%s8 + $0xb0] sm:$0xff]
    %v750 = vld [vmem:[%s8 + $0xb8] sm:$0xff]
    %v751 = vld [vmem:[%s8 + $0xc0] sm:$0xff]
    %v752 = vld [vmem:[%s8 + $0xc8] sm:$0xff]
    %v753 = vld [vmem:[%s8 + $0xd0] sm:$0xff]
    %v754 = vld [vmem:[%s8 + $0xd8] sm:$0xff]
    %v755 = vld [vmem:[%s8 + $0xe0] sm:$0xff]
    %v756 = vld [vmem:[%s8 + $0xe8] sm:$0xff]
    %v757 = vld [vmem:[%s8 + $0xf0] sm:$0xff]
    %v758 = vld [vmem:[%s8 + $0xf8] sm:$0xff]
    %v759 = vld [vmem:[%s8 + $0x100] sm:$0xff]
    %v760 = vld [vmem:[%s8 + $0x108] sm:$0xff]
    %v761 = vld [vmem:[%s8 + $0x110] sm:$0xff]
    %v762 = vld [vmem:[%s8 + $0x118] sm:$0xff]
    %v763 = vld [vmem:[%s8 + $0x120] sm:$0xff]
    %v764 = vld [vmem:[%s8 + $0x128] sm:$0xff]
    %v765 = vld [vmem:[%s8 + $0x130] sm:$0xff]
    %v766 = vld [vmem:[%s8 + $0x138] sm:$0xff]
    %v767 = vld [vmem:[%s8 + $0x140] sm:$0xff]
    %v768 = vld [vmem:[%s8 + $0x148] sm:$0xff]
    %v769 = vld [vmem:[%s8 + $0x150] sm:$0xff]
    %v770 = vld [vmem:[%s8 + $0x158] sm:$0xff]
    %v771 = vld [vmem:[%s8 + $0x160] sm:$0xff]
    %v772 = vld [vmem:[%s8 + $0x168] sm:$0xff]
    %v773 = vld [vmem:[%s8 + $0x170] sm:$0xff]
    %v774 = vld [vmem:[%s8 + $0x178] sm:$0xff]
    %v775 = vld [vmem:[%s8 + $0x180] sm:$0xff]
    %v776 = vld [vmem:[%s8 + $0x188] sm:$0xff]
    %v777 = vld [vmem:[%s8 + $0x190] sm:$0xff]
    %v778 = vld [vmem:[%s8 + $0x198] sm:$0xff]
    %v779 = vld [vmem:[%s8 + $0x1a0] sm:$0xff]
    %v780 = vld [vmem:[%s8 + $0x1a8] sm:$0xff]
    %v781 = vld [vmem:[%s8 + $0x1b0] sm:$0xff]
    %v782 = vld [vmem:[%s8 + $0x1b8] sm:$0xff]
    %v783 = vld [vmem:[%s8 + $0x1c0] sm:$0xff]
    %v784 = vld [vmem:[%s8 + $0x1c8] sm:$0xff]
    %v785 = vld [vmem:[%s8 + $0x1d0] sm:$0xff]
    %v786 = vld [vmem:[%s8 + $0x1d8] sm:$0xff]
    %v787 = vld [vmem:[%s8 + $0x1e0] sm:$0xff]
    %v788 = vld [vmem:[%s8 + $0x1e8] sm:$0xff]
    %v789 = vld [vmem:[%s8 + $0x1f0] sm:$0xff]
    %v790 = vld [vmem:[%s8 + $0x1f8] sm:$0xff]
    %791 = vmatpush.msra.mxu0 %v723
    %792 = vmatpush.msra.mxu0 %v719
    %793 = vmatpush.msra.mxu0 %v715
    %794 = vmatpush.msra.mxu0 %v711
    %795 = vmatpush.msra.mxu0 %v707
    %796 = vmatpush.msra.mxu0 %v703
    %797 = vmatpush.msra.mxu0 %v699
    %798 = vmatpush.msra.mxu0 %v695
    %799 = vmatpush.msra.mxu0 %v691
    %800 = vmatpush.msra.mxu0 %v687
    %801 = vmatpush.msra.mxu0 %v683
    %802 = vmatpush.msra.mxu0 %v679
    %803 = vmatpush.msra.mxu0 %v675
    %804 = vmatpush.msra.mxu0 %v671
    %805 = vmatpush.msra.mxu0 %v667
    %806 = vmatpush.msra.mxu0 %v663
    %807 = vmatmul.f32.gmra.mxu0 0.0
    %v808 = vpop.f32.mrf.mxu0
    %v809 = vadd.f32 0.0, %v808
    %810 = vdwg.mxu0
    %811 = vmatpush.msra.mxu0 %v724
    %812 = vmatpush.msra.mxu0 %v720
    %813 = vmatpush.msra.mxu0 %v716
    %814 = vmatpush.msra.mxu0 %v712
    %815 = vmatpush.msra.mxu0 %v708
    %816 = vmatpush.msra.mxu0 %v704
    %817 = vmatpush.msra.mxu0 %v700
    %818 = vmatpush.msra.mxu0 %v696
    %819 = vmatpush.msra.mxu0 %v692
    %820 = vmatpush.msra.mxu0 %v688
    %821 = vmatpush.msra.mxu0 %v684
    %822 = vmatpush.msra.mxu0 %v680
    %823 = vmatpush.msra.mxu0 %v676
    %824 = vmatpush.msra.mxu0 %v672
    %825 = vmatpush.msra.mxu0 %v668
    %826 = vmatpush.msra.mxu0 %v664
    %827 = vmatmul.f32.gmra.mxu0 0.0
    %v828 = vpop.f32.mrf.mxu0
    %v829 = vadd.f32 0.0, %v828
    %830 = vdwg.mxu0
    %831 = vmatpush.msra.mxu0 %v725
    %832 = vmatpush.msra.mxu0 %v721
    %833 = vmatpush.msra.mxu0 %v717
    %834 = vmatpush.msra.mxu0 %v713
    %835 = vmatpush.msra.mxu0 %v709
    %836 = vmatpush.msra.mxu0 %v705
    %837 = vmatpush.msra.mxu0 %v701
    %838 = vmatpush.msra.mxu0 %v697
    %839 = vmatpush.msra.mxu0 %v693
    %840 = vmatpush.msra.mxu0 %v689
    %841 = vmatpush.msra.mxu0 %v685
    %842 = vmatpush.msra.mxu0 %v681
    %843 = vmatpush.msra.mxu0 %v677
    %844 = vmatpush.msra.mxu0 %v673
    %845 = vmatpush.msra.mxu0 %v669
    %846 = vmatpush.msra.mxu0 %v665
    %847 = vmatmul.f32.gmra.mxu0 0.0
    %v848 = vpop.f32.mrf.mxu0
    %v849 = vadd.f32 0.0, %v848
    %850 = vdwg.mxu0
    %851 = vmatpush.msra.mxu0 %v726
    %852 = vmatpush.msra.mxu0 %v722
    %853 = vmatpush.msra.mxu0 %v718
    %854 = vmatpush.msra.mxu0 %v714
    %855 = vmatpush.msra.mxu0 %v710
    %856 = vmatpush.msra.mxu0 %v706
    %857 = vmatpush.msra.mxu0 %v702
    %858 = vmatpush.msra.mxu0 %v698
    %859 = vmatpush.msra.mxu0 %v694
    %860 = vmatpush.msra.mxu0 %v690
    %861 = vmatpush.msra.mxu0 %v686
    %862 = vmatpush.msra.mxu0 %v682
    %863 = vmatpush.msra.mxu0 %v678
    %864 = vmatpush.msra.mxu0 %v674
    %865 = vmatpush.msra.mxu0 %v670
    %866 = vmatpush.msra.mxu0 %v666
    %867 = vmatmul.f32.gmra.mxu0 0.0
    %v868 = vpop.f32.mrf.mxu0
    %v869 = vadd.f32 0.0, %v868
    %870 = vdwg.mxu0
    %871 = vmatpush.msra.mxu0 %v787
    %872 = vmatpush.msra.mxu0 %v783
    %873 = vmatpush.msra.mxu0 %v779
    %874 = vmatpush.msra.mxu0 %v775
    %875 = vmatpush.msra.mxu0 %v771
    %876 = vmatpush.msra.mxu0 %v767
    %877 = vmatpush.msra.mxu0 %v763
    %878 = vmatpush.msra.mxu0 %v759
    %879 = vmatpush.msra.mxu0 %v755
    %880 = vmatpush.msra.mxu0 %v751
    %881 = vmatpush.msra.mxu0 %v747
    %882 = vmatpush.msra.mxu0 %v743
    %883 = vmatpush.msra.mxu0 %v739
    %884 = vmatpush.msra.mxu0 %v735
    %885 = vmatpush.msra.mxu0 %v731
    %886 = vmatpush.msra.mxu0 %v727
    %887 = vmatmul.f32.gmra.mxu0 0.0
    %v888 = vpop.f32.mrf.mxu0
    %v889 = vadd.f32 0.0, %v888
    %890 = vdwg.mxu0
    %891 = vmatpush.msra.mxu0 %v788
    %892 = vmatpush.msra.mxu0 %v784
    %893 = vmatpush.msra.mxu0 %v780
    %894 = vmatpush.msra.mxu0 %v776
    %895 = vmatpush.msra.mxu0 %v772
    %896 = vmatpush.msra.mxu0 %v768
    %897 = vmatpush.msra.mxu0 %v764
    %898 = vmatpush.msra.mxu0 %v760
    %899 = vmatpush.msra.mxu0 %v756
    %900 = vmatpush.msra.mxu0 %v752
    %901 = vmatpush.msra.mxu0 %v748
    %902 = vmatpush.msra.mxu0 %v744
    %903 = vmatpush.msra.mxu0 %v740
    %904 = vmatpush.msra.mxu0 %v736
    %905 = vmatpush.msra.mxu0 %v732
    %906 = vmatpush.msra.mxu0 %v728
    %907 = vmatmul.f32.gmra.mxu0 0.0
    %v908 = vpop.f32.mrf.mxu0
    %v909 = vadd.f32 0.0, %v908
    %910 = vdwg.mxu0
    %911 = vmatpush.msra.mxu0 %v789
    %912 = vmatpush.msra.mxu0 %v785
    %913 = vmatpush.msra.mxu0 %v781
    %914 = vmatpush.msra.mxu0 %v777
    %915 = vmatpush.msra.mxu0 %v773
    %916 = vmatpush.msra.mxu0 %v769
    %917 = vmatpush.msra.mxu0 %v765
    %918 = vmatpush.msra.mxu0 %v761
    %919 = vmatpush.msra.mxu0 %v757
    %920 = vmatpush.msra.mxu0 %v753
    %921 = vmatpush.msra.mxu0 %v749
    %922 = vmatpush.msra.mxu0 %v745
    %923 = vmatpush.msra.mxu0 %v741
    %924 = vmatpush.msra.mxu0 %v737
    %925 = vmatpush.msra.mxu0 %v733
    %926 = vmatpush.msra.mxu0 %v729
    %927 = vmatmul.f32.gmra.mxu0 0.0
    %v928 = vpop.f32.mrf.mxu0
    %v929 = vadd.f32 0.0, %v928
    %930 = vdwg.mxu0
    %931 = vmatpush.msra.mxu0 %v790
    %932 = vmatpush.msra.mxu0 %v786
    %933 = vmatpush.msra.mxu0 %v782
    %934 = vmatpush.msra.mxu0 %v778
    %935 = vmatpush.msra.mxu0 %v774
    %936 = vmatpush.msra.mxu0 %v770
    %937 = vmatpush.msra.mxu0 %v766
    %938 = vmatpush.msra.mxu0 %v762
    %939 = vmatpush.msra.mxu0 %v758
    %940 = vmatpush.msra.mxu0 %v754
    %941 = vmatpush.msra.mxu0 %v750
    %942 = vmatpush.msra.mxu0 %v746
    %943 = vmatpush.msra.mxu0 %v742
    %944 = vmatpush.msra.mxu0 %v738
    %945 = vmatpush.msra.mxu0 %v734
    %946 = vmatpush.msra.mxu0 %v730
    %947 = vmatmul.f32.gmra.mxu0 0.0
    %v948 = vpop.f32.mrf.mxu0
    %v949 = vadd.f32 0.0, %v948
    %950 = vdwg.mxu0
    %v955 = vrot.slane %v809, 1
    %v956 = vrot.slane %v829, 1
    %v957 = vrot.slane %v849, 1
    %v958 = vrot.slane %v869, 1
    %v967 = vadd.f32 %v407, %v809
    %v968 = vadd.f32 %v430, %v829
    %v969 = vadd.f32 %v453, %v849
    %v970 = vadd.f32 %v476, %v869
    %v971 = vadd.f32 %v410, %v955
    %v972 = vadd.f32 %v433, %v956
    %v973 = vadd.f32 %v456, %v957
    %v974 = vadd.f32 %v479, %v958
    %v979 = vrot.slane %v889, 1
    %v980 = vrot.slane %v909, 1
    %v981 = vrot.slane %v929, 1
    %v982 = vrot.slane %v949, 1
    %v983 = vrot.slane %v889, 2
    %v984 = vrot.slane %v909, 2
    %v985 = vrot.slane %v929, 2
    %v986 = vrot.slane %v949, 2
    %v995 = vadd.f32 %v499, %v979
    %v996 = vadd.f32 %v522, %v980
    %v997 = vadd.f32 %v545, %v981
    %v998 = vadd.f32 %v568, %v982
    %v999 = vadd.f32 %v502, %v983
    %v1000 = vadd.f32 %v525, %v984
    %v1001 = vadd.f32 %v548, %v985
    %v1002 = vadd.f32 %v571, %v986
    %v1011 = vrot.slane %v971, 7
    %vm1012 = vcmask 1041409
    %v1013 = vsel %vm1012, %v1011, %v967
    %v1014 = vrot.slane %v972, 7
    %v1015 = vsel %vm1012, %v1014, %v968
    %v1016 = vrot.slane %v973, 7
    %v1017 = vsel %vm1012, %v1016, %v969
    %v1018 = vrot.slane %v974, 7
    %v1019 = vsel %vm1012, %v1018, %v970
    %v1032 = vrot.slane %v995, 5
    %v1033 = vrot.slane %v999, 4
    %vm1034 = vcmask 1043459
    %v1035 = vsel %vm1034, %v1033, %v1032
    %v1036 = vrot.slane %v996, 5
    %v1037 = vrot.slane %v1000, 4
    %v1038 = vsel %vm1034, %v1037, %v1036
    %v1039 = vrot.slane %v997, 5
    %v1040 = vrot.slane %v1001, 4
    %v1041 = vsel %vm1034, %v1040, %v1039
    %v1042 = vrot.slane %v998, 5
    %v1043 = vrot.slane %v1002, 4
    %v1044 = vsel %vm1034, %v1043, %v1042
    %vm1049 = vcmask 1041408
    %v1050 = vsel %vm1049, %v1013, %v1035
    %v1051 = vsel %vm1049, %v1015, %v1038
    %v1052 = vsel %vm1049, %v1017, %v1041
    %v1053 = vsel %vm1049, %v1019, %v1044
    %v1054 = vxor.u32 %v1050, 2147483648
    %v1055 = vmul.f32 %v1054, 1.442695
    %v1056 = vpow.pop %v1055
    %v1057 = vadd.f32 %v1056, 1.0
    %v1058 = vrcp.pop %v1057
    %v1059 = vmul.f32 %v1057, %v1058
    %v1060 = vsub.f32 1.0, %v1059
    %v1061 = vmul.f32 %v1058, %v1060
    %v1062 = vadd.f32 %v1058, %v1061
    %vm1063 = vweird.f32 %v1057
    %vm1064 = vweird.f32 %v1058
    %vm1065 = vmor %vm1063, %vm1064
    %v1066 = vsel %vm1065, %v1058, %v1062
    %v1067 = vand.u32 2147483647, %v1057
    %vm1068 = vcmp.eq.f32.partialorder %v1067, 8.507059e+37
    %v1069 = vand.u32 %v1057, 2147483648
    %v1070 = vor.u32 1.1754944e-38, %v1069
    %v1071 = vsel %vm1068, %v1070, %v1066
    %v1072 = vmul.f32 1.0, %v1071
    %v1073 = vxor.u32 %v1051, 2147483648
    %v1074 = vmul.f32 %v1073, 1.442695
    %v1075 = vpow.pop %v1074
    %v1076 = vadd.f32 %v1075, 1.0
    %v1077 = vrcp.pop %v1076
    %v1078 = vmul.f32 %v1076, %v1077
    %v1079 = vsub.f32 1.0, %v1078
    %v1080 = vmul.f32 %v1077, %v1079
    %v1081 = vadd.f32 %v1077, %v1080
    %vm1082 = vweird.f32 %v1076
    %vm1083 = vweird.f32 %v1077
    %vm1084 = vmor %vm1082, %vm1083
    %v1085 = vsel %vm1084, %v1077, %v1081
    %v1086 = vand.u32 2147483647, %v1076
    %vm1087 = vcmp.eq.f32.partialorder %v1086, 8.507059e+37
    %v1088 = vand.u32 %v1076, 2147483648
    %v1089 = vor.u32 1.1754944e-38, %v1088
    %v1090 = vsel %vm1087, %v1089, %v1085
    %v1091 = vmul.f32 1.0, %v1090
    %v1092 = vtanh.pop %v1052
    %v1093 = vxor.u32 %v1053, 2147483648
    %v1094 = vmul.f32 %v1093, 1.442695
    %v1095 = vpow.pop %v1094
    %v1096 = vadd.f32 %v1095, 1.0
    %v1097 = vrcp.pop %v1096
    %v1098 = vmul.f32 %v1096, %v1097
    %v1099 = vsub.f32 1.0, %v1098
    %v1100 = vmul.f32 %v1097, %v1099
    %v1101 = vadd.f32 %v1097, %v1100
    %vm1102 = vweird.f32 %v1096
    %vm1103 = vweird.f32 %v1097
    %vm1104 = vmor %vm1102, %vm1103
    %v1105 = vsel %vm1104, %v1097, %v1101
    %v1106 = vand.u32 2147483647, %v1096
    %vm1107 = vcmp.eq.f32.partialorder %v1106, 8.507059e+37
    %v1108 = vand.u32 %v1096, 2147483648
    %v1109 = vor.u32 1.1754944e-38, %v1108
    %v1110 = vsel %vm1107, %v1109, %v1105
    %v1111 = vmul.f32 1.0, %v1110
    %v1112 = vmul.f32 %v1091, 0.0
    %v1113 = vmul.f32 %v1072, %v1092
    %v1114 = vadd.f32 %v1112, %v1113
    %v1115 = vtanh.pop %v1114
    %v1116 = vmul.f32 %v1111, %v1115
    %1117 = vmatpush.msra.mxu0 %v723
    %1118 = vmatpush.msra.mxu0 %v719
    %1119 = vmatpush.msra.mxu0 %v715
    %1120 = vmatpush.msra.mxu0 %v711
    %1121 = vmatpush.msra.mxu0 %v707
    %1122 = vmatpush.msra.mxu0 %v703
    %1123 = vmatpush.msra.mxu0 %v699
    %1124 = vmatpush.msra.mxu0 %v695
    %1125 = vmatpush.msra.mxu0 %v691
    %1126 = vmatpush.msra.mxu0 %v687
    %1127 = vmatpush.msra.mxu0 %v683
    %1128 = vmatpush.msra.mxu0 %v679
    %1129 = vmatpush.msra.mxu0 %v675
    %1130 = vmatpush.msra.mxu0 %v671
    %1131 = vmatpush.msra.mxu0 %v667
    %1132 = vmatpush.msra.mxu0 %v663
    %1133 = vmatmul.f32.gmra.mxu0 %v1116
    %v1134 = vpop.f32.mrf.mxu0
    %v1135 = vadd.f32 0.0, %v1134
    %1136 = vdwg.mxu0
    %1137 = vmatpush.msra.mxu0 %v724
    %1138 = vmatpush.msra.mxu0 %v720
    %1139 = vmatpush.msra.mxu0 %v716
    %1140 = vmatpush.msra.mxu0 %v712
    %1141 = vmatpush.msra.mxu0 %v708
    %1142 = vmatpush.msra.mxu0 %v704
    %1143 = vmatpush.msra.mxu0 %v700
    %1144 = vmatpush.msra.mxu0 %v696
    %1145 = vmatpush.msra.mxu0 %v692
    %1146 = vmatpush.msra.mxu0 %v688
    %1147 = vmatpush.msra.mxu0 %v684
    %1148 = vmatpush.msra.mxu0 %v680
    %1149 = vmatpush.msra.mxu0 %v676
    %1150 = vmatpush.msra.mxu0 %v672
    %1151 = vmatpush.msra.mxu0 %v668
    %1152 = vmatpush.msra.mxu0 %v664
    %1153 = vmatmul.f32.gmra.mxu0 %v1116
    %v1154 = vpop.f32.mrf.mxu0
    %v1155 = vadd.f32 0.0, %v1154
    %1156 = vdwg.mxu0
    %1157 = vmatpush.msra.mxu0 %v725
    %1158 = vmatpush.msra.mxu0 %v721
    %1159 = vmatpush.msra.mxu0 %v717
    %1160 = vmatpush.msra.mxu0 %v713
    %1161 = vmatpush.msra.mxu0 %v709
    %1162 = vmatpush.msra.mxu0 %v705
    %1163 = vmatpush.msra.mxu0 %v701
    %1164 = vmatpush.msra.mxu0 %v697
    %1165 = vmatpush.msra.mxu0 %v693
    %1166 = vmatpush.msra.mxu0 %v689
    %1167 = vmatpush.msra.mxu0 %v685
    %1168 = vmatpush.msra.mxu0 %v681
    %1169 = vmatpush.msra.mxu0 %v677
    %1170 = vmatpush.msra.mxu0 %v673
    %1171 = vmatpush.msra.mxu0 %v669
    %1172 = vmatpush.msra.mxu0 %v665
    %1173 = vmatmul.f32.gmra.mxu0 %v1116
    %v1174 = vpop.f32.mrf.mxu0
    %v1175 = vadd.f32 0.0, %v1174
    %1176 = vdwg.mxu0
    %1177 = vmatpush.msra.mxu0 %v726
    %1178 = vmatpush.msra.mxu0 %v722
    %1179 = vmatpush.msra.mxu0 %v718
    %1180 = vmatpush.msra.mxu0 %v714
    %1181 = vmatpush.msra.mxu0 %v710
    %1182 = vmatpush.msra.mxu0 %v706
    %1183 = vmatpush.msra.mxu0 %v702
    %1184 = vmatpush.msra.mxu0 %v698
    %1185 = vmatpush.msra.mxu0 %v694
    %1186 = vmatpush.msra.mxu0 %v690
    %1187 = vmatpush.msra.mxu0 %v686
    %1188 = vmatpush.msra.mxu0 %v682
    %1189 = vmatpush.msra.mxu0 %v678
    %1190 = vmatpush.msra.mxu0 %v674
    %1191 = vmatpush.msra.mxu0 %v670
    %1192 = vmatpush.msra.mxu0 %v666
    %1193 = vmatmul.f32.gmra.mxu0 %v1116
    %v1194 = vpop.f32.mrf.mxu0
    %v1195 = vadd.f32 0.0, %v1194
    %1196 = vdwg.mxu0
    %v1198 = vrot.slane %v1116, 2
    %1200 = vmatpush.msra.mxu0 %v787
    %1201 = vmatpush.msra.mxu0 %v783
    %1202 = vmatpush.msra.mxu0 %v779
    %1203 = vmatpush.msra.mxu0 %v775
    %1204 = vmatpush.msra.mxu0 %v771
    %1205 = vmatpush.msra.mxu0 %v767
    %1206 = vmatpush.msra.mxu0 %v763
    %1207 = vmatpush.msra.mxu0 %v759
    %1208 = vmatpush.msra.mxu0 %v755
    %1209 = vmatpush.msra.mxu0 %v751
    %1210 = vmatpush.msra.mxu0 %v747
    %1211 = vmatpush.msra.mxu0 %v743
    %1212 = vmatpush.msra.mxu0 %v739
    %1213 = vmatpush.msra.mxu0 %v735
    %1214 = vmatpush.msra.mxu0 %v731
    %1215 = vmatpush.msra.mxu0 %v727
    %1216 = vmatmul.f32.gmra.mxu0 %v1198
    %v1217 = vpop.f32.mrf.mxu0
    %v1218 = vadd.f32 0.0, %v1217
    %1219 = vdwg.mxu0
    %1220 = vmatpush.msra.mxu0 %v788
    %1221 = vmatpush.msra.mxu0 %v784
    %1222 = vmatpush.msra.mxu0 %v780
    %1223 = vmatpush.msra.mxu0 %v776
    %1224 = vmatpush.msra.mxu0 %v772
    %1225 = vmatpush.msra.mxu0 %v768
    %1226 = vmatpush.msra.mxu0 %v764
    %1227 = vmatpush.msra.mxu0 %v760
    %1228 = vmatpush.msra.mxu0 %v756
    %1229 = vmatpush.msra.mxu0 %v752
    %1230 = vmatpush.msra.mxu0 %v748
    %1231 = vmatpush.msra.mxu0 %v744
    %1232 = vmatpush.msra.mxu0 %v740
    %1233 = vmatpush.msra.mxu0 %v736
    %1234 = vmatpush.msra.mxu0 %v732
    %1235 = vmatpush.msra.mxu0 %v728
    %1236 = vmatmul.f32.gmra.mxu0 %v1198
    %v1237 = vpop.f32.mrf.mxu0
    %v1238 = vadd.f32 0.0, %v1237
    %1239 = vdwg.mxu0
    %1240 = vmatpush.msra.mxu0 %v789
    %1241 = vmatpush.msra.mxu0 %v785
    %1242 = vmatpush.msra.mxu0 %v781
    %1243 = vmatpush.msra.mxu0 %v777
    %1244 = vmatpush.msra.mxu0 %v773
    %1245 = vmatpush.msra.mxu0 %v769
    %1246 = vmatpush.msra.mxu0 %v765
    %1247 = vmatpush.msra.mxu0 %v761
    %1248 = vmatpush.msra.mxu0 %v757
    %1249 = vmatpush.msra.mxu0 %v753
    %1250 = vmatpush.msra.mxu0 %v749
    %1251 = vmatpush.msra.mxu0 %v745
    %1252 = vmatpush.msra.mxu0 %v741
    %1253 = vmatpush.msra.mxu0 %v737
    %1254 = vmatpush.msra.mxu0 %v733
    %1255 = vmatpush.msra.mxu0 %v729
    %1256 = vmatmul.f32.gmra.mxu0 %v1198
    %v1257 = vpop.f32.mrf.mxu0
    %v1258 = vadd.f32 0.0, %v1257
    %1259 = vdwg.mxu0
    %1260 = vmatpush.msra.mxu0 %v790
    %1261 = vmatpush.msra.mxu0 %v786
    %1262 = vmatpush.msra.mxu0 %v782
    %1263 = vmatpush.msra.mxu0 %v778
    %1264 = vmatpush.msra.mxu0 %v774
    %1265 = vmatpush.msra.mxu0 %v770
    %1266 = vmatpush.msra.mxu0 %v766
    %1267 = vmatpush.msra.mxu0 %v762
    %1268 = vmatpush.msra.mxu0 %v758
    %1269 = vmatpush.msra.mxu0 %v754
    %1270 = vmatpush.msra.mxu0 %v750
    %1271 = vmatpush.msra.mxu0 %v746
    %1272 = vmatpush.msra.mxu0 %v742
    %1273 = vmatpush.msra.mxu0 %v738
    %1274 = vmatpush.msra.mxu0 %v734
    %1275 = vmatpush.msra.mxu0 %v730
    %1276 = vmatmul.f32.gmra.mxu0 %v1198
    %v1277 = vpop.f32.mrf.mxu0
    %v1278 = vadd.f32 0.0, %v1277
    %1279 = vdwg.mxu0
    %v1284 = vrot.slane %v1135, 7
    %v1285 = vrot.slane %v1155, 7
    %v1286 = vrot.slane %v1175, 7
    %v1287 = vrot.slane %v1195, 7
    %v1296 = vadd.f32 %v407, %v1284
    %v1297 = vadd.f32 %v430, %v1285
    %v1298 = vadd.f32 %v453, %v1286
    %v1299 = vadd.f32 %v476, %v1287
    %v1300 = vadd.f32 %v410, %v1135
    %v1301 = vadd.f32 %v433, %v1155
    %v1302 = vadd.f32 %v456, %v1175
    %v1303 = vadd.f32 %v479, %v1195
    %v1308 = vrot.slane %v1218, 2
    %v1309 = vrot.slane %v1238, 2
    %v1310 = vrot.slane %v1258, 2
    %v1311 = vrot.slane %v1278, 2
    %v1312 = vrot.slane %v1218, 3
    %v1313 = vrot.slane %v1238, 3
    %v1314 = vrot.slane %v1258, 3
    %v1315 = vrot.slane %v1278, 3
    %v1324 = vadd.f32 %v499, %v1308
    %v1325 = vadd.f32 %v522, %v1309
    %v1326 = vadd.f32 %v545, %v1310
    %v1327 = vadd.f32 %v568, %v1311
    %v1328 = vadd.f32 %v502, %v1312
    %v1329 = vadd.f32 %v525, %v1313
    %v1330 = vadd.f32 %v548, %v1314
    %v1331 = vadd.f32 %v571, %v1315
    %v1340 = vrot.slane %v1296, 1
    %v1341 = vsel %vm1012, %v1300, %v1340
    %v1342 = vrot.slane %v1297, 1
    %v1343 = vsel %vm1012, %v1301, %v1342
    %v1344 = vrot.slane %v1298, 1
    %v1345 = vsel %vm1012, %v1302, %v1344
    %v1346 = vrot.slane %v1299, 1
    %v1347 = vsel %vm1012, %v1303, %v1346
    %v1360 = vrot.slane %v1324, 4
    %v1361 = vrot.slane %v1328, 3
    %v1362 = vsel %vm1034, %v1361, %v1360
    %v1363 = vrot.slane %v1325, 4
    %v1364 = vrot.slane %v1329, 3
    %v1365 = vsel %vm1034, %v1364, %v1363
    %v1366 = vrot.slane %v1326, 4
    %v1367 = vrot.slane %v1330, 3
    %v1368 = vsel %vm1034, %v1367, %v1366
    %v1369 = vrot.slane %v1327, 4
    %v1370 = vrot.slane %v1331, 3
    %v1371 = vsel %vm1034, %v1370, %v1369
    %v1376 = vsel %vm1049, %v1341, %v1362
    %v1377 = vsel %vm1049, %v1343, %v1365
    %v1378 = vsel %vm1049, %v1345, %v1368
    %v1379 = vsel %vm1049, %v1347, %v1371
    %v1380 = vxor.u32 %v1376, 2147483648
    %v1381 = vmul.f32 %v1380, 1.442695
    %v1382 = vpow.pop %v1381
    %v1383 = vadd.f32 %v1382, 1.0
    %v1384 = vrcp.pop %v1383
    %v1385 = vmul.f32 %v1383, %v1384
    %v1386 = vsub.f32 1.0, %v1385
    %v1387 = vmul.f32 %v1384, %v1386
    %v1388 = vadd.f32 %v1384, %v1387
    %vm1389 = vweird.f32 %v1383
    %vm1390 = vweird.f32 %v1384
    %vm1391 = vmor %vm1389, %vm1390
    %v1392 = vsel %vm1391, %v1384, %v1388
    %v1393 = vand.u32 2147483647, %v1383
    %vm1394 = vcmp.eq.f32.partialorder %v1393, 8.507059e+37
    %v1395 = vand.u32 %v1383, 2147483648
    %v1396 = vor.u32 1.1754944e-38, %v1395
    %v1397 = vsel %vm1394, %v1396, %v1392
    %v1398 = vmul.f32 1.0, %v1397
    %v1399 = vxor.u32 %v1377, 2147483648
    %v1400 = vmul.f32 %v1399, 1.442695
    %v1401 = vpow.pop %v1400
    %v1402 = vadd.f32 %v1401, 1.0
    %v1403 = vrcp.pop %v1402
    %v1404 = vmul.f32 %v1402, %v1403
    %v1405 = vsub.f32 1.0, %v1404
    %v1406 = vmul.f32 %v1403, %v1405
    %v1407 = vadd.f32 %v1403, %v1406
    %vm1408 = vweird.f32 %v1402
    %vm1409 = vweird.f32 %v1403
    %vm1410 = vmor %vm1408, %vm1409
    %v1411 = vsel %vm1410, %v1403, %v1407
    %v1412 = vand.u32 2147483647, %v1402
    %vm1413 = vcmp.eq.f32.partialorder %v1412, 8.507059e+37
    %v1414 = vand.u32 %v1402, 2147483648
    %v1415 = vor.u32 1.1754944e-38, %v1414
    %v1416 = vsel %vm1413, %v1415, %v1411
    %v1417 = vmul.f32 1.0, %v1416
    %v1418 = vtanh.pop %v1378
    %v1419 = vxor.u32 %v1379, 2147483648
    %v1420 = vmul.f32 %v1419, 1.442695
    %v1421 = vpow.pop %v1420
    %v1422 = vadd.f32 %v1421, 1.0
    %v1423 = vrcp.pop %v1422
    %v1424 = vmul.f32 %v1422, %v1423
    %v1425 = vsub.f32 1.0, %v1424
    %v1426 = vmul.f32 %v1423, %v1425
    %v1427 = vadd.f32 %v1423, %v1426
    %vm1428 = vweird.f32 %v1422
    %vm1429 = vweird.f32 %v1423
    %vm1430 = vmor %vm1428, %vm1429
    %v1431 = vsel %vm1430, %v1423, %v1427
    %v1432 = vand.u32 2147483647, %v1422
    %vm1433 = vcmp.eq.f32.partialorder %v1432, 8.507059e+37
    %v1434 = vand.u32 %v1422, 2147483648
    %v1435 = vor.u32 1.1754944e-38, %v1434
    %v1436 = vsel %vm1433, %v1435, %v1431
    %v1437 = vmul.f32 1.0, %v1436
    %v1438 = vmul.f32 %v1417, %v1114
    %v1439 = vmul.f32 %v1398, %v1418
    %v1440 = vadd.f32 %v1438, %v1439
    %v1441 = vtanh.pop %v1440
    %v1442 = vmul.f32 %v1437, %v1441
    %1443 = vmatpush.msra.mxu0 %v723
    %1444 = vmatpush.msra.mxu0 %v719
    %1445 = vmatpush.msra.mxu0 %v715
    %1446 = vmatpush.msra.mxu0 %v711
    %1447 = vmatpush.msra.mxu0 %v707
    %1448 = vmatpush.msra.mxu0 %v703
    %1449 = vmatpush.msra.mxu0 %v699
    %1450 = vmatpush.msra.mxu0 %v695
    %1451 = vmatpush.msra.mxu0 %v691
    %1452 = vmatpush.msra.mxu0 %v687
    %1453 = vmatpush.msra.mxu0 %v683
    %1454 = vmatpush.msra.mxu0 %v679
    %1455 = vmatpush.msra.mxu0 %v675
    %1456 = vmatpush.msra.mxu0 %v671
    %1457 = vmatpush.msra.mxu0 %v667
    %1458 = vmatpush.msra.mxu0 %v663
    %1459 = vmatmul.f32.gmra.mxu0 %v1442
    %v1460 = vpop.f32.mrf.mxu0
    %v1461 = vadd.f32 0.0, %v1460
    %1462 = vdwg.mxu0
    %1463 = vmatpush.msra.mxu0 %v724
    %1464 = vmatpush.msra.mxu0 %v720
    %1465 = vmatpush.msra.mxu0 %v716
    %1466 = vmatpush.msra.mxu0 %v712
    %1467 = vmatpush.msra.mxu0 %v708
    %1468 = vmatpush.msra.mxu0 %v704
    %1469 = vmatpush.msra.mxu0 %v700
    %1470 = vmatpush.msra.mxu0 %v696
    %1471 = vmatpush.msra.mxu0 %v692
    %1472 = vmatpush.msra.mxu0 %v688
    %1473 = vmatpush.msra.mxu0 %v684
    %1474 = vmatpush.msra.mxu0 %v680
    %1475 = vmatpush.msra.mxu0 %v676
    %1476 = vmatpush.msra.mxu0 %v672
    %1477 = vmatpush.msra.mxu0 %v668
    %1478 = vmatpush.msra.mxu0 %v664
    %1479 = vmatmul.f32.gmra.mxu0 %v1442
    %v1480 = vpop.f32.mrf.mxu0
    %v1481 = vadd.f32 0.0, %v1480
    %1482 = vdwg.mxu0
    %1483 = vmatpush.msra.mxu0 %v725
    %1484 = vmatpush.msra.mxu0 %v721
    %1485 = vmatpush.msra.mxu0 %v717
    %1486 = vmatpush.msra.mxu0 %v713
    %1487 = vmatpush.msra.mxu0 %v709
    %1488 = vmatpush.msra.mxu0 %v705
    %1489 = vmatpush.msra.mxu0 %v701
    %1490 = vmatpush.msra.mxu0 %v697
    %1491 = vmatpush.msra.mxu0 %v693
    %1492 = vmatpush.msra.mxu0 %v689
    %1493 = vmatpush.msra.mxu0 %v685
    %1494 = vmatpush.msra.mxu0 %v681
    %1495 = vmatpush.msra.mxu0 %v677
    %1496 = vmatpush.msra.mxu0 %v673
    %1497 = vmatpush.msra.mxu0 %v669
    %1498 = vmatpush.msra.mxu0 %v665
    %1499 = vmatmul.f32.gmra.mxu0 %v1442
    %v1500 = vpop.f32.mrf.mxu0
    %v1501 = vadd.f32 0.0, %v1500
    %1502 = vdwg.mxu0
    %1503 = vmatpush.msra.mxu0 %v726
    %1504 = vmatpush.msra.mxu0 %v722
    %1505 = vmatpush.msra.mxu0 %v718
    %1506 = vmatpush.msra.mxu0 %v714
    %1507 = vmatpush.msra.mxu0 %v710
    %1508 = vmatpush.msra.mxu0 %v706
    %1509 = vmatpush.msra.mxu0 %v702
    %1510 = vmatpush.msra.mxu0 %v698
    %1511 = vmatpush.msra.mxu0 %v694
    %1512 = vmatpush.msra.mxu0 %v690
    %1513 = vmatpush.msra.mxu0 %v686
    %1514 = vmatpush.msra.mxu0 %v682
    %1515 = vmatpush.msra.mxu0 %v678
    %1516 = vmatpush.msra.mxu0 %v674
    %1517 = vmatpush.msra.mxu0 %v670
    %1518 = vmatpush.msra.mxu0 %v666
    %1519 = vmatmul.f32.gmra.mxu0 %v1442
    %v1520 = vpop.f32.mrf.mxu0
    %v1521 = vadd.f32 0.0, %v1520
    %1522 = vdwg.mxu0
    %v1524 = vrot.slane %v1442, 2
    %1526 = vmatpush.msra.mxu0 %v787
    %1527 = vmatpush.msra.mxu0 %v783
    %1528 = vmatpush.msra.mxu0 %v779
    %1529 = vmatpush.msra.mxu0 %v775
    %1530 = vmatpush.msra.mxu0 %v771
    %1531 = vmatpush.msra.mxu0 %v767
    %1532 = vmatpush.msra.mxu0 %v763
    %1533 = vmatpush.msra.mxu0 %v759
    %1534 = vmatpush.msra.mxu0 %v755
    %1535 = vmatpush.msra.mxu0 %v751
    %1536 = vmatpush.msra.mxu0 %v747
    %1537 = vmatpush.msra.mxu0 %v743
    %1538 = vmatpush.msra.mxu0 %v739
    %1539 = vmatpush.msra.mxu0 %v735
    %1540 = vmatpush.msra.mxu0 %v731
    %1541 = vmatpush.msra.mxu0 %v727
    %1542 = vmatmul.f32.gmra.mxu0 %v1524
    %v1543 = vpop.f32.mrf.mxu0
    %v1544 = vadd.f32 0.0, %v1543
    %1545 = vdwg.mxu0
    %1546 = vmatpush.msra.mxu0 %v788
    %1547 = vmatpush.msra.mxu0 %v784
    %1548 = vmatpush.msra.mxu0 %v780
    %1549 = vmatpush.msra.mxu0 %v776
    %1550 = vmatpush.msra.mxu0 %v772
    %1551 = vmatpush.msra.mxu0 %v768
    %1552 = vmatpush.msra.mxu0 %v764
    %1553 = vmatpush.msra.mxu0 %v760
    %1554 = vmatpush.msra.mxu0 %v756
    %1555 = vmatpush.msra.mxu0 %v752
    %1556 = vmatpush.msra.mxu0 %v748
    %1557 = vmatpush.msra.mxu0 %v744
    %1558 = vmatpush.msra.mxu0 %v740
    %1559 = vmatpush.msra.mxu0 %v736
    %1560 = vmatpush.msra.mxu0 %v732
    %1561 = vmatpush.msra.mxu0 %v728
    %1562 = vmatmul.f32.gmra.mxu0 %v1524
    %v1563 = vpop.f32.mrf.mxu0
    %v1564 = vadd.f32 0.0, %v1563
    %1565 = vdwg.mxu0
    %1566 = vmatpush.msra.mxu0 %v789
    %1567 = vmatpush.msra.mxu0 %v785
    %1568 = vmatpush.msra.mxu0 %v781
    %1569 = vmatpush.msra.mxu0 %v777
    %1570 = vmatpush.msra.mxu0 %v773
    %1571 = vmatpush.msra.mxu0 %v769
    %1572 = vmatpush.msra.mxu0 %v765
    %1573 = vmatpush.msra.mxu0 %v761
    %1574 = vmatpush.msra.mxu0 %v757
    %1575 = vmatpush.msra.mxu0 %v753
    %1576 = vmatpush.msra.mxu0 %v749
    %1577 = vmatpush.msra.mxu0 %v745
    %1578 = vmatpush.msra.mxu0 %v741
    %1579 = vmatpush.msra.mxu0 %v737
    %1580 = vmatpush.msra.mxu0 %v733
    %1581 = vmatpush.msra.mxu0 %v729
    %1582 = vmatmul.f32.gmra.mxu0 %v1524
    %v1583 = vpop.f32.mrf.mxu0
    %v1584 = vadd.f32 0.0, %v1583
    %1585 = vdwg.mxu0
    %1586 = vmatpush.msra.mxu0 %v790
    %1587 = vmatpush.msra.mxu0 %v786
    %1588 = vmatpush.msra.mxu0 %v782
    %1589 = vmatpush.msra.mxu0 %v778
    %1590 = vmatpush.msra.mxu0 %v774
    %1591 = vmatpush.msra.mxu0 %v770
    %1592 = vmatpush.msra.mxu0 %v766
    %1593 = vmatpush.msra.mxu0 %v762
    %1594 = vmatpush.msra.mxu0 %v758
    %1595 = vmatpush.msra.mxu0 %v754
    %1596 = vmatpush.msra.mxu0 %v750
    %1597 = vmatpush.msra.mxu0 %v746
    %1598 = vmatpush.msra.mxu0 %v742
    %1599 = vmatpush.msra.mxu0 %v738
    %1600 = vmatpush.msra.mxu0 %v734
    %1601 = vmatpush.msra.mxu0 %v730
    %1602 = vmatmul.f32.gmra.mxu0 %v1524
    %v1603 = vpop.f32.mrf.mxu0
    %v1604 = vadd.f32 0.0, %v1603
    %1605 = vdwg.mxu0
    %v1610 = vrot.slane %v1461, 6
    %v1611 = vrot.slane %v1481, 6
    %v1612 = vrot.slane %v1501, 6
    %v1613 = vrot.slane %v1521, 6
    %v1614 = vrot.slane %v1461, 7
    %v1615 = vrot.slane %v1481, 7
    %v1616 = vrot.slane %v1501, 7
    %v1617 = vrot.slane %v1521, 7
    %v1626 = vadd.f32 %v407, %v1610
    %v1627 = vadd.f32 %v430, %v1611
    %v1628 = vadd.f32 %v453, %v1612
    %v1629 = vadd.f32 %v476, %v1613
    %v1630 = vadd.f32 %v410, %v1614
    %v1631 = vadd.f32 %v433, %v1615
    %v1632 = vadd.f32 %v456, %v1616
    %v1633 = vadd.f32 %v479, %v1617
    %v1638 = vrot.slane %v1544, 3
    %v1639 = vrot.slane %v1564, 3
    %v1640 = vrot.slane %v1584, 3
    %v1641 = vrot.slane %v1604, 3
    %v1642 = vrot.slane %v1544, 4
    %v1643 = vrot.slane %v1564, 4
    %v1644 = vrot.slane %v1584, 4
    %v1645 = vrot.slane %v1604, 4
    %v1654 = vadd.f32 %v499, %v1638
    %v1655 = vadd.f32 %v522, %v1639
    %v1656 = vadd.f32 %v545, %v1640
    %v1657 = vadd.f32 %v568, %v1641
    %v1658 = vadd.f32 %v502, %v1642
    %v1659 = vadd.f32 %v525, %v1643
    %v1660 = vadd.f32 %v548, %v1644
    %v1661 = vadd.f32 %v571, %v1645
    %v1670 = vrot.slane %v1626, 2
    %v1671 = vrot.slane %v1630, 1
    %v1672 = vsel %vm1012, %v1671, %v1670
    %v1673 = vrot.slane %v1627, 2
    %v1674 = vrot.slane %v1631, 1
    %v1675 = vsel %vm1012, %v1674, %v1673
    %v1676 = vrot.slane %v1628, 2
    %v1677 = vrot.slane %v1632, 1
    %v1678 = vsel %vm1012, %v1677, %v1676
    %v1679 = vrot.slane %v1629, 2
    %v1680 = vrot.slane %v1633, 1
    %v1681 = vsel %vm1012, %v1680, %v1679
    %v1694 = vrot.slane %v1654, 3
    %v1695 = vrot.slane %v1658, 2
    %v1696 = vsel %vm1034, %v1695, %v1694
    %v1697 = vrot.slane %v1655, 3
    %v1698 = vrot.slane %v1659, 2
    %v1699 = vsel %vm1034, %v1698, %v1697
    %v1700 = vrot.slane %v1656, 3
    %v1701 = vrot.slane %v1660, 2
    %v1702 = vsel %vm1034, %v1701, %v1700
    %v1703 = vrot.slane %v1657, 3
    %v1704 = vrot.slane %v1661, 2
    %v1705 = vsel %vm1034, %v1704, %v1703
    %v1710 = vsel %vm1049, %v1672, %v1696
    %v1711 = vsel %vm1049, %v1675, %v1699
    %v1712 = vsel %vm1049, %v1678, %v1702
    %v1713 = vsel %vm1049, %v1681, %v1705
    %v1714 = vxor.u32 %v1710, 2147483648
    %v1715 = vmul.f32 %v1714, 1.442695
    %v1716 = vpow.pop %v1715
    %v1717 = vadd.f32 %v1716, 1.0
    %v1718 = vrcp.pop %v1717
    %v1719 = vmul.f32 %v1717, %v1718
    %v1720 = vsub.f32 1.0, %v1719
    %v1721 = vmul.f32 %v1718, %v1720
    %v1722 = vadd.f32 %v1718, %v1721
    %vm1723 = vweird.f32 %v1717
    %vm1724 = vweird.f32 %v1718
    %vm1725 = vmor %vm1723, %vm1724
    %v1726 = vsel %vm1725, %v1718, %v1722
    %v1727 = vand.u32 2147483647, %v1717
    %vm1728 = vcmp.eq.f32.partialorder %v1727, 8.507059e+37
    %v1729 = vand.u32 %v1717, 2147483648
    %v1730 = vor.u32 1.1754944e-38, %v1729
    %v1731 = vsel %vm1728, %v1730, %v1726
    %v1732 = vmul.f32 1.0, %v1731
    %v1733 = vxor.u32 %v1711, 2147483648
    %v1734 = vmul.f32 %v1733, 1.442695
    %v1735 = vpow.pop %v1734
    %v1736 = vadd.f32 %v1735, 1.0
    %v1737 = vrcp.pop %v1736
    %v1738 = vmul.f32 %v1736, %v1737
    %v1739 = vsub.f32 1.0, %v1738
    %v1740 = vmul.f32 %v1737, %v1739
    %v1741 = vadd.f32 %v1737, %v1740
    %vm1742 = vweird.f32 %v1736
    %vm1743 = vweird.f32 %v1737
    %vm1744 = vmor %vm1742, %vm1743
    %v1745 = vsel %vm1744, %v1737, %v1741
    %v1746 = vand.u32 2147483647, %v1736
    %vm1747 = vcmp.eq.f32.partialorder %v1746, 8.507059e+37
    %v1748 = vand.u32 %v1736, 2147483648
    %v1749 = vor.u32 1.1754944e-38, %v1748
    %v1750 = vsel %vm1747, %v1749, %v1745
    %v1751 = vmul.f32 1.0, %v1750
    %v1752 = vtanh.pop %v1712
    %v1753 = vxor.u32 %v1713, 2147483648
    %v1754 = vmul.f32 %v1753, 1.442695
    %v1755 = vpow.pop %v1754
    %v1756 = vadd.f32 %v1755, 1.0
    %v1757 = vrcp.pop %v1756
    %v1758 = vmul.f32 %v1756, %v1757
    %v1759 = vsub.f32 1.0, %v1758
    %v1760 = vmul.f32 %v1757, %v1759
    %v1761 = vadd.f32 %v1757, %v1760
    %vm1762 = vweird.f32 %v1756
    %vm1763 = vweird.f32 %v1757
    %vm1764 = vmor %vm1762, %vm1763
    %v1765 = vsel %vm1764, %v1757, %v1761
    %v1766 = vand.u32 2147483647, %v1756
    %vm1767 = vcmp.eq.f32.partialorder %v1766, 8.507059e+37
    %v1768 = vand.u32 %v1756, 2147483648
    %v1769 = vor.u32 1.1754944e-38, %v1768
    %v1770 = vsel %vm1767, %v1769, %v1765
    %v1771 = vmul.f32 1.0, %v1770
    %v1772 = vmul.f32 %v1751, %v1440
    %v1773 = vmul.f32 %v1732, %v1752
    %v1774 = vadd.f32 %v1772, %v1773
    %v1775 = vtanh.pop %v1774
    %v1776 = vmul.f32 %v1771, %v1775
    %1777 = vmatpush.msra.mxu0 %v723
    %1778 = vmatpush.msra.mxu0 %v719
    %1779 = vmatpush.msra.mxu0 %v715
    %1780 = vmatpush.msra.mxu0 %v711
    %1781 = vmatpush.msra.mxu0 %v707
    %1782 = vmatpush.msra.mxu0 %v703
    %1783 = vmatpush.msra.mxu0 %v699
    %1784 = vmatpush.msra.mxu0 %v695
    %1785 = vmatpush.msra.mxu0 %v691
    %1786 = vmatpush.msra.mxu0 %v687
    %1787 = vmatpush.msra.mxu0 %v683
    %1788 = vmatpush.msra.mxu0 %v679
    %1789 = vmatpush.msra.mxu0 %v675
    %1790 = vmatpush.msra.mxu0 %v671
    %1791 = vmatpush.msra.mxu0 %v667
    %1792 = vmatpush.msra.mxu0 %v663
    %1793 = vmatmul.f32.gmra.mxu0 %v1776
    %v1794 = vpop.f32.mrf.mxu0
    %v1795 = vadd.f32 0.0, %v1794
    %1796 = vdwg.mxu0
    %1797 = vmatpush.msra.mxu0 %v724
    %1798 = vmatpush.msra.mxu0 %v720
    %1799 = vmatpush.msra.mxu0 %v716
    %1800 = vmatpush.msra.mxu0 %v712
    %1801 = vmatpush.msra.mxu0 %v708
    %1802 = vmatpush.msra.mxu0 %v704
    %1803 = vmatpush.msra.mxu0 %v700
    %1804 = vmatpush.msra.mxu0 %v696
    %1805 = vmatpush.msra.mxu0 %v692
    %1806 = vmatpush.msra.mxu0 %v688
    %1807 = vmatpush.msra.mxu0 %v684
    %1808 = vmatpush.msra.mxu0 %v680
    %1809 = vmatpush.msra.mxu0 %v676
    %1810 = vmatpush.msra.mxu0 %v672
    %1811 = vmatpush.msra.mxu0 %v668
    %1812 = vmatpush.msra.mxu0 %v664
    %1813 = vmatmul.f32.gmra.mxu0 %v1776
    %v1814 = vpop.f32.mrf.mxu0
    %v1815 = vadd.f32 0.0, %v1814
    %1816 = vdwg.mxu0
    %1817 = vmatpush.msra.mxu0 %v725
    %1818 = vmatpush.msra.mxu0 %v721
    %1819 = vmatpush.msra.mxu0 %v717
    %1820 = vmatpush.msra.mxu0 %v713
    %1821 = vmatpush.msra.mxu0 %v709
    %1822 = vmatpush.msra.mxu0 %v705
    %1823 = vmatpush.msra.mxu0 %v701
    %1824 = vmatpush.msra.mxu0 %v697
    %1825 = vmatpush.msra.mxu0 %v693
    %1826 = vmatpush.msra.mxu0 %v689
    %1827 = vmatpush.msra.mxu0 %v685
    %1828 = vmatpush.msra.mxu0 %v681
    %1829 = vmatpush.msra.mxu0 %v677
    %1830 = vmatpush.msra.mxu0 %v673
    %1831 = vmatpush.msra.mxu0 %v669
    %1832 = vmatpush.msra.mxu0 %v665
    %1833 = vmatmul.f32.gmra.mxu0 %v1776
    %v1834 = vpop.f32.mrf.mxu0
    %v1835 = vadd.f32 0.0, %v1834
    %1836 = vdwg.mxu0
    %1837 = vmatpush.msra.mxu0 %v726
    %1838 = vmatpush.msra.mxu0 %v722
    %1839 = vmatpush.msra.mxu0 %v718
    %1840 = vmatpush.msra.mxu0 %v714
    %1841 = vmatpush.msra.mxu0 %v710
    %1842 = vmatpush.msra.mxu0 %v706
    %1843 = vmatpush.msra.mxu0 %v702
    %1844 = vmatpush.msra.mxu0 %v698
    %1845 = vmatpush.msra.mxu0 %v694
    %1846 = vmatpush.msra.mxu0 %v690
    %1847 = vmatpush.msra.mxu0 %v686
    %1848 = vmatpush.msra.mxu0 %v682
    %1849 = vmatpush.msra.mxu0 %v678
    %1850 = vmatpush.msra.mxu0 %v674
    %1851 = vmatpush.msra.mxu0 %v670
    %1852 = vmatpush.msra.mxu0 %v666
    %1853 = vmatmul.f32.gmra.mxu0 %v1776
    %v1854 = vpop.f32.mrf.mxu0
    %v1855 = vadd.f32 0.0, %v1854
    %1856 = vdwg.mxu0
    %v1858 = vrot.slane %v1776, 2
    %1860 = vmatpush.msra.mxu0 %v787
    %1861 = vmatpush.msra.mxu0 %v783
    %1862 = vmatpush.msra.mxu0 %v779
    %1863 = vmatpush.msra.mxu0 %v775
    %1864 = vmatpush.msra.mxu0 %v771
    %1865 = vmatpush.msra.mxu0 %v767
    %1866 = vmatpush.msra.mxu0 %v763
    %1867 = vmatpush.msra.mxu0 %v759
    %1868 = vmatpush.msra.mxu0 %v755
    %1869 = vmatpush.msra.mxu0 %v751
    %1870 = vmatpush.msra.mxu0 %v747
    %1871 = vmatpush.msra.mxu0 %v743
    %1872 = vmatpush.msra.mxu0 %v739
    %1873 = vmatpush.msra.mxu0 %v735
    %1874 = vmatpush.msra.mxu0 %v731
    %1875 = vmatpush.msra.mxu0 %v727
    %1876 = vmatmul.f32.gmra.mxu0 %v1858
    %v1877 = vpop.f32.mrf.mxu0
    %v1878 = vadd.f32 0.0, %v1877
    %1879 = vdwg.mxu0
    %1880 = vmatpush.msra.mxu0 %v788
    %1881 = vmatpush.msra.mxu0 %v784
    %1882 = vmatpush.msra.mxu0 %v780
    %1883 = vmatpush.msra.mxu0 %v776
    %1884 = vmatpush.msra.mxu0 %v772
    %1885 = vmatpush.msra.mxu0 %v768
    %1886 = vmatpush.msra.mxu0 %v764
    %1887 = vmatpush.msra.mxu0 %v760
    %1888 = vmatpush.msra.mxu0 %v756
    %1889 = vmatpush.msra.mxu0 %v752
    %1890 = vmatpush.msra.mxu0 %v748
    %1891 = vmatpush.msra.mxu0 %v744
    %1892 = vmatpush.msra.mxu0 %v740
    %1893 = vmatpush.msra.mxu0 %v736
    %1894 = vmatpush.msra.mxu0 %v732
    %1895 = vmatpush.msra.mxu0 %v728
    %1896 = vmatmul.f32.gmra.mxu0 %v1858
    %v1897 = vpop.f32.mrf.mxu0
    %v1898 = vadd.f32 0.0, %v1897
    %1899 = vdwg.mxu0
    %1900 = vmatpush.msra.mxu0 %v789
    %1901 = vmatpush.msra.mxu0 %v785
    %1902 = vmatpush.msra.mxu0 %v781
    %1903 = vmatpush.msra.mxu0 %v777
    %1904 = vmatpush.msra.mxu0 %v773
    %1905 = vmatpush.msra.mxu0 %v769
    %1906 = vmatpush.msra.mxu0 %v765
    %1907 = vmatpush.msra.mxu0 %v761
    %1908 = vmatpush.msra.mxu0 %v757
    %1909 = vmatpush.msra.mxu0 %v753
    %1910 = vmatpush.msra.mxu0 %v749
    %1911 = vmatpush.msra.mxu0 %v745
    %1912 = vmatpush.msra.mxu0 %v741
    %1913 = vmatpush.msra.mxu0 %v737
    %1914 = vmatpush.msra.mxu0 %v733
    %1915 = vmatpush.msra.mxu0 %v729
    %1916 = vmatmul.f32.gmra.mxu0 %v1858
    %v1917 = vpop.f32.mrf.mxu0
    %v1918 = vadd.f32 0.0, %v1917
    %1919 = vdwg.mxu0
    %1920 = vmatpush.msra.mxu0 %v790
    %1921 = vmatpush.msra.mxu0 %v786
    %1922 = vmatpush.msra.mxu0 %v782
    %1923 = vmatpush.msra.mxu0 %v778
    %1924 = vmatpush.msra.mxu0 %v774
    %1925 = vmatpush.msra.mxu0 %v770
    %1926 = vmatpush.msra.mxu0 %v766
    %1927 = vmatpush.msra.mxu0 %v762
    %1928 = vmatpush.msra.mxu0 %v758
    %1929 = vmatpush.msra.mxu0 %v754
    %1930 = vmatpush.msra.mxu0 %v750
    %1931 = vmatpush.msra.mxu0 %v746
    %1932 = vmatpush.msra.mxu0 %v742
    %1933 = vmatpush.msra.mxu0 %v738
    %1934 = vmatpush.msra.mxu0 %v734
    %1935 = vmatpush.msra.mxu0 %v730
    %1936 = vmatmul.f32.gmra.mxu0 %v1858
    %v1937 = vpop.f32.mrf.mxu0
    %v1938 = vadd.f32 0.0, %v1937
    %1939 = vdwg.mxu0
    %v1944 = vrot.slane %v1795, 5
    %v1945 = vrot.slane %v1815, 5
    %v1946 = vrot.slane %v1835, 5
    %v1947 = vrot.slane %v1855, 5
    %v1948 = vrot.slane %v1795, 6
    %v1949 = vrot.slane %v1815, 6
    %v1950 = vrot.slane %v1835, 6
    %v1951 = vrot.slane %v1855, 6
    %v1960 = vadd.f32 %v407, %v1944
    %v1961 = vadd.f32 %v430, %v1945
    %v1962 = vadd.f32 %v453, %v1946
    %v1963 = vadd.f32 %v476, %v1947
    %v1964 = vadd.f32 %v410, %v1948
    %v1965 = vadd.f32 %v433, %v1949
    %v1966 = vadd.f32 %v456, %v1950
    %v1967 = vadd.f32 %v479, %v1951
    %v1972 = vrot.slane %v1878, 4
    %v1973 = vrot.slane %v1898, 4
    %v1974 = vrot.slane %v1918, 4
    %v1975 = vrot.slane %v1938, 4
    %v1976 = vrot.slane %v1878, 5
    %v1977 = vrot.slane %v1898, 5
    %v1978 = vrot.slane %v1918, 5
    %v1979 = vrot.slane %v1938, 5
    %v1988 = vadd.f32 %v499, %v1972
    %v1989 = vadd.f32 %v522, %v1973
    %v1990 = vadd.f32 %v545, %v1974
    %v1991 = vadd.f32 %v568, %v1975
    %v1992 = vadd.f32 %v502, %v1976
    %v1993 = vadd.f32 %v525, %v1977
    %v1994 = vadd.f32 %v548, %v1978
    %v1995 = vadd.f32 %v571, %v1979
    %v2004 = vrot.slane %v1960, 3
    %v2005 = vrot.slane %v1964, 2
    %v2006 = vsel %vm1012, %v2005, %v2004
    %v2007 = vrot.slane %v1961, 3
    %v2008 = vrot.slane %v1965, 2
    %v2009 = vsel %vm1012, %v2008, %v2007
    %v2010 = vrot.slane %v1962, 3
    %v2011 = vrot.slane %v1966, 2
    %v2012 = vsel %vm1012, %v2011, %v2010
    %v2013 = vrot.slane %v1963, 3
    %v2014 = vrot.slane %v1967, 2
    %v2015 = vsel %vm1012, %v2014, %v2013
    %v2028 = vrot.slane %v1988, 2
    %v2029 = vrot.slane %v1992, 1
    %v2030 = vsel %vm1034, %v2029, %v2028
    %v2031 = vrot.slane %v1989, 2
    %v2032 = vrot.slane %v1993, 1
    %v2033 = vsel %vm1034, %v2032, %v2031
    %v2034 = vrot.slane %v1990, 2
    %v2035 = vrot.slane %v1994, 1
    %v2036 = vsel %vm1034, %v2035, %v2034
    %v2037 = vrot.slane %v1991, 2
    %v2038 = vrot.slane %v1995, 1
    %v2039 = vsel %vm1034, %v2038, %v2037
    %v2044 = vsel %vm1049, %v2006, %v2030
    %v2045 = vsel %vm1049, %v2009, %v2033
    %v2046 = vsel %vm1049, %v2012, %v2036
    %v2047 = vsel %vm1049, %v2015, %v2039
    %v2048 = vxor.u32 %v2044, 2147483648
    %v2049 = vmul.f32 %v2048, 1.442695
    %v2050 = vpow.pop %v2049
    %v2051 = vadd.f32 %v2050, 1.0
    %v2052 = vrcp.pop %v2051
    %v2053 = vmul.f32 %v2051, %v2052
    %v2054 = vsub.f32 1.0, %v2053
    %v2055 = vmul.f32 %v2052, %v2054
    %v2056 = vadd.f32 %v2052, %v2055
    %vm2057 = vweird.f32 %v2051
    %vm2058 = vweird.f32 %v2052
    %vm2059 = vmor %vm2057, %vm2058
    %v2060 = vsel %vm2059, %v2052, %v2056
    %v2061 = vand.u32 2147483647, %v2051
    %vm2062 = vcmp.eq.f32.partialorder %v2061, 8.507059e+37
    %v2063 = vand.u32 %v2051, 2147483648
    %v2064 = vor.u32 1.1754944e-38, %v2063
    %v2065 = vsel %vm2062, %v2064, %v2060
    %v2066 = vmul.f32 1.0, %v2065
    %v2067 = vxor.u32 %v2045, 2147483648
    %v2068 = vmul.f32 %v2067, 1.442695
    %v2069 = vpow.pop %v2068
    %v2070 = vadd.f32 %v2069, 1.0
    %v2071 = vrcp.pop %v2070
    %v2072 = vmul.f32 %v2070, %v2071
    %v2073 = vsub.f32 1.0, %v2072
    %v2074 = vmul.f32 %v2071, %v2073
    %v2075 = vadd.f32 %v2071, %v2074
    %vm2076 = vweird.f32 %v2070
    %vm2077 = vweird.f32 %v2071
    %vm2078 = vmor %vm2076, %vm2077
    %v2079 = vsel %vm2078, %v2071, %v2075
    %v2080 = vand.u32 2147483647, %v2070
    %vm2081 = vcmp.eq.f32.partialorder %v2080, 8.507059e+37
    %v2082 = vand.u32 %v2070, 2147483648
    %v2083 = vor.u32 1.1754944e-38, %v2082
    %v2084 = vsel %vm2081, %v2083, %v2079
    %v2085 = vmul.f32 1.0, %v2084
    %v2086 = vtanh.pop %v2046
    %v2087 = vxor.u32 %v2047, 2147483648
    %v2088 = vmul.f32 %v2087, 1.442695
    %v2089 = vpow.pop %v2088
    %v2090 = vadd.f32 %v2089, 1.0
    %v2091 = vrcp.pop %v2090
    %v2092 = vmul.f32 %v2090, %v2091
    %v2093 = vsub.f32 1.0, %v2092
    %v2094 = vmul.f32 %v2091, %v2093
    %v2095 = vadd.f32 %v2091, %v2094
    %vm2096 = vweird.f32 %v2090
    %vm2097 = vweird.f32 %v2091
    %vm2098 = vmor %vm2096, %vm2097
    %v2099 = vsel %vm2098, %v2091, %v2095
    %v2100 = vand.u32 2147483647, %v2090
    %vm2101 = vcmp.eq.f32.partialorder %v2100, 8.507059e+37
    %v2102 = vand.u32 %v2090, 2147483648
    %v2103 = vor.u32 1.1754944e-38, %v2102
    %v2104 = vsel %vm2101, %v2103, %v2099
    %v2105 = vmul.f32 1.0, %v2104
    %v2106 = vmul.f32 %v2085, %v1774
    %v2107 = vmul.f32 %v2066, %v2086
    %v2108 = vadd.f32 %v2106, %v2107
    %v2109 = vtanh.pop %v2108
    %v2110 = vmul.f32 %v2105, %v2109
    %2111 = vmatpush.msra.mxu0 %v723
    %2112 = vmatpush.msra.mxu0 %v719
    %2113 = vmatpush.msra.mxu0 %v715
    %2114 = vmatpush.msra.mxu0 %v711
    %2115 = vmatpush.msra.mxu0 %v707
    %2116 = vmatpush.msra.mxu0 %v703
    %2117 = vmatpush.msra.mxu0 %v699
    %2118 = vmatpush.msra.mxu0 %v695
    %2119 = vmatpush.msra.mxu0 %v691
    %2120 = vmatpush.msra.mxu0 %v687
    %2121 = vmatpush.msra.mxu0 %v683
    %2122 = vmatpush.msra.mxu0 %v679
    %2123 = vmatpush.msra.mxu0 %v675
    %2124 = vmatpush.msra.mxu0 %v671
    %2125 = vmatpush.msra.mxu0 %v667
    %2126 = vmatpush.msra.mxu0 %v663
    %2127 = vmatmul.f32.gmra.mxu0 %v2110
    %v2128 = vpop.f32.mrf.mxu0
    %v2129 = vadd.f32 0.0, %v2128
    %2130 = vdwg.mxu0
    %2131 = vmatpush.msra.mxu0 %v724
    %2132 = vmatpush.msra.mxu0 %v720
    %2133 = vmatpush.msra.mxu0 %v716
    %2134 = vmatpush.msra.mxu0 %v712
    %2135 = vmatpush.msra.mxu0 %v708
    %2136 = vmatpush.msra.mxu0 %v704
    %2137 = vmatpush.msra.mxu0 %v700
    %2138 = vmatpush.msra.mxu0 %v696
    %2139 = vmatpush.msra.mxu0 %v692
    %2140 = vmatpush.msra.mxu0 %v688
    %2141 = vmatpush.msra.mxu0 %v684
    %2142 = vmatpush.msra.mxu0 %v680
    %2143 = vmatpush.msra.mxu0 %v676
    %2144 = vmatpush.msra.mxu0 %v672
    %2145 = vmatpush.msra.mxu0 %v668
    %2146 = vmatpush.msra.mxu0 %v664
    %2147 = vmatmul.f32.gmra.mxu0 %v2110
    %v2148 = vpop.f32.mrf.mxu0
    %v2149 = vadd.f32 0.0, %v2148
    %2150 = vdwg.mxu0
    %2151 = vmatpush.msra.mxu0 %v725
    %2152 = vmatpush.msra.mxu0 %v721
    %2153 = vmatpush.msra.mxu0 %v717
    %2154 = vmatpush.msra.mxu0 %v713
    %2155 = vmatpush.msra.mxu0 %v709
    %2156 = vmatpush.msra.mxu0 %v705
    %2157 = vmatpush.msra.mxu0 %v701
    %2158 = vmatpush.msra.mxu0 %v697
    %2159 = vmatpush.msra.mxu0 %v693
    %2160 = vmatpush.msra.mxu0 %v689
    %2161 = vmatpush.msra.mxu0 %v685
    %2162 = vmatpush.msra.mxu0 %v681
    %2163 = vmatpush.msra.mxu0 %v677
    %2164 = vmatpush.msra.mxu0 %v673
    %2165 = vmatpush.msra.mxu0 %v669
    %2166 = vmatpush.msra.mxu0 %v665
    %2167 = vmatmul.f32.gmra.mxu0 %v2110
    %v2168 = vpop.f32.mrf.mxu0
    %v2169 = vadd.f32 0.0, %v2168
    %2170 = vdwg.mxu0
    %2171 = vmatpush.msra.mxu0 %v726
    %2172 = vmatpush.msra.mxu0 %v722
    %2173 = vmatpush.msra.mxu0 %v718
    %2174 = vmatpush.msra.mxu0 %v714
    %2175 = vmatpush.msra.mxu0 %v710
    %2176 = vmatpush.msra.mxu0 %v706
    %2177 = vmatpush.msra.mxu0 %v702
    %2178 = vmatpush.msra.mxu0 %v698
    %2179 = vmatpush.msra.mxu0 %v694
    %2180 = vmatpush.msra.mxu0 %v690
    %2181 = vmatpush.msra.mxu0 %v686
    %2182 = vmatpush.msra.mxu0 %v682
    %2183 = vmatpush.msra.mxu0 %v678
    %2184 = vmatpush.msra.mxu0 %v674
    %2185 = vmatpush.msra.mxu0 %v670
    %2186 = vmatpush.msra.mxu0 %v666
    %2187 = vmatmul.f32.gmra.mxu0 %v2110
    %v2188 = vpop.f32.mrf.mxu0
    %v2189 = vadd.f32 0.0, %v2188
    %2190 = vdwg.mxu0
    %v2192 = vrot.slane %v2110, 2
    %2194 = vmatpush.msra.mxu0 %v787
    %2195 = vmatpush.msra.mxu0 %v783
    %2196 = vmatpush.msra.mxu0 %v779
    %2197 = vmatpush.msra.mxu0 %v775
    %2198 = vmatpush.msra.mxu0 %v771
    %2199 = vmatpush.msra.mxu0 %v767
    %2200 = vmatpush.msra.mxu0 %v763
    %2201 = vmatpush.msra.mxu0 %v759
    %2202 = vmatpush.msra.mxu0 %v755
    %2203 = vmatpush.msra.mxu0 %v751
    %2204 = vmatpush.msra.mxu0 %v747
    %2205 = vmatpush.msra.mxu0 %v743
    %2206 = vmatpush.msra.mxu0 %v739
    %2207 = vmatpush.msra.mxu0 %v735
    %2208 = vmatpush.msra.mxu0 %v731
    %2209 = vmatpush.msra.mxu0 %v727
    %2210 = vmatmul.f32.gmra.mxu0 %v2192
    %v2211 = vpop.f32.mrf.mxu0
    %v2212 = vadd.f32 0.0, %v2211
    %2213 = vdwg.mxu0
    %2214 = vmatpush.msra.mxu0 %v788
    %2215 = vmatpush.msra.mxu0 %v784
    %2216 = vmatpush.msra.mxu0 %v780
    %2217 = vmatpush.msra.mxu0 %v776
    %2218 = vmatpush.msra.mxu0 %v772
    %2219 = vmatpush.msra.mxu0 %v768
    %2220 = vmatpush.msra.mxu0 %v764
    %2221 = vmatpush.msra.mxu0 %v760
    %2222 = vmatpush.msra.mxu0 %v756
    %2223 = vmatpush.msra.mxu0 %v752
    %2224 = vmatpush.msra.mxu0 %v748
    %2225 = vmatpush.msra.mxu0 %v744
    %2226 = vmatpush.msra.mxu0 %v740
    %2227 = vmatpush.msra.mxu0 %v736
    %2228 = vmatpush.msra.mxu0 %v732
    %2229 = vmatpush.msra.mxu0 %v728
    %2230 = vmatmul.f32.gmra.mxu0 %v2192
    %v2231 = vpop.f32.mrf.mxu0
    %v2232 = vadd.f32 0.0, %v2231
    %2233 = vdwg.mxu0
    %2234 = vmatpush.msra.mxu0 %v789
    %2235 = vmatpush.msra.mxu0 %v785
    %2236 = vmatpush.msra.mxu0 %v781
    %2237 = vmatpush.msra.mxu0 %v777
    %2238 = vmatpush.msra.mxu0 %v773
    %2239 = vmatpush.msra.mxu0 %v769
    %2240 = vmatpush.msra.mxu0 %v765
    %2241 = vmatpush.msra.mxu0 %v761
    %2242 = vmatpush.msra.mxu0 %v757
    %2243 = vmatpush.msra.mxu0 %v753
    %2244 = vmatpush.msra.mxu0 %v749
    %2245 = vmatpush.msra.mxu0 %v745
    %2246 = vmatpush.msra.mxu0 %v741
    %2247 = vmatpush.msra.mxu0 %v737
    %2248 = vmatpush.msra.mxu0 %v733
    %2249 = vmatpush.msra.mxu0 %v729
    %2250 = vmatmul.f32.gmra.mxu0 %v2192
    %v2251 = vpop.f32.mrf.mxu0
    %v2252 = vadd.f32 0.0, %v2251
    %2253 = vdwg.mxu0
    %2254 = vmatpush.msra.mxu0 %v790
    %2255 = vmatpush.msra.mxu0 %v786
    %2256 = vmatpush.msra.mxu0 %v782
    %2257 = vmatpush.msra.mxu0 %v778
    %2258 = vmatpush.msra.mxu0 %v774
    %2259 = vmatpush.msra.mxu0 %v770
    %2260 = vmatpush.msra.mxu0 %v766
    %2261 = vmatpush.msra.mxu0 %v762
    %2262 = vmatpush.msra.mxu0 %v758
    %2263 = vmatpush.msra.mxu0 %v754
    %2264 = vmatpush.msra.mxu0 %v750
    %2265 = vmatpush.msra.mxu0 %v746
    %2266 = vmatpush.msra.mxu0 %v742
    %2267 = vmatpush.msra.mxu0 %v738
    %2268 = vmatpush.msra.mxu0 %v734
    %2269 = vmatpush.msra.mxu0 %v730
    %2270 = vmatmul.f32.gmra.mxu0 %v2192
    %v2271 = vpop.f32.mrf.mxu0
    %v2272 = vadd.f32 0.0, %v2271
    %2273 = vdwg.mxu0
    %v2278 = vrot.slane %v2129, 4
    %v2279 = vrot.slane %v2149, 4
    %v2280 = vrot.slane %v2169, 4
    %v2281 = vrot.slane %v2189, 4
    %v2282 = vrot.slane %v2129, 5
    %v2283 = vrot.slane %v2149, 5
    %v2284 = vrot.slane %v2169, 5
    %v2285 = vrot.slane %v2189, 5
    %v2294 = vadd.f32 %v407, %v2278
    %v2295 = vadd.f32 %v430, %v2279
    %v2296 = vadd.f32 %v453, %v2280
    %v2297 = vadd.f32 %v476, %v2281
    %v2298 = vadd.f32 %v410, %v2282
    %v2299 = vadd.f32 %v433, %v2283
    %v2300 = vadd.f32 %v456, %v2284
    %v2301 = vadd.f32 %v479, %v2285
    %v2306 = vrot.slane %v2212, 5
    %v2307 = vrot.slane %v2232, 5
    %v2308 = vrot.slane %v2252, 5
    %v2309 = vrot.slane %v2272, 5
    %v2310 = vrot.slane %v2212, 6
    %v2311 = vrot.slane %v2232, 6
    %v2312 = vrot.slane %v2252, 6
    %v2313 = vrot.slane %v2272, 6
    %v2322 = vadd.f32 %v499, %v2306
    %v2323 = vadd.f32 %v522, %v2307
    %v2324 = vadd.f32 %v545, %v2308
    %v2325 = vadd.f32 %v568, %v2309
    %v2326 = vadd.f32 %v502, %v2310
    %v2327 = vadd.f32 %v525, %v2311
    %v2328 = vadd.f32 %v548, %v2312
    %v2329 = vadd.f32 %v571, %v2313
    %v2338 = vrot.slane %v2294, 4
    %v2339 = vrot.slane %v2298, 3
    %v2340 = vsel %vm1012, %v2339, %v2338
    %v2341 = vrot.slane %v2295, 4
    %v2342 = vrot.slane %v2299, 3
    %v2343 = vsel %vm1012, %v2342, %v2341
    %v2344 = vrot.slane %v2296, 4
    %v2345 = vrot.slane %v2300, 3
    %v2346 = vsel %vm1012, %v2345, %v2344
    %v2347 = vrot.slane %v2297, 4
    %v2348 = vrot.slane %v2301, 3
    %v2349 = vsel %vm1012, %v2348, %v2347
    %v2362 = vrot.slane %v2322, 1
    %v2363 = vsel %vm1034, %v2326, %v2362
    %v2364 = vrot.slane %v2323, 1
    %v2365 = vsel %vm1034, %v2327, %v2364
    %v2366 = vrot.slane %v2324, 1
    %v2367 = vsel %vm1034, %v2328, %v2366
    %v2368 = vrot.slane %v2325, 1
    %v2369 = vsel %vm1034, %v2329, %v2368
    %v2374 = vsel %vm1049, %v2340, %v2363
    %v2375 = vsel %vm1049, %v2343, %v2365
    %v2376 = vsel %vm1049, %v2346, %v2367
    %v2377 = vsel %vm1049, %v2349, %v2369
    %v2378 = vxor.u32 %v2374, 2147483648
    %v2379 = vmul.f32 %v2378, 1.442695
    %v2380 = vpow.pop %v2379
    %v2381 = vadd.f32 %v2380, 1.0
    %v2382 = vrcp.pop %v2381
    %v2383 = vmul.f32 %v2381, %v2382
    %v2384 = vsub.f32 1.0, %v2383
    %v2385 = vmul.f32 %v2382, %v2384
    %v2386 = vadd.f32 %v2382, %v2385
    %vm2387 = vweird.f32 %v2381
    %vm2388 = vweird.f32 %v2382
    %vm2389 = vmor %vm2387, %vm2388
    %v2390 = vsel %vm2389, %v2382, %v2386
    %v2391 = vand.u32 2147483647, %v2381
    %vm2392 = vcmp.eq.f32.partialorder %v2391, 8.507059e+37
    %v2393 = vand.u32 %v2381, 2147483648
    %v2394 = vor.u32 1.1754944e-38, %v2393
    %v2395 = vsel %vm2392, %v2394, %v2390
    %v2396 = vmul.f32 1.0, %v2395
    %v2397 = vxor.u32 %v2375, 2147483648
    %v2398 = vmul.f32 %v2397, 1.442695
    %v2399 = vpow.pop %v2398
    %v2400 = vadd.f32 %v2399, 1.0
    %v2401 = vrcp.pop %v2400
    %v2402 = vmul.f32 %v2400, %v2401
    %v2403 = vsub.f32 1.0, %v2402
    %v2404 = vmul.f32 %v2401, %v2403
    %v2405 = vadd.f32 %v2401, %v2404
    %vm2406 = vweird.f32 %v2400
    %vm2407 = vweird.f32 %v2401
    %vm2408 = vmor %vm2406, %vm2407
    %v2409 = vsel %vm2408, %v2401, %v2405
    %v2410 = vand.u32 2147483647, %v2400
    %vm2411 = vcmp.eq.f32.partialorder %v2410, 8.507059e+37
    %v2412 = vand.u32 %v2400, 2147483648
    %v2413 = vor.u32 1.1754944e-38, %v2412
    %v2414 = vsel %vm2411, %v2413, %v2409
    %v2415 = vmul.f32 1.0, %v2414
    %v2416 = vtanh.pop %v2376
    %v2417 = vxor.u32 %v2377, 2147483648
    %v2418 = vmul.f32 %v2417, 1.442695
    %v2419 = vpow.pop %v2418
    %v2420 = vadd.f32 %v2419, 1.0
    %v2421 = vrcp.pop %v2420
    %v2422 = vmul.f32 %v2420, %v2421
    %v2423 = vsub.f32 1.0, %v2422
    %v2424 = vmul.f32 %v2421, %v2423
    %v2425 = vadd.f32 %v2421, %v2424
    %vm2426 = vweird.f32 %v2420
    %vm2427 = vweird.f32 %v2421
    %vm2428 = vmor %vm2426, %vm2427
    %v2429 = vsel %vm2428, %v2421, %v2425
    %v2430 = vand.u32 2147483647, %v2420
    %vm2431 = vcmp.eq.f32.partialorder %v2430, 8.507059e+37
    %v2432 = vand.u32 %v2420, 2147483648
    %v2433 = vor.u32 1.1754944e-38, %v2432
    %v2434 = vsel %vm2431, %v2433, %v2429
    %v2435 = vmul.f32 1.0, %v2434
    %v2436 = vmul.f32 %v2415, %v2108
    %v2437 = vmul.f32 %v2396, %v2416
    %v2438 = vadd.f32 %v2436, %v2437
    %v2439 = vtanh.pop %v2438
    %v2440 = vmul.f32 %v2435, %v2439
    %2441 = vmatpush.msra.mxu0 %v723
    %2442 = vmatpush.msra.mxu0 %v719
    %2443 = vmatpush.msra.mxu0 %v715
    %2444 = vmatpush.msra.mxu0 %v711
    %2445 = vmatpush.msra.mxu0 %v707
    %2446 = vmatpush.msra.mxu0 %v703
    %2447 = vmatpush.msra.mxu0 %v699
    %2448 = vmatpush.msra.mxu0 %v695
    %2449 = vmatpush.msra.mxu0 %v691
    %2450 = vmatpush.msra.mxu0 %v687
    %2451 = vmatpush.msra.mxu0 %v683
    %2452 = vmatpush.msra.mxu0 %v679
    %2453 = vmatpush.msra.mxu0 %v675
    %2454 = vmatpush.msra.mxu0 %v671
    %2455 = vmatpush.msra.mxu0 %v667
    %2456 = vmatpush.msra.mxu0 %v663
    %2457 = vmatmul.f32.gmra.mxu0 %v2440
    %v2458 = vpop.f32.mrf.mxu0
    %v2459 = vadd.f32 0.0, %v2458
    %2460 = vdwg.mxu0
    %2461 = vmatpush.msra.mxu0 %v724
    %2462 = vmatpush.msra.mxu0 %v720
    %2463 = vmatpush.msra.mxu0 %v716
    %2464 = vmatpush.msra.mxu0 %v712
    %2465 = vmatpush.msra.mxu0 %v708
    %2466 = vmatpush.msra.mxu0 %v704
    %2467 = vmatpush.msra.mxu0 %v700
    %2468 = vmatpush.msra.mxu0 %v696
    %2469 = vmatpush.msra.mxu0 %v692
    %2470 = vmatpush.msra.mxu0 %v688
    %2471 = vmatpush.msra.mxu0 %v684
    %2472 = vmatpush.msra.mxu0 %v680
    %2473 = vmatpush.msra.mxu0 %v676
    %2474 = vmatpush.msra.mxu0 %v672
    %2475 = vmatpush.msra.mxu0 %v668
    %2476 = vmatpush.msra.mxu0 %v664
    %2477 = vmatmul.f32.gmra.mxu0 %v2440
    %v2478 = vpop.f32.mrf.mxu0
    %v2479 = vadd.f32 0.0, %v2478
    %2480 = vdwg.mxu0
    %2481 = vmatpush.msra.mxu0 %v725
    %2482 = vmatpush.msra.mxu0 %v721
    %2483 = vmatpush.msra.mxu0 %v717
    %2484 = vmatpush.msra.mxu0 %v713
    %2485 = vmatpush.msra.mxu0 %v709
    %2486 = vmatpush.msra.mxu0 %v705
    %2487 = vmatpush.msra.mxu0 %v701
    %2488 = vmatpush.msra.mxu0 %v697
    %2489 = vmatpush.msra.mxu0 %v693
    %2490 = vmatpush.msra.mxu0 %v689
    %2491 = vmatpush.msra.mxu0 %v685
    %2492 = vmatpush.msra.mxu0 %v681
    %2493 = vmatpush.msra.mxu0 %v677
    %2494 = vmatpush.msra.mxu0 %v673
    %2495 = vmatpush.msra.mxu0 %v669
    %2496 = vmatpush.msra.mxu0 %v665
    %2497 = vmatmul.f32.gmra.mxu0 %v2440
    %v2498 = vpop.f32.mrf.mxu0
    %v2499 = vadd.f32 0.0, %v2498
    %2500 = vdwg.mxu0
    %2501 = vmatpush.msra.mxu0 %v726
    %2502 = vmatpush.msra.mxu0 %v722
    %2503 = vmatpush.msra.mxu0 %v718
    %2504 = vmatpush.msra.mxu0 %v714
    %2505 = vmatpush.msra.mxu0 %v710
    %2506 = vmatpush.msra.mxu0 %v706
    %2507 = vmatpush.msra.mxu0 %v702
    %2508 = vmatpush.msra.mxu0 %v698
    %2509 = vmatpush.msra.mxu0 %v694
    %2510 = vmatpush.msra.mxu0 %v690
    %2511 = vmatpush.msra.mxu0 %v686
    %2512 = vmatpush.msra.mxu0 %v682
    %2513 = vmatpush.msra.mxu0 %v678
    %2514 = vmatpush.msra.mxu0 %v674
    %2515 = vmatpush.msra.mxu0 %v670
    %2516 = vmatpush.msra.mxu0 %v666
    %2517 = vmatmul.f32.gmra.mxu0 %v2440
    %v2518 = vpop.f32.mrf.mxu0
    %v2519 = vadd.f32 0.0, %v2518
    %2520 = vdwg.mxu0
    %v2522 = vrot.slane %v2440, 2
    %2524 = vmatpush.msra.mxu0 %v787
    %2525 = vmatpush.msra.mxu0 %v783
    %2526 = vmatpush.msra.mxu0 %v779
    %2527 = vmatpush.msra.mxu0 %v775
    %2528 = vmatpush.msra.mxu0 %v771
    %2529 = vmatpush.msra.mxu0 %v767
    %2530 = vmatpush.msra.mxu0 %v763
    %2531 = vmatpush.msra.mxu0 %v759
    %2532 = vmatpush.msra.mxu0 %v755
    %2533 = vmatpush.msra.mxu0 %v751
    %2534 = vmatpush.msra.mxu0 %v747
    %2535 = vmatpush.msra.mxu0 %v743
    %2536 = vmatpush.msra.mxu0 %v739
    %2537 = vmatpush.msra.mxu0 %v735
    %2538 = vmatpush.msra.mxu0 %v731
    %2539 = vmatpush.msra.mxu0 %v727
    %2540 = vmatmul.f32.gmra.mxu0 %v2522
    %v2541 = vpop.f32.mrf.mxu0
    %v2542 = vadd.f32 0.0, %v2541
    %2543 = vdwg.mxu0
    %2544 = vmatpush.msra.mxu0 %v788
    %2545 = vmatpush.msra.mxu0 %v784
    %2546 = vmatpush.msra.mxu0 %v780
    %2547 = vmatpush.msra.mxu0 %v776
    %2548 = vmatpush.msra.mxu0 %v772
    %2549 = vmatpush.msra.mxu0 %v768
    %2550 = vmatpush.msra.mxu0 %v764
    %2551 = vmatpush.msra.mxu0 %v760
    %2552 = vmatpush.msra.mxu0 %v756
    %2553 = vmatpush.msra.mxu0 %v752
    %2554 = vmatpush.msra.mxu0 %v748
    %2555 = vmatpush.msra.mxu0 %v744
    %2556 = vmatpush.msra.mxu0 %v740
    %2557 = vmatpush.msra.mxu0 %v736
    %2558 = vmatpush.msra.mxu0 %v732
    %2559 = vmatpush.msra.mxu0 %v728
    %2560 = vmatmul.f32.gmra.mxu0 %v2522
    %v2561 = vpop.f32.mrf.mxu0
    %v2562 = vadd.f32 0.0, %v2561
    %2563 = vdwg.mxu0
    %2564 = vmatpush.msra.mxu0 %v789
    %2565 = vmatpush.msra.mxu0 %v785
    %2566 = vmatpush.msra.mxu0 %v781
    %2567 = vmatpush.msra.mxu0 %v777
    %2568 = vmatpush.msra.mxu0 %v773
    %2569 = vmatpush.msra.mxu0 %v769
    %2570 = vmatpush.msra.mxu0 %v765
    %2571 = vmatpush.msra.mxu0 %v761
    %2572 = vmatpush.msra.mxu0 %v757
    %2573 = vmatpush.msra.mxu0 %v753
    %2574 = vmatpush.msra.mxu0 %v749
    %2575 = vmatpush.msra.mxu0 %v745
    %2576 = vmatpush.msra.mxu0 %v741
    %2577 = vmatpush.msra.mxu0 %v737
    %2578 = vmatpush.msra.mxu0 %v733
    %2579 = vmatpush.msra.mxu0 %v729
    %2580 = vmatmul.f32.gmra.mxu0 %v2522
    %v2581 = vpop.f32.mrf.mxu0
    %v2582 = vadd.f32 0.0, %v2581
    %2583 = vdwg.mxu0
    %2584 = vmatpush.msra.mxu0 %v790
    %2585 = vmatpush.msra.mxu0 %v786
    %2586 = vmatpush.msra.mxu0 %v782
    %2587 = vmatpush.msra.mxu0 %v778
    %2588 = vmatpush.msra.mxu0 %v774
    %2589 = vmatpush.msra.mxu0 %v770
    %2590 = vmatpush.msra.mxu0 %v766
    %2591 = vmatpush.msra.mxu0 %v762
    %2592 = vmatpush.msra.mxu0 %v758
    %2593 = vmatpush.msra.mxu0 %v754
    %2594 = vmatpush.msra.mxu0 %v750
    %2595 = vmatpush.msra.mxu0 %v746
    %2596 = vmatpush.msra.mxu0 %v742
    %2597 = vmatpush.msra.mxu0 %v738
    %2598 = vmatpush.msra.mxu0 %v734
    %2599 = vmatpush.msra.mxu0 %v730
    %2600 = vmatmul.f32.gmra.mxu0 %v2522
    %v2601 = vpop.f32.mrf.mxu0
    %v2602 = vadd.f32 0.0, %v2601
    %2603 = vdwg.mxu0
    %v2608 = vrot.slane %v2459, 3
    %v2609 = vrot.slane %v2479, 3
    %v2610 = vrot.slane %v2499, 3
    %v2611 = vrot.slane %v2519, 3
    %v2612 = vrot.slane %v2459, 4
    %v2613 = vrot.slane %v2479, 4
    %v2614 = vrot.slane %v2499, 4
    %v2615 = vrot.slane %v2519, 4
    %v2624 = vadd.f32 %v407, %v2608
    %v2625 = vadd.f32 %v430, %v2609
    %v2626 = vadd.f32 %v453, %v2610
    %v2627 = vadd.f32 %v476, %v2611
    %v2628 = vadd.f32 %v410, %v2612
    %v2629 = vadd.f32 %v433, %v2613
    %v2630 = vadd.f32 %v456, %v2614
    %v2631 = vadd.f32 %v479, %v2615
    %v2636 = vrot.slane %v2542, 6
    %v2637 = vrot.slane %v2562, 6
    %v2638 = vrot.slane %v2582, 6
    %v2639 = vrot.slane %v2602, 6
    %v2640 = vrot.slane %v2542, 7
    %v2641 = vrot.slane %v2562, 7
    %v2642 = vrot.slane %v2582, 7
    %v2643 = vrot.slane %v2602, 7
    %v2652 = vadd.f32 %v499, %v2636
    %v2653 = vadd.f32 %v522, %v2637
    %v2654 = vadd.f32 %v545, %v2638
    %v2655 = vadd.f32 %v568, %v2639
    %v2656 = vadd.f32 %v502, %v2640
    %v2657 = vadd.f32 %v525, %v2641
    %v2658 = vadd.f32 %v548, %v2642
    %v2659 = vadd.f32 %v571, %v2643
    %v2668 = vrot.slane %v2624, 5
    %v2669 = vrot.slane %v2628, 4
    %v2670 = vsel %vm1012, %v2669, %v2668
    %v2671 = vrot.slane %v2625, 5
    %v2672 = vrot.slane %v2629, 4
    %v2673 = vsel %vm1012, %v2672, %v2671
    %v2674 = vrot.slane %v2626, 5
    %v2675 = vrot.slane %v2630, 4
    %v2676 = vsel %vm1012, %v2675, %v2674
    %v2677 = vrot.slane %v2627, 5
    %v2678 = vrot.slane %v2631, 4
    %v2679 = vsel %vm1012, %v2678, %v2677
    %v2692 = vrot.slane %v2656, 7
    %v2693 = vsel %vm1034, %v2692, %v2652
    %v2694 = vrot.slane %v2657, 7
    %v2695 = vsel %vm1034, %v2694, %v2653
    %v2696 = vrot.slane %v2658, 7
    %v2697 = vsel %vm1034, %v2696, %v2654
    %v2698 = vrot.slane %v2659, 7
    %v2699 = vsel %vm1034, %v2698, %v2655
    %v2704 = vsel %vm1049, %v2670, %v2693
    %v2705 = vsel %vm1049, %v2673, %v2695
    %v2706 = vsel %vm1049, %v2676, %v2697
    %v2707 = vsel %vm1049, %v2679, %v2699
    %v2708 = vxor.u32 %v2704, 2147483648
    %v2709 = vmul.f32 %v2708, 1.442695
    %v2710 = vpow.pop %v2709
    %v2711 = vadd.f32 %v2710, 1.0
    %v2712 = vrcp.pop %v2711
    %v2713 = vmul.f32 %v2711, %v2712
    %v2714 = vsub.f32 1.0, %v2713
    %v2715 = vmul.f32 %v2712, %v2714
    %v2716 = vadd.f32 %v2712, %v2715
    %vm2717 = vweird.f32 %v2711
    %vm2718 = vweird.f32 %v2712
    %vm2719 = vmor %vm2717, %vm2718
    %v2720 = vsel %vm2719, %v2712, %v2716
    %v2721 = vand.u32 2147483647, %v2711
    %vm2722 = vcmp.eq.f32.partialorder %v2721, 8.507059e+37
    %v2723 = vand.u32 %v2711, 2147483648
    %v2724 = vor.u32 1.1754944e-38, %v2723
    %v2725 = vsel %vm2722, %v2724, %v2720
    %v2726 = vmul.f32 1.0, %v2725
    %v2727 = vxor.u32 %v2705, 2147483648
    %v2728 = vmul.f32 %v2727, 1.442695
    %v2729 = vpow.pop %v2728
    %v2730 = vadd.f32 %v2729, 1.0
    %v2731 = vrcp.pop %v2730
    %v2732 = vmul.f32 %v2730, %v2731
    %v2733 = vsub.f32 1.0, %v2732
    %v2734 = vmul.f32 %v2731, %v2733
    %v2735 = vadd.f32 %v2731, %v2734
    %vm2736 = vweird.f32 %v2730
    %vm2737 = vweird.f32 %v2731
    %vm2738 = vmor %vm2736, %vm2737
    %v2739 = vsel %vm2738, %v2731, %v2735
    %v2740 = vand.u32 2147483647, %v2730
    %vm2741 = vcmp.eq.f32.partialorder %v2740, 8.507059e+37
    %v2742 = vand.u32 %v2730, 2147483648
    %v2743 = vor.u32 1.1754944e-38, %v2742
    %v2744 = vsel %vm2741, %v2743, %v2739
    %v2745 = vmul.f32 1.0, %v2744
    %v2746 = vtanh.pop %v2706
    %v2747 = vxor.u32 %v2707, 2147483648
    %v2748 = vmul.f32 %v2747, 1.442695
    %v2749 = vpow.pop %v2748
    %v2750 = vadd.f32 %v2749, 1.0
    %v2751 = vrcp.pop %v2750
    %v2752 = vmul.f32 %v2750, %v2751
    %v2753 = vsub.f32 1.0, %v2752
    %v2754 = vmul.f32 %v2751, %v2753
    %v2755 = vadd.f32 %v2751, %v2754
    %vm2756 = vweird.f32 %v2750
    %vm2757 = vweird.f32 %v2751
    %vm2758 = vmor %vm2756, %vm2757
    %v2759 = vsel %vm2758, %v2751, %v2755
    %v2760 = vand.u32 2147483647, %v2750
    %vm2761 = vcmp.eq.f32.partialorder %v2760, 8.507059e+37
    %v2762 = vand.u32 %v2750, 2147483648
    %v2763 = vor.u32 1.1754944e-38, %v2762
    %v2764 = vsel %vm2761, %v2763, %v2759
    %v2765 = vmul.f32 1.0, %v2764
    %v2766 = vmul.f32 %v2745, %v2438
    %v2767 = vmul.f32 %v2726, %v2746
    %v2768 = vadd.f32 %v2766, %v2767
    %v2769 = vtanh.pop %v2768
    %v2770 = vmul.f32 %v2765, %v2769
    %2771 = vmatpush.msra.mxu0 %v723
    %2772 = vmatpush.msra.mxu0 %v719
    %2773 = vmatpush.msra.mxu0 %v715
    %2774 = vmatpush.msra.mxu0 %v711
    %2775 = vmatpush.msra.mxu0 %v707
    %2776 = vmatpush.msra.mxu0 %v703
    %2777 = vmatpush.msra.mxu0 %v699
    %2778 = vmatpush.msra.mxu0 %v695
    %2779 = vmatpush.msra.mxu0 %v691
    %2780 = vmatpush.msra.mxu0 %v687
    %2781 = vmatpush.msra.mxu0 %v683
    %2782 = vmatpush.msra.mxu0 %v679
    %2783 = vmatpush.msra.mxu0 %v675
    %2784 = vmatpush.msra.mxu0 %v671
    %2785 = vmatpush.msra.mxu0 %v667
    %2786 = vmatpush.msra.mxu0 %v663
    %2787 = vmatmul.f32.gmra.mxu0 %v2770
    %v2788 = vpop.f32.mrf.mxu0
    %v2789 = vadd.f32 0.0, %v2788
    %2790 = vdwg.mxu0
    %2791 = vmatpush.msra.mxu0 %v724
    %2792 = vmatpush.msra.mxu0 %v720
    %2793 = vmatpush.msra.mxu0 %v716
    %2794 = vmatpush.msra.mxu0 %v712
    %2795 = vmatpush.msra.mxu0 %v708
    %2796 = vmatpush.msra.mxu0 %v704
    %2797 = vmatpush.msra.mxu0 %v700
    %2798 = vmatpush.msra.mxu0 %v696
    %2799 = vmatpush.msra.mxu0 %v692
    %2800 = vmatpush.msra.mxu0 %v688
    %2801 = vmatpush.msra.mxu0 %v684
    %2802 = vmatpush.msra.mxu0 %v680
    %2803 = vmatpush.msra.mxu0 %v676
    %2804 = vmatpush.msra.mxu0 %v672
    %2805 = vmatpush.msra.mxu0 %v668
    %2806 = vmatpush.msra.mxu0 %v664
    %2807 = vmatmul.f32.gmra.mxu0 %v2770
    %v2808 = vpop.f32.mrf.mxu0
    %v2809 = vadd.f32 0.0, %v2808
    %2810 = vdwg.mxu0
    %2811 = vmatpush.msra.mxu0 %v725
    %2812 = vmatpush.msra.mxu0 %v721
    %2813 = vmatpush.msra.mxu0 %v717
    %2814 = vmatpush.msra.mxu0 %v713
    %2815 = vmatpush.msra.mxu0 %v709
    %2816 = vmatpush.msra.mxu0 %v705
    %2817 = vmatpush.msra.mxu0 %v701
    %2818 = vmatpush.msra.mxu0 %v697
    %2819 = vmatpush.msra.mxu0 %v693
    %2820 = vmatpush.msra.mxu0 %v689
    %2821 = vmatpush.msra.mxu0 %v685
    %2822 = vmatpush.msra.mxu0 %v681
    %2823 = vmatpush.msra.mxu0 %v677
    %2824 = vmatpush.msra.mxu0 %v673
    %2825 = vmatpush.msra.mxu0 %v669
    %2826 = vmatpush.msra.mxu0 %v665
    %2827 = vmatmul.f32.gmra.mxu0 %v2770
    %v2828 = vpop.f32.mrf.mxu0
    %v2829 = vadd.f32 0.0, %v2828
    %2830 = vdwg.mxu0
    %2831 = vmatpush.msra.mxu0 %v726
    %2832 = vmatpush.msra.mxu0 %v722
    %2833 = vmatpush.msra.mxu0 %v718
    %2834 = vmatpush.msra.mxu0 %v714
    %2835 = vmatpush.msra.mxu0 %v710
    %2836 = vmatpush.msra.mxu0 %v706
    %2837 = vmatpush.msra.mxu0 %v702
    %2838 = vmatpush.msra.mxu0 %v698
    %2839 = vmatpush.msra.mxu0 %v694
    %2840 = vmatpush.msra.mxu0 %v690
    %2841 = vmatpush.msra.mxu0 %v686
    %2842 = vmatpush.msra.mxu0 %v682
    %2843 = vmatpush.msra.mxu0 %v678
    %2844 = vmatpush.msra.mxu0 %v674
    %2845 = vmatpush.msra.mxu0 %v670
    %2846 = vmatpush.msra.mxu0 %v666
    %2847 = vmatmul.f32.gmra.mxu0 %v2770
    %v2848 = vpop.f32.mrf.mxu0
    %v2849 = vadd.f32 0.0, %v2848
    %2850 = vdwg.mxu0
    %v2852 = vrot.slane %v2770, 2
    %2854 = vmatpush.msra.mxu0 %v787
    %2855 = vmatpush.msra.mxu0 %v783
    %2856 = vmatpush.msra.mxu0 %v779
    %2857 = vmatpush.msra.mxu0 %v775
    %2858 = vmatpush.msra.mxu0 %v771
    %2859 = vmatpush.msra.mxu0 %v767
    %2860 = vmatpush.msra.mxu0 %v763
    %2861 = vmatpush.msra.mxu0 %v759
    %2862 = vmatpush.msra.mxu0 %v755
    %2863 = vmatpush.msra.mxu0 %v751
    %2864 = vmatpush.msra.mxu0 %v747
    %2865 = vmatpush.msra.mxu0 %v743
    %2866 = vmatpush.msra.mxu0 %v739
    %2867 = vmatpush.msra.mxu0 %v735
    %2868 = vmatpush.msra.mxu0 %v731
    %2869 = vmatpush.msra.mxu0 %v727
    %2870 = vmatmul.f32.gmra.mxu0 %v2852
    %v2871 = vpop.f32.mrf.mxu0
    %v2872 = vadd.f32 0.0, %v2871
    %2873 = vdwg.mxu0
    %2874 = vmatpush.msra.mxu0 %v788
    %2875 = vmatpush.msra.mxu0 %v784
    %2876 = vmatpush.msra.mxu0 %v780
    %2877 = vmatpush.msra.mxu0 %v776
    %2878 = vmatpush.msra.mxu0 %v772
    %2879 = vmatpush.msra.mxu0 %v768
    %2880 = vmatpush.msra.mxu0 %v764
    %2881 = vmatpush.msra.mxu0 %v760
    %2882 = vmatpush.msra.mxu0 %v756
    %2883 = vmatpush.msra.mxu0 %v752
    %2884 = vmatpush.msra.mxu0 %v748
    %2885 = vmatpush.msra.mxu0 %v744
    %2886 = vmatpush.msra.mxu0 %v740
    %2887 = vmatpush.msra.mxu0 %v736
    %2888 = vmatpush.msra.mxu0 %v732
    %2889 = vmatpush.msra.mxu0 %v728
    %2890 = vmatmul.f32.gmra.mxu0 %v2852
    %v2891 = vpop.f32.mrf.mxu0
    %v2892 = vadd.f32 0.0, %v2891
    %2893 = vdwg.mxu0
    %2894 = vmatpush.msra.mxu0 %v789
    %2895 = vmatpush.msra.mxu0 %v785
    %2896 = vmatpush.msra.mxu0 %v781
    %2897 = vmatpush.msra.mxu0 %v777
    %2898 = vmatpush.msra.mxu0 %v773
    %2899 = vmatpush.msra.mxu0 %v769
    %2900 = vmatpush.msra.mxu0 %v765
    %2901 = vmatpush.msra.mxu0 %v761
    %2902 = vmatpush.msra.mxu0 %v757
    %2903 = vmatpush.msra.mxu0 %v753
    %2904 = vmatpush.msra.mxu0 %v749
    %2905 = vmatpush.msra.mxu0 %v745
    %2906 = vmatpush.msra.mxu0 %v741
    %2907 = vmatpush.msra.mxu0 %v737
    %2908 = vmatpush.msra.mxu0 %v733
    %2909 = vmatpush.msra.mxu0 %v729
    %2910 = vmatmul.f32.gmra.mxu0 %v2852
    %v2911 = vpop.f32.mrf.mxu0
    %v2912 = vadd.f32 0.0, %v2911
    %2913 = vdwg.mxu0
    %2914 = vmatpush.msra.mxu0 %v790
    %2915 = vmatpush.msra.mxu0 %v786
    %2916 = vmatpush.msra.mxu0 %v782
    %2917 = vmatpush.msra.mxu0 %v778
    %2918 = vmatpush.msra.mxu0 %v774
    %2919 = vmatpush.msra.mxu0 %v770
    %2920 = vmatpush.msra.mxu0 %v766
    %2921 = vmatpush.msra.mxu0 %v762
    %2922 = vmatpush.msra.mxu0 %v758
    %2923 = vmatpush.msra.mxu0 %v754
    %2924 = vmatpush.msra.mxu0 %v750
    %2925 = vmatpush.msra.mxu0 %v746
    %2926 = vmatpush.msra.mxu0 %v742
    %2927 = vmatpush.msra.mxu0 %v738
    %2928 = vmatpush.msra.mxu0 %v734
    %2929 = vmatpush.msra.mxu0 %v730
    %2930 = vmatmul.f32.gmra.mxu0 %v2852
    %v2931 = vpop.f32.mrf.mxu0
    %v2932 = vadd.f32 0.0, %v2931
    %2933 = vdwg.mxu0
    %v2938 = vrot.slane %v2789, 2
    %v2939 = vrot.slane %v2809, 2
    %v2940 = vrot.slane %v2829, 2
    %v2941 = vrot.slane %v2849, 2
    %v2942 = vrot.slane %v2789, 3
    %v2943 = vrot.slane %v2809, 3
    %v2944 = vrot.slane %v2829, 3
    %v2945 = vrot.slane %v2849, 3
    %v2954 = vadd.f32 %v407, %v2938
    %v2955 = vadd.f32 %v430, %v2939
    %v2956 = vadd.f32 %v453, %v2940
    %v2957 = vadd.f32 %v476, %v2941
    %v2958 = vadd.f32 %v410, %v2942
    %v2959 = vadd.f32 %v433, %v2943
    %v2960 = vadd.f32 %v456, %v2944
    %v2961 = vadd.f32 %v479, %v2945
    %v2966 = vrot.slane %v2872, 7
    %v2967 = vrot.slane %v2892, 7
    %v2968 = vrot.slane %v2912, 7
    %v2969 = vrot.slane %v2932, 7
    %v2978 = vadd.f32 %v499, %v2966
    %v2979 = vadd.f32 %v522, %v2967
    %v2980 = vadd.f32 %v545, %v2968
    %v2981 = vadd.f32 %v568, %v2969
    %v2982 = vadd.f32 %v502, %v2872
    %v2983 = vadd.f32 %v525, %v2892
    %v2984 = vadd.f32 %v548, %v2912
    %v2985 = vadd.f32 %v571, %v2932
    %v2994 = vrot.slane %v2954, 6
    %v2995 = vrot.slane %v2958, 5
    %v2996 = vsel %vm1012, %v2995, %v2994
    %v2997 = vrot.slane %v2955, 6
    %v2998 = vrot.slane %v2959, 5
    %v2999 = vsel %vm1012, %v2998, %v2997
    %v3000 = vrot.slane %v2956, 6
    %v3001 = vrot.slane %v2960, 5
    %v3002 = vsel %vm1012, %v3001, %v3000
    %v3003 = vrot.slane %v2957, 6
    %v3004 = vrot.slane %v2961, 5
    %v3005 = vsel %vm1012, %v3004, %v3003
    %v3018 = vrot.slane %v2978, 7
    %v3019 = vrot.slane %v2982, 6
    %v3020 = vsel %vm1034, %v3019, %v3018
    %v3021 = vrot.slane %v2979, 7
    %v3022 = vrot.slane %v2983, 6
    %v3023 = vsel %vm1034, %v3022, %v3021
    %v3024 = vrot.slane %v2980, 7
    %v3025 = vrot.slane %v2984, 6
    %v3026 = vsel %vm1034, %v3025, %v3024
    %v3027 = vrot.slane %v2981, 7
    %v3028 = vrot.slane %v2985, 6
    %v3029 = vsel %vm1034, %v3028, %v3027
    %v3034 = vsel %vm1049, %v2996, %v3020
    %v3035 = vsel %vm1049, %v2999, %v3023
    %v3036 = vsel %vm1049, %v3002, %v3026
    %v3037 = vsel %vm1049, %v3005, %v3029
    %v3038 = vxor.u32 %v3034, 2147483648
    %v3039 = vmul.f32 %v3038, 1.442695
    %v3040 = vpow.pop %v3039
    %v3041 = vadd.f32 %v3040, 1.0
    %v3042 = vrcp.pop %v3041
    %v3043 = vmul.f32 %v3041, %v3042
    %v3044 = vsub.f32 1.0, %v3043
    %v3045 = vmul.f32 %v3042, %v3044
    %v3046 = vadd.f32 %v3042, %v3045
    %vm3047 = vweird.f32 %v3041
    %vm3048 = vweird.f32 %v3042
    %vm3049 = vmor %vm3047, %vm3048
    %v3050 = vsel %vm3049, %v3042, %v3046
    %v3051 = vand.u32 2147483647, %v3041
    %vm3052 = vcmp.eq.f32.partialorder %v3051, 8.507059e+37
    %v3053 = vand.u32 %v3041, 2147483648
    %v3054 = vor.u32 1.1754944e-38, %v3053
    %v3055 = vsel %vm3052, %v3054, %v3050
    %v3056 = vmul.f32 1.0, %v3055
    %v3057 = vxor.u32 %v3035, 2147483648
    %v3058 = vmul.f32 %v3057, 1.442695
    %v3059 = vpow.pop %v3058
    %v3060 = vadd.f32 %v3059, 1.0
    %v3061 = vrcp.pop %v3060
    %v3062 = vmul.f32 %v3060, %v3061
    %v3063 = vsub.f32 1.0, %v3062
    %v3064 = vmul.f32 %v3061, %v3063
    %v3065 = vadd.f32 %v3061, %v3064
    %vm3066 = vweird.f32 %v3060
    %vm3067 = vweird.f32 %v3061
    %vm3068 = vmor %vm3066, %vm3067
    %v3069 = vsel %vm3068, %v3061, %v3065
    %v3070 = vand.u32 2147483647, %v3060
    %vm3071 = vcmp.eq.f32.partialorder %v3070, 8.507059e+37
    %v3072 = vand.u32 %v3060, 2147483648
    %v3073 = vor.u32 1.1754944e-38, %v3072
    %v3074 = vsel %vm3071, %v3073, %v3069
    %v3075 = vmul.f32 1.0, %v3074
    %v3076 = vtanh.pop %v3036
    %v3077 = vxor.u32 %v3037, 2147483648
    %v3078 = vmul.f32 %v3077, 1.442695
    %v3079 = vpow.pop %v3078
    %v3080 = vadd.f32 %v3079, 1.0
    %v3081 = vrcp.pop %v3080
    %v3082 = vmul.f32 %v3080, %v3081
    %v3083 = vsub.f32 1.0, %v3082
    %v3084 = vmul.f32 %v3081, %v3083
    %v3085 = vadd.f32 %v3081, %v3084
    %vm3086 = vweird.f32 %v3080
    %vm3087 = vweird.f32 %v3081
    %vm3088 = vmor %vm3086, %vm3087
    %v3089 = vsel %vm3088, %v3081, %v3085
    %v3090 = vand.u32 2147483647, %v3080
    %vm3091 = vcmp.eq.f32.partialorder %v3090, 8.507059e+37
    %v3092 = vand.u32 %v3080, 2147483648
    %v3093 = vor.u32 1.1754944e-38, %v3092
    %v3094 = vsel %vm3091, %v3093, %v3089
    %v3095 = vmul.f32 1.0, %v3094
    %v3096 = vmul.f32 %v3075, %v2768
    %v3097 = vmul.f32 %v3056, %v3076
    %v3098 = vadd.f32 %v3096, %v3097
    %v3099 = vtanh.pop %v3098
    %v3100 = vmul.f32 %v3095, %v3099
    %3101 = vmatpush.msra.mxu0 %v723
    %3102 = vmatpush.msra.mxu0 %v719
    %3103 = vmatpush.msra.mxu0 %v715
    %3104 = vmatpush.msra.mxu0 %v711
    %3105 = vmatpush.msra.mxu0 %v707
    %3106 = vmatpush.msra.mxu0 %v703
    %3107 = vmatpush.msra.mxu0 %v699
    %3108 = vmatpush.msra.mxu0 %v695
    %3109 = vmatpush.msra.mxu0 %v691
    %3110 = vmatpush.msra.mxu0 %v687
    %3111 = vmatpush.msra.mxu0 %v683
    %3112 = vmatpush.msra.mxu0 %v679
    %3113 = vmatpush.msra.mxu0 %v675
    %3114 = vmatpush.msra.mxu0 %v671
    %3115 = vmatpush.msra.mxu0 %v667
    %3116 = vmatpush.msra.mxu0 %v663
    %3117 = vmatmul.f32.gmra.mxu0 %v3100
    %v3118 = vpop.f32.mrf.mxu0
    %v3119 = vadd.f32 0.0, %v3118
    %3120 = vdwg.mxu0
    %3121 = vmatpush.msra.mxu0 %v724
    %3122 = vmatpush.msra.mxu0 %v720
    %3123 = vmatpush.msra.mxu0 %v716
    %3124 = vmatpush.msra.mxu0 %v712
    %3125 = vmatpush.msra.mxu0 %v708
    %3126 = vmatpush.msra.mxu0 %v704
    %3127 = vmatpush.msra.mxu0 %v700
    %3128 = vmatpush.msra.mxu0 %v696
    %3129 = vmatpush.msra.mxu0 %v692
    %3130 = vmatpush.msra.mxu0 %v688
    %3131 = vmatpush.msra.mxu0 %v684
    %3132 = vmatpush.msra.mxu0 %v680
    %3133 = vmatpush.msra.mxu0 %v676
    %3134 = vmatpush.msra.mxu0 %v672
    %3135 = vmatpush.msra.mxu0 %v668
    %3136 = vmatpush.msra.mxu0 %v664
    %3137 = vmatmul.f32.gmra.mxu0 %v3100
    %v3138 = vpop.f32.mrf.mxu0
    %v3139 = vadd.f32 0.0, %v3138
    %3140 = vdwg.mxu0
    %3141 = vmatpush.msra.mxu0 %v725
    %3142 = vmatpush.msra.mxu0 %v721
    %3143 = vmatpush.msra.mxu0 %v717
    %3144 = vmatpush.msra.mxu0 %v713
    %3145 = vmatpush.msra.mxu0 %v709
    %3146 = vmatpush.msra.mxu0 %v705
    %3147 = vmatpush.msra.mxu0 %v701
    %3148 = vmatpush.msra.mxu0 %v697
    %3149 = vmatpush.msra.mxu0 %v693
    %3150 = vmatpush.msra.mxu0 %v689
    %3151 = vmatpush.msra.mxu0 %v685
    %3152 = vmatpush.msra.mxu0 %v681
    %3153 = vmatpush.msra.mxu0 %v677
    %3154 = vmatpush.msra.mxu0 %v673
    %3155 = vmatpush.msra.mxu0 %v669
    %3156 = vmatpush.msra.mxu0 %v665
    %3157 = vmatmul.f32.gmra.mxu0 %v3100
    %v3158 = vpop.f32.mrf.mxu0
    %v3159 = vadd.f32 0.0, %v3158
    %3160 = vdwg.mxu0
    %v3162 = vrot.slane %v3100, 2
    %3164 = vmatpush.msra.mxu0 %v787
    %3165 = vmatpush.msra.mxu0 %v783
    %3166 = vmatpush.msra.mxu0 %v779
    %3167 = vmatpush.msra.mxu0 %v775
    %3168 = vmatpush.msra.mxu0 %v771
    %3169 = vmatpush.msra.mxu0 %v767
    %3170 = vmatpush.msra.mxu0 %v763
    %3171 = vmatpush.msra.mxu0 %v759
    %3172 = vmatpush.msra.mxu0 %v755
    %3173 = vmatpush.msra.mxu0 %v751
    %3174 = vmatpush.msra.mxu0 %v747
    %3175 = vmatpush.msra.mxu0 %v743
    %3176 = vmatpush.msra.mxu0 %v739
    %3177 = vmatpush.msra.mxu0 %v735
    %3178 = vmatpush.msra.mxu0 %v731
    %3179 = vmatpush.msra.mxu0 %v727
    %3180 = vmatmul.f32.gmra.mxu0 %v3162
    %v3181 = vpop.f32.mrf.mxu0
    %v3182 = vadd.f32 0.0, %v3181
    %3183 = vdwg.mxu0
    %3184 = vmatpush.msra.mxu0 %v788
    %3185 = vmatpush.msra.mxu0 %v784
    %3186 = vmatpush.msra.mxu0 %v780
    %3187 = vmatpush.msra.mxu0 %v776
    %3188 = vmatpush.msra.mxu0 %v772
    %3189 = vmatpush.msra.mxu0 %v768
    %3190 = vmatpush.msra.mxu0 %v764
    %3191 = vmatpush.msra.mxu0 %v760
    %3192 = vmatpush.msra.mxu0 %v756
    %3193 = vmatpush.msra.mxu0 %v752
    %3194 = vmatpush.msra.mxu0 %v748
    %3195 = vmatpush.msra.mxu0 %v744
    %3196 = vmatpush.msra.mxu0 %v740
    %3197 = vmatpush.msra.mxu0 %v736
    %3198 = vmatpush.msra.mxu0 %v732
    %3199 = vmatpush.msra.mxu0 %v728
    %3200 = vmatmul.f32.gmra.mxu0 %v3162
    %v3201 = vpop.f32.mrf.mxu0
    %v3202 = vadd.f32 0.0, %v3201
    %3203 = vdwg.mxu0
    %3204 = vmatpush.msra.mxu0 %v789
    %3205 = vmatpush.msra.mxu0 %v785
    %3206 = vmatpush.msra.mxu0 %v781
    %3207 = vmatpush.msra.mxu0 %v777
    %3208 = vmatpush.msra.mxu0 %v773
    %3209 = vmatpush.msra.mxu0 %v769
    %3210 = vmatpush.msra.mxu0 %v765
    %3211 = vmatpush.msra.mxu0 %v761
    %3212 = vmatpush.msra.mxu0 %v757
    %3213 = vmatpush.msra.mxu0 %v753
    %3214 = vmatpush.msra.mxu0 %v749
    %3215 = vmatpush.msra.mxu0 %v745
    %3216 = vmatpush.msra.mxu0 %v741
    %3217 = vmatpush.msra.mxu0 %v737
    %3218 = vmatpush.msra.mxu0 %v733
    %3219 = vmatpush.msra.mxu0 %v729
    %3220 = vmatmul.f32.gmra.mxu0 %v3162
    %v3221 = vpop.f32.mrf.mxu0
    %v3222 = vadd.f32 0.0, %v3221
    %3223 = vdwg.mxu0
    %v3227 = vrot.slane %v3119, 1
    %v3228 = vrot.slane %v3139, 1
    %v3229 = vrot.slane %v3159, 1
    %v3230 = vrot.slane %v3119, 2
    %v3231 = vrot.slane %v3139, 2
    %v3232 = vrot.slane %v3159, 2
    %v3239 = vadd.f32 %v407, %v3227
    %v3240 = vadd.f32 %v430, %v3228
    %v3241 = vadd.f32 %v453, %v3229
    %v3242 = vadd.f32 %v410, %v3230
    %v3243 = vadd.f32 %v433, %v3231
    %v3244 = vadd.f32 %v456, %v3232
    %v3248 = vrot.slane %v3182, 1
    %v3249 = vrot.slane %v3202, 1
    %v3250 = vrot.slane %v3222, 1
    %v3257 = vadd.f32 %v499, %v3182
    %v3258 = vadd.f32 %v522, %v3202
    %v3259 = vadd.f32 %v545, %v3222
    %v3260 = vadd.f32 %v502, %v3248
    %v3261 = vadd.f32 %v525, %v3249
    %v3262 = vadd.f32 %v548, %v3250
    %v3269 = vrot.slane %v3239, 7
    %v3270 = vrot.slane %v3242, 6
    %v3271 = vsel %vm1012, %v3270, %v3269
    %v3272 = vrot.slane %v3240, 7
    %v3273 = vrot.slane %v3243, 6
    %v3274 = vsel %vm1012, %v3273, %v3272
    %v3275 = vrot.slane %v3241, 7
    %v3276 = vrot.slane %v3244, 6
    %v3277 = vsel %vm1012, %v3276, %v3275
    %v3287 = vrot.slane %v3257, 6
    %v3288 = vrot.slane %v3260, 5
    %v3289 = vsel %vm1034, %v3288, %v3287
    %v3290 = vrot.slane %v3258, 6
    %v3291 = vrot.slane %v3261, 5
    %v3292 = vsel %vm1034, %v3291, %v3290
    %v3293 = vrot.slane %v3259, 6
    %v3294 = vrot.slane %v3262, 5
    %v3295 = vsel %vm1034, %v3294, %v3293
    %v3299 = vsel %vm1049, %v3271, %v3289
    %v3300 = vsel %vm1049, %v3274, %v3292
    %v3301 = vsel %vm1049, %v3277, %v3295
    %v3302 = vxor.u32 %v3299, 2147483648
    %v3303 = vmul.f32 %v3302, 1.442695
    %v3304 = vpow.pop %v3303
    %v3305 = vadd.f32 %v3304, 1.0
    %v3306 = vrcp.pop %v3305
    %v3307 = vmul.f32 %v3305, %v3306
    %v3308 = vsub.f32 1.0, %v3307
    %v3309 = vmul.f32 %v3306, %v3308
    %v3310 = vadd.f32 %v3306, %v3309
    %vm3311 = vweird.f32 %v3305
    %vm3312 = vweird.f32 %v3306
    %vm3313 = vmor %vm3311, %vm3312
    %v3314 = vsel %vm3313, %v3306, %v3310
    %v3315 = vand.u32 2147483647, %v3305
    %vm3316 = vcmp.eq.f32.partialorder %v3315, 8.507059e+37
    %v3317 = vand.u32 %v3305, 2147483648
    %v3318 = vor.u32 1.1754944e-38, %v3317
    %v3319 = vsel %vm3316, %v3318, %v3314
    %v3320 = vmul.f32 1.0, %v3319
    %v3321 = vxor.u32 %v3300, 2147483648
    %v3322 = vmul.f32 %v3321, 1.442695
    %v3323 = vpow.pop %v3322
    %v3324 = vadd.f32 %v3323, 1.0
    %v3325 = vrcp.pop %v3324
    %v3326 = vmul.f32 %v3324, %v3325
    %v3327 = vsub.f32 1.0, %v3326
    %v3328 = vmul.f32 %v3325, %v3327
    %v3329 = vadd.f32 %v3325, %v3328
    %vm3330 = vweird.f32 %v3324
    %vm3331 = vweird.f32 %v3325
    %vm3332 = vmor %vm3330, %vm3331
    %v3333 = vsel %vm3332, %v3325, %v3329
    %v3334 = vand.u32 2147483647, %v3324
    %vm3335 = vcmp.eq.f32.partialorder %v3334, 8.507059e+37
    %v3336 = vand.u32 %v3324, 2147483648
    %v3337 = vor.u32 1.1754944e-38, %v3336
    %v3338 = vsel %vm3335, %v3337, %v3333
    %v3339 = vmul.f32 1.0, %v3338
    %v3340 = vtanh.pop %v3301
    %v3341 = vmul.f32 %v3339, %v3098
    %v3342 = vmul.f32 %v3320, %v3340
    %v3343 = vadd.f32 %v3341, %v3342
    %v3345 = vrot.slane %v3343, 2
    %v3347 = vld [vmem:[%s12] sm:$0xff]
    %v3348 = vld [vmem:[%s12 + $0x8] sm:$0xff]
    %v3349 = vld [vmem:[%s12 + $0x10] sm:$0xff]
    %v3350 = vld [vmem:[%s12 + $0x18] sm:$0xff]
    %v3351 = vld [vmem:[%s12 + $0x20] sm:$0xff]
    %v3352 = vld [vmem:[%s12 + $0x28] sm:$0xff]
    %v3353 = vld [vmem:[%s12 + $0x30] sm:$0xff]
    %v3354 = vld [vmem:[%s12 + $0x38] sm:$0xff]
    %v3355 = vld [vmem:[%s12 + $0x40] sm:$0xff]
    %v3356 = vld [vmem:[%s12 + $0x48] sm:$0xff]
    %v3357 = vld [vmem:[%s12 + $0x50] sm:$0xff]
    %v3358 = vld [vmem:[%s12 + $0x58] sm:$0xff]
    %v3359 = vld [vmem:[%s12 + $0x60] sm:$0xff]
    %v3360 = vld [vmem:[%s12 + $0x68] sm:$0xff]
    %v3361 = vld [vmem:[%s12 + $0x70] sm:$0xff]
    %v3362 = vld [vmem:[%s12 + $0x78] sm:$0xff]
    %v3363 = vld [vmem:[%s12 + $0x80] sm:$0xff]
    %v3364 = vld [vmem:[%s12 + $0x88] sm:$0xff]
    %v3365 = vld [vmem:[%s12 + $0x90] sm:$0xff]
    %v3366 = vld [vmem:[%s12 + $0x98] sm:$0xff]
    %v3367 = vld [vmem:[%s12 + $0xa0] sm:$0xff]
    %v3368 = vld [vmem:[%s12 + $0xa8] sm:$0xff]
    %v3369 = vld [vmem:[%s12 + $0xb0] sm:$0xff]
    %v3370 = vld [vmem:[%s12 + $0xb8] sm:$0xff]
    %v3371 = vld [vmem:[%s12 + $0xc0] sm:$0xff]
    %v3372 = vld [vmem:[%s12 + $0xc8] sm:$0xff]
    %v3373 = vld [vmem:[%s12 + $0xd0] sm:$0xff]
    %v3374 = vld [vmem:[%s12 + $0xd8] sm:$0xff]
    %v3375 = vld [vmem:[%s12 + $0xe0] sm:$0xff]
    %v3376 = vld [vmem:[%s12 + $0xe8] sm:$0xff]
    %v3377 = vld [vmem:[%s12 + $0xf0] sm:$0xff]
    %v3378 = vld [vmem:[%s12 + $0xf8] sm:$0xff]
    %v3379 = vld [vmem:[%s13] sm:$0x1]
    %v3381 = vperm.slane %v3379, 0
    %3383 = vmatpush.msra.mxu0 %v3362
    %3384 = vmatpush.msra.mxu0 %v3361
    %3385 = vmatpush.msra.mxu0 %v3360
    %3386 = vmatpush.msra.mxu0 %v3359
    %3387 = vmatpush.msra.mxu0 %v3358
    %3388 = vmatpush.msra.mxu0 %v3357
    %3389 = vmatpush.msra.mxu0 %v3356
    %3390 = vmatpush.msra.mxu0 %v3355
    %3391 = vmatpush.msra.mxu0 %v3354
    %3392 = vmatpush.msra.mxu0 %v3353
    %3393 = vmatpush.msra.mxu0 %v3352
    %3394 = vmatpush.msra.mxu0 %v3351
    %3395 = vmatpush.msra.mxu0 %v3350
    %3396 = vmatpush.msra.mxu0 %v3349
    %3397 = vmatpush.msra.mxu0 %v3348
    %3398 = vmatpush.msra.mxu0 %v3347
    %3399 = vmatmul.f32.gmra.mxu0 %v3343
    %v3400 = vpop.f32.mrf.mxu0
    %v3401 = vadd.f32 %v3381, %v3400
    %3402 = vdwg.mxu0
    %3403 = vmatpush.msra.mxu0 %v3378
    %3404 = vmatpush.msra.mxu0 %v3377
    %3405 = vmatpush.msra.mxu0 %v3376
    %3406 = vmatpush.msra.mxu0 %v3375
    %3407 = vmatpush.msra.mxu0 %v3374
    %3408 = vmatpush.msra.mxu0 %v3373
    %3409 = vmatpush.msra.mxu0 %v3372
    %3410 = vmatpush.msra.mxu0 %v3371
    %3411 = vmatpush.msra.mxu0 %v3370
    %3412 = vmatpush.msra.mxu0 %v3369
    %3413 = vmatpush.msra.mxu0 %v3368
    %3414 = vmatpush.msra.mxu0 %v3367
    %3415 = vmatpush.msra.mxu0 %v3366
    %3416 = vmatpush.msra.mxu0 %v3365
    %3417 = vmatpush.msra.mxu0 %v3364
    %3418 = vmatpush.msra.mxu0 %v3363
    %3419 = vmatmul.f32.gmra.mxu0 %v3345
    %v3420 = vpop.f32.mrf.mxu0
    %v3421 = vadd.f32 %v3401, %v3420
    %3422 = vdwg.mxu0
    %v3425 = vrot.slane %v591, 7
    %v3426 = vrot.slane %v594, 7
    %vm3429 = vcmask 1040384
    %v3430 = vsel %vm3429, 0.0, %v3425
    %v3431 = vsel %vm3429, 0.0, %v3426
    %v3432 = vadd.f32 %v3430, %v614
    %v3433 = vadd.f32 %v3431, %v617
    %v3436 = vrot.slane %v637, 1
    %v3437 = vrot.slane %v640, 1
    %vm3440 = vcmask 1046528
    %v3441 = vsel %vm3440, %v3436, 0.0
    %v3442 = vsel %vm3440, %v3437, 0.0
    %v3443 = vadd.f32 %v3432, %v3441
    %v3444 = vadd.f32 %v3433, %v3442
    %v3445 = vld [vmem:[%s9] sm:$0x1]
    %v3447 = vperm.slane %v3445, 0
    %v3449 = vadd.f32 %v3443, %v3447
    %v3450 = vadd.f32 %v3444, %v3447
    %v3453 = vrot.slane %v3449, 1
    %v3454 = vrot.slane %v3449, 2
    %v3455 = vrot.slane %v3449, 3
    %v3456 = vrot.slane %v3449, 4
    %v3457 = vrot.slane %v3449, 5
    %v3458 = vrot.slane %v3449, 6
    %v3459 = vrot.slane %v3449, 7
    %v3460 = vrot.slane %v3450, 1
    %v3461 = vrot.slane %v3450, 2
    %v3462 = vrot.slane %v3450, 3
    %v3463 = vrot.slane %v3450, 4
    %v3464 = vrot.slane %v3450, 5
    %v3465 = vrot.slane %v3450, 6
    %v3466 = vrot.slane %v3450, 7
    %v3467 = vlaneseq
    %v3468 = vshrl.u32 %v3467, 7
    %v3469 = vperm.slane %v3449, 0
    %v3470 = vperm.slane %v3453, 0
    %v3471 = vperm.slane %v3454, 0
    %v3472 = vperm.slane %v3455, 0
    %v3473 = vperm.slane %v3456, 0
    %v3474 = vperm.slane %v3457, 0
    %v3475 = vperm.slane %v3458, 0
    %v3476 = vperm.slane %v3459, 0
    %v3477 = vperm.slane %v3450, 0
    %v3478 = vperm.slane %v3460, 0
    %v3479 = vperm.slane %v3461, 0
    %v3480 = vperm.slane %v3462, 0
    %v3481 = vperm.slane %v3463, 0
    %v3482 = vperm.slane %v3464, 0
    %v3483 = vperm.slane %v3465, 0
    %v3484 = vperm.slane %v3466, 0
    %vm3501 = vcmp.gt.f32.partialorder %v3449, %v3469
    %vm3502 = vcmp.gt.f32.partialorder %v3449, %v3470
    %vm3503 = vcmp.gt.f32.partialorder %v3449, %v3471
    %vm3504 = vcmp.gt.f32.partialorder %v3449, %v3472
    %vm3505 = vcmp.gt.f32.partialorder %v3449, %v3473
    %vm3506 = vcmp.gt.f32.partialorder %v3449, %v3474
    %vm3507 = vcmp.gt.f32.partialorder %v3449, %v3475
    %vm3508 = vcmp.gt.f32.partialorder %v3449, %v3476
    %vm3509 = vcmp.gt.f32.partialorder %v3450, %v3477
    %vm3510 = vcmp.gt.f32.partialorder %v3450, %v3478
    %vm3511 = vcmp.gt.f32.partialorder %v3450, %v3479
    %vm3512 = vcmp.gt.f32.partialorder %v3450, %v3480
    %vm3513 = vcmp.gt.f32.partialorder %v3450, %v3481
    %vm3514 = vcmp.gt.f32.partialorder %v3450, %v3482
    %vm3515 = vcmp.gt.f32.partialorder %v3450, %v3483
    %vm3516 = vcmp.gt.f32.partialorder %v3450, %v3484
    %vm3517 = vcmp.eq.f32.partialorder %v3449, %v3469
    %vm3518 = vcmp.eq.f32.partialorder %v3449, %v3470
    %vm3519 = vcmp.eq.f32.partialorder %v3449, %v3471
    %vm3520 = vcmp.eq.f32.partialorder %v3449, %v3472
    %vm3521 = vcmp.eq.f32.partialorder %v3449, %v3473
    %vm3522 = vcmp.eq.f32.partialorder %v3449, %v3474
    %vm3523 = vcmp.eq.f32.partialorder %v3449, %v3475
    %vm3524 = vcmp.eq.f32.partialorder %v3449, %v3476
    %vm3525 = vcmp.eq.f32.partialorder %v3450, %v3477
    %vm3526 = vcmp.eq.f32.partialorder %v3450, %v3478
    %vm3527 = vcmp.eq.f32.partialorder %v3450, %v3479
    %vm3528 = vcmp.eq.f32.partialorder %v3450, %v3480
    %vm3529 = vcmp.eq.f32.partialorder %v3450, %v3481
    %vm3530 = vcmp.eq.f32.partialorder %v3450, %v3482
    %vm3531 = vcmp.eq.f32.partialorder %v3450, %v3483
    %vm3532 = vcmp.eq.f32.partialorder %v3450, %v3484
    %vm3533 = vcmp.lt.s32.totalorder %v3468, 0
    %vm3534 = vcmp.lt.s32.totalorder %v3468, 1
    %vm3535 = vcmp.lt.s32.totalorder %v3468, 2
    %vm3536 = vcmp.lt.s32.totalorder %v3468, 3
    %vm3537 = vcmp.lt.s32.totalorder %v3468, 4
    %vm3538 = vcmp.lt.s32.totalorder %v3468, 5
    %vm3539 = vcmp.lt.s32.totalorder %v3468, 6
    %vm3540 = vcmp.lt.s32.totalorder %v3468, 7
    %vm3541 = vmand %vm3517, %vm3533
    %vm3542 = vmand %vm3518, %vm3534
    %vm3543 = vmand %vm3519, %vm3535
    %vm3544 = vmand %vm3520, %vm3536
    %vm3545 = vmand %vm3521, %vm3537
    %vm3546 = vmand %vm3522, %vm3538
    %vm3547 = vmand %vm3523, %vm3539
    %vm3548 = vmand %vm3524, %vm3540
    %vm3549 = vmand %vm3525, %vm3533
    %vm3550 = vmand %vm3526, %vm3534
    %vm3551 = vmand %vm3527, %vm3535
    %vm3552 = vmand %vm3528, %vm3536
    %vm3553 = vmand %vm3529, %vm3537
    %vm3554 = vmand %vm3530, %vm3538
    %vm3555 = vmand %vm3531, %vm3539
    %vm3556 = vmand %vm3532, %vm3540
    %vm3557 = vmor %vm3501, %vm3541
    %vm3558 = vmor %vm3502, %vm3542
    %vm3559 = vmor %vm3503, %vm3543
    %vm3560 = vmor %vm3504, %vm3544
    %vm3561 = vmor %vm3505, %vm3545
    %vm3562 = vmor %vm3506, %vm3546
    %vm3563 = vmor %vm3507, %vm3547
    %vm3564 = vmor %vm3508, %vm3548
    %vm3565 = vmor %vm3509, %vm3549
    %vm3566 = vmor %vm3510, %vm3550
    %vm3567 = vmor %vm3511, %vm3551
    %vm3568 = vmor %vm3512, %vm3552
    %vm3569 = vmor %vm3513, %vm3553
    %vm3570 = vmor %vm3514, %vm3554
    %vm3571 = vmor %vm3515, %vm3555
    %vm3572 = vmor %vm3516, %vm3556
    %v3573 = vsel %vm3557, 1, 0
    %v3574 = vsel %vm3558, 1, 0
    %v3575 = vsel %vm3559, 1, 0
    %v3576 = vsel %vm3560, 1, 0
    %v3577 = vsel %vm3561, 1, 0
    %v3578 = vsel %vm3562, 1, 0
    %v3579 = vsel %vm3563, 1, 0
    %v3580 = vsel %vm3564, 1, 0
    %v3581 = vsel %vm3565, 1, 0
    %v3582 = vsel %vm3566, 1, 0
    %v3583 = vsel %vm3567, 1, 0
    %v3584 = vsel %vm3568, 1, 0
    %v3585 = vsel %vm3569, 1, 0
    %v3586 = vsel %vm3570, 1, 0
    %v3587 = vsel %vm3571, 1, 0
    %v3588 = vsel %vm3572, 1, 0
    %v3589 = vrot.slane %v3573, 4
    %v3590 = vadd.s32 %v3573, %v3589
    %v3591 = vrot.slane %v3590, 2
    %v3592 = vadd.s32 %v3590, %v3591
    %v3593 = vrot.slane %v3592, 1
    %v3594 = vadd.s32 %v3592, %v3593
    %v3595 = vrot.slane %v3574, 4
    %v3596 = vadd.s32 %v3574, %v3595
    %v3597 = vrot.slane %v3596, 2
    %v3598 = vadd.s32 %v3596, %v3597
    %v3599 = vrot.slane %v3598, 1
    %v3600 = vadd.s32 %v3598, %v3599
    %v3601 = vrot.slane %v3575, 4
    %v3602 = vadd.s32 %v3575, %v3601
    %v3603 = vrot.slane %v3602, 2
    %v3604 = vadd.s32 %v3602, %v3603
    %v3605 = vrot.slane %v3604, 1
    %v3606 = vadd.s32 %v3604, %v3605
    %v3607 = vrot.slane %v3576, 4
    %v3608 = vadd.s32 %v3576, %v3607
    %v3609 = vrot.slane %v3608, 2
    %v3610 = vadd.s32 %v3608, %v3609
    %v3611 = vrot.slane %v3610, 1
    %v3612 = vadd.s32 %v3610, %v3611
    %v3613 = vrot.slane %v3577, 4
    %v3614 = vadd.s32 %v3577, %v3613
    %v3615 = vrot.slane %v3614, 2
    %v3616 = vadd.s32 %v3614, %v3615
    %v3617 = vrot.slane %v3616, 1
    %v3618 = vadd.s32 %v3616, %v3617
    %v3619 = vrot.slane %v3578, 4
    %v3620 = vadd.s32 %v3578, %v3619
    %v3621 = vrot.slane %v3620, 2
    %v3622 = vadd.s32 %v3620, %v3621
    %v3623 = vrot.slane %v3622, 1
    %v3624 = vadd.s32 %v3622, %v3623
    %v3625 = vrot.slane %v3579, 4
    %v3626 = vadd.s32 %v3579, %v3625
    %v3627 = vrot.slane %v3626, 2
    %v3628 = vadd.s32 %v3626, %v3627
    %v3629 = vrot.slane %v3628, 1
    %v3630 = vadd.s32 %v3628, %v3629
    %v3631 = vrot.slane %v3580, 4
    %v3632 = vadd.s32 %v3580, %v3631
    %v3633 = vrot.slane %v3632, 2
    %v3634 = vadd.s32 %v3632, %v3633
    %v3635 = vrot.slane %v3634, 1
    %v3636 = vadd.s32 %v3634, %v3635
    %v3637 = vrot.slane %v3581, 4
    %v3638 = vadd.s32 %v3581, %v3637
    %v3639 = vrot.slane %v3638, 2
    %v3640 = vadd.s32 %v3638, %v3639
    %v3641 = vrot.slane %v3640, 1
    %v3642 = vadd.s32 %v3640, %v3641
    %v3643 = vrot.slane %v3582, 4
    %v3644 = vadd.s32 %v3582, %v3643
    %v3645 = vrot.slane %v3644, 2
    %v3646 = vadd.s32 %v3644, %v3645
    %v3647 = vrot.slane %v3646, 1
    %v3648 = vadd.s32 %v3646, %v3647
    %v3649 = vrot.slane %v3583, 4
    %v3650 = vadd.s32 %v3583, %v3649
    %v3651 = vrot.slane %v3650, 2
    %v3652 = vadd.s32 %v3650, %v3651
    %v3653 = vrot.slane %v3652, 1
    %v3654 = vadd.s32 %v3652, %v3653
    %v3655 = vrot.slane %v3584, 4
    %v3656 = vadd.s32 %v3584, %v3655
    %v3657 = vrot.slane %v3656, 2
    %v3658 = vadd.s32 %v3656, %v3657
    %v3659 = vrot.slane %v3658, 1
    %v3660 = vadd.s32 %v3658, %v3659
    %v3661 = vrot.slane %v3585, 4
    %v3662 = vadd.s32 %v3585, %v3661
    %v3663 = vrot.slane %v3662, 2
    %v3664 = vadd.s32 %v3662, %v3663
    %v3665 = vrot.slane %v3664, 1
    %v3666 = vadd.s32 %v3664, %v3665
    %v3667 = vrot.slane %v3586, 4
    %v3668 = vadd.s32 %v3586, %v3667
    %v3669 = vrot.slane %v3668, 2
    %v3670 = vadd.s32 %v3668, %v3669
    %v3671 = vrot.slane %v3670, 1
    %v3672 = vadd.s32 %v3670, %v3671
    %v3673 = vrot.slane %v3587, 4
    %v3674 = vadd.s32 %v3587, %v3673
    %v3675 = vrot.slane %v3674, 2
    %v3676 = vadd.s32 %v3674, %v3675
    %v3677 = vrot.slane %v3676, 1
    %v3678 = vadd.s32 %v3676, %v3677
    %v3679 = vrot.slane %v3588, 4
    %v3680 = vadd.s32 %v3588, %v3679
    %v3681 = vrot.slane %v3680, 2
    %v3682 = vadd.s32 %v3680, %v3681
    %v3683 = vrot.slane %v3682, 1
    %v3684 = vadd.s32 %v3682, %v3683
    %vm3685 = vcmp.lt.s32.totalorder %v3594, 5
    %vm3686 = vcmp.lt.s32.totalorder %v3600, 5
    %vm3687 = vcmp.lt.s32.totalorder %v3606, 5
    %vm3688 = vcmp.lt.s32.totalorder %v3612, 5
    %vm3689 = vcmp.lt.s32.totalorder %v3618, 5
    %vm3690 = vcmp.lt.s32.totalorder %v3624, 5
    %vm3691 = vcmp.lt.s32.totalorder %v3630, 5
    %vm3692 = vcmp.lt.s32.totalorder %v3636, 5
    %vm3693 = vcmp.lt.s32.totalorder %v3642, 5
    %vm3694 = vcmp.lt.s32.totalorder %v3648, 5
    %vm3695 = vcmp.lt.s32.totalorder %v3654, 5
    %vm3696 = vcmp.lt.s32.totalorder %v3660, 5
    %vm3697 = vcmp.lt.s32.totalorder %v3666, 5
    %vm3698 = vcmp.lt.s32.totalorder %v3672, 5
    %vm3699 = vcmp.lt.s32.totalorder %v3678, 5
    %vm3700 = vcmp.lt.s32.totalorder %v3684, 5
    %v3701 = vsel %vm3685, 1, 0
    %v3702 = vsel %vm3686, 1, 0
    %v3703 = vsel %vm3687, 1, 0
    %v3704 = vsel %vm3688, 1, 0
    %v3705 = vsel %vm3689, 1, 0
    %v3706 = vsel %vm3690, 1, 0
    %v3707 = vsel %vm3691, 1, 0
    %v3708 = vsel %vm3692, 1, 0
    %v3709 = vsel %vm3693, 1, 0
    %v3710 = vsel %vm3694, 1, 0
    %v3711 = vsel %vm3695, 1, 0
    %v3712 = vsel %vm3696, 1, 0
    %v3713 = vsel %vm3697, 1, 0
    %v3714 = vsel %vm3698, 1, 0
    %v3715 = vsel %vm3699, 1, 0
    %v3716 = vsel %vm3700, 1, 0
    %vm3717 = vcmp.eq.s32.totalorder %v3701, 1
    %vm3718 = vcmp.eq.s32.totalorder %v3702, 1
    %vm3719 = vcmp.eq.s32.totalorder %v3703, 1
    %vm3720 = vcmp.eq.s32.totalorder %v3704, 1
    %vm3721 = vcmp.eq.s32.totalorder %v3705, 1
    %vm3722 = vcmp.eq.s32.totalorder %v3706, 1
    %vm3723 = vcmp.eq.s32.totalorder %v3707, 1
    %vm3724 = vcmp.eq.s32.totalorder %v3708, 1
    %vm3725 = vcmp.eq.s32.totalorder %v3709, 1
    %vm3726 = vcmp.eq.s32.totalorder %v3710, 1
    %vm3727 = vcmp.eq.s32.totalorder %v3711, 1
    %vm3728 = vcmp.eq.s32.totalorder %v3712, 1
    %vm3729 = vcmp.eq.s32.totalorder %v3713, 1
    %vm3730 = vcmp.eq.s32.totalorder %v3714, 1
    %vm3731 = vcmp.eq.s32.totalorder %v3715, 1
    %vm3732 = vcmp.eq.s32.totalorder %v3716, 1
    %v3733 = vsel %vm3533, 1, 0
    %v3734 = vsel %vm3534, 1, 0
    %v3735 = vsel %vm3535, 1, 0
    %v3736 = vsel %vm3536, 1, 0
    %v3737 = vsel %vm3537, 1, 0
    %v3738 = vsel %vm3538, 1, 0
    %v3739 = vsel %vm3539, 1, 0
    %v3740 = vsel %vm3540, 1, 0
    %v3741 = vrot.slane %v3733, 1
    %v3742 = vrot.slane %v3733, 2
    %v3743 = vrot.slane %v3733, 3
    %v3744 = vrot.slane %v3733, 4
    %v3745 = vrot.slane %v3733, 5
    %v3746 = vrot.slane %v3733, 6
    %v3747 = vrot.slane %v3733, 7
    %v3748 = vrot.slane %v3734, 1
    %v3749 = vrot.slane %v3734, 2
    %v3750 = vrot.slane %v3734, 3
    %v3751 = vrot.slane %v3734, 4
    %v3752 = vrot.slane %v3734, 5
    %v3753 = vrot.slane %v3734, 6
    %v3754 = vrot.slane %v3734, 7
    %v3755 = vrot.slane %v3735, 1
    %v3756 = vrot.slane %v3735, 2
    %v3757 = vrot.slane %v3735, 3
    %v3758 = vrot.slane %v3735, 4
    %v3759 = vrot.slane %v3735, 5
    %v3760 = vrot.slane %v3735, 6
    %v3761 = vrot.slane %v3735, 7
    %v3762 = vrot.slane %v3736, 1
    %v3763 = vrot.slane %v3736, 2
    %v3764 = vrot.slane %v3736, 3
    %v3765 = vrot.slane %v3736, 4
    %v3766 = vrot.slane %v3736, 5
    %v3767 = vrot.slane %v3736, 6
    %v3768 = vrot.slane %v3736, 7
    %v3769 = vrot.slane %v3737, 1
    %v3770 = vrot.slane %v3737, 2
    %v3771 = vrot.slane %v3737, 3
    %v3772 = vrot.slane %v3737, 4
    %v3773 = vrot.slane %v3737, 5
    %v3774 = vrot.slane %v3737, 6
    %v3775 = vrot.slane %v3737, 7
    %v3776 = vrot.slane %v3738, 1
    %v3777 = vrot.slane %v3738, 2
    %v3778 = vrot.slane %v3738, 3
    %v3779 = vrot.slane %v3738, 4
    %v3780 = vrot.slane %v3738, 5
    %v3781 = vrot.slane %v3738, 6
    %v3782 = vrot.slane %v3738, 7
    %v3783 = vrot.slane %v3739, 1
    %v3784 = vrot.slane %v3739, 2
    %v3785 = vrot.slane %v3739, 3
    %v3786 = vrot.slane %v3739, 4
    %v3787 = vrot.slane %v3739, 5
    %v3788 = vrot.slane %v3739, 6
    %v3789 = vrot.slane %v3739, 7
    %v3790 = vrot.slane %v3740, 1
    %v3791 = vrot.slane %v3740, 2
    %v3792 = vrot.slane %v3740, 3
    %v3793 = vrot.slane %v3740, 4
    %v3794 = vrot.slane %v3740, 5
    %v3795 = vrot.slane %v3740, 6
    %v3796 = vrot.slane %v3740, 7
    %vm3797 = vcmp.ne.s32.totalorder %v3733, 0
    %vm3798 = vcmp.ne.s32.totalorder %v3741, 0
    %vm3799 = vcmp.ne.s32.totalorder %v3742, 0
    %vm3800 = vcmp.ne.s32.totalorder %v3743, 0
    %vm3801 = vcmp.ne.s32.totalorder %v3744, 0
    %vm3802 = vcmp.ne.s32.totalorder %v3745, 0
    %vm3803 = vcmp.ne.s32.totalorder %v3746, 0
    %vm3804 = vcmp.ne.s32.totalorder %v3747, 0
    %vm3805 = vcmp.ne.s32.totalorder %v3734, 0
    %vm3806 = vcmp.ne.s32.totalorder %v3748, 0
    %vm3807 = vcmp.ne.s32.totalorder %v3749, 0
    %vm3808 = vcmp.ne.s32.totalorder %v3750, 0
    %vm3809 = vcmp.ne.s32.totalorder %v3751, 0
    %vm3810 = vcmp.ne.s32.totalorder %v3752, 0
    %vm3811 = vcmp.ne.s32.totalorder %v3753, 0
    %vm3812 = vcmp.ne.s32.totalorder %v3754, 0
    %vm3813 = vcmp.ne.s32.totalorder %v3735, 0
    %vm3814 = vcmp.ne.s32.totalorder %v3755, 0
    %vm3815 = vcmp.ne.s32.totalorder %v3756, 0
    %vm3816 = vcmp.ne.s32.totalorder %v3757, 0
    %vm3817 = vcmp.ne.s32.totalorder %v3758, 0
    %vm3818 = vcmp.ne.s32.totalorder %v3759, 0
    %vm3819 = vcmp.ne.s32.totalorder %v3760, 0
    %vm3820 = vcmp.ne.s32.totalorder %v3761, 0
    %vm3821 = vcmp.ne.s32.totalorder %v3736, 0
    %vm3822 = vcmp.ne.s32.totalorder %v3762, 0
    %vm3823 = vcmp.ne.s32.totalorder %v3763, 0
    %vm3824 = vcmp.ne.s32.totalorder %v3764, 0
    %vm3825 = vcmp.ne.s32.totalorder %v3765, 0
    %vm3826 = vcmp.ne.s32.totalorder %v3766, 0
    %vm3827 = vcmp.ne.s32.totalorder %v3767, 0
    %vm3828 = vcmp.ne.s32.totalorder %v3768, 0
    %vm3829 = vcmp.ne.s32.totalorder %v3737, 0
    %vm3830 = vcmp.ne.s32.totalorder %v3769, 0
    %vm3831 = vcmp.ne.s32.totalorder %v3770, 0
    %vm3832 = vcmp.ne.s32.totalorder %v3771, 0
    %vm3833 = vcmp.ne.s32.totalorder %v3772, 0
    %vm3834 = vcmp.ne.s32.totalorder %v3773, 0
    %vm3835 = vcmp.ne.s32.totalorder %v3774, 0
    %vm3836 = vcmp.ne.s32.totalorder %v3775, 0
    %vm3837 = vcmp.ne.s32.totalorder %v3738, 0
    %vm3838 = vcmp.ne.s32.totalorder %v3776, 0
    %vm3839 = vcmp.ne.s32.totalorder %v3777, 0
    %vm3840 = vcmp.ne.s32.totalorder %v3778, 0
    %vm3841 = vcmp.ne.s32.totalorder %v3779, 0
    %vm3842 = vcmp.ne.s32.totalorder %v3780, 0
    %vm3843 = vcmp.ne.s32.totalorder %v3781, 0
    %vm3844 = vcmp.ne.s32.totalorder %v3782, 0
    %vm3845 = vcmp.ne.s32.totalorder %v3739, 0
    %vm3846 = vcmp.ne.s32.totalorder %v3783, 0
    %vm3847 = vcmp.ne.s32.totalorder %v3784, 0
    %vm3848 = vcmp.ne.s32.totalorder %v3785, 0
    %vm3849 = vcmp.ne.s32.totalorder %v3786, 0
    %vm3850 = vcmp.ne.s32.totalorder %v3787, 0
    %vm3851 = vcmp.ne.s32.totalorder %v3788, 0
    %vm3852 = vcmp.ne.s32.totalorder %v3789, 0
    %vm3853 = vcmp.ne.s32.totalorder %v3740, 0
    %vm3854 = vcmp.ne.s32.totalorder %v3790, 0
    %vm3855 = vcmp.ne.s32.totalorder %v3791, 0
    %vm3856 = vcmp.ne.s32.totalorder %v3792, 0
    %vm3857 = vcmp.ne.s32.totalorder %v3793, 0
    %vm3858 = vcmp.ne.s32.totalorder %v3794, 0
    %vm3859 = vcmp.ne.s32.totalorder %v3795, 0
    %vm3860 = vcmp.ne.s32.totalorder %v3796, 0
    %vm3861 = vmand %vm3717, %vm3797
    %vm3862 = vmand %vm3718, %vm3798
    %vm3863 = vmand %vm3719, %vm3799
    %vm3864 = vmand %vm3720, %vm3800
    %vm3865 = vmand %vm3721, %vm3801
    %vm3866 = vmand %vm3722, %vm3802
    %vm3867 = vmand %vm3723, %vm3803
    %vm3868 = vmand %vm3724, %vm3804
    %vm3869 = vmand %vm3717, %vm3805
    %vm3870 = vmand %vm3718, %vm3806
    %vm3871 = vmand %vm3719, %vm3807
    %vm3872 = vmand %vm3720, %vm3808
    %vm3873 = vmand %vm3721, %vm3809
    %vm3874 = vmand %vm3722, %vm3810
    %vm3875 = vmand %vm3723, %vm3811
    %vm3876 = vmand %vm3724, %vm3812
    %vm3877 = vmand %vm3717, %vm3813
    %vm3878 = vmand %vm3718, %vm3814
    %vm3879 = vmand %vm3719, %vm3815
    %vm3880 = vmand %vm3720, %vm3816
    %vm3881 = vmand %vm3721, %vm3817
    %vm3882 = vmand %vm3722, %vm3818
    %vm3883 = vmand %vm3723, %vm3819
    %vm3884 = vmand %vm3724, %vm3820
    %vm3885 = vmand %vm3717, %vm3821
    %vm3886 = vmand %vm3718, %vm3822
    %vm3887 = vmand %vm3719, %vm3823
    %vm3888 = vmand %vm3720, %vm3824
    %vm3889 = vmand %vm3721, %vm3825
    %vm3890 = vmand %vm3722, %vm3826
    %vm3891 = vmand %vm3723, %vm3827
    %vm3892 = vmand %vm3724, %vm3828
    %vm3893 = vmand %vm3717, %vm3829
    %vm3894 = vmand %vm3718, %vm3830
    %vm3895 = vmand %vm3719, %vm3831
    %vm3896 = vmand %vm3720, %vm3832
    %vm3897 = vmand %vm3721, %vm3833
    %vm3898 = vmand %vm3722, %vm3834
    %vm3899 = vmand %vm3723, %vm3835
    %vm3900 = vmand %vm3724, %vm3836
    %vm3901 = vmand %vm3717, %vm3837
    %vm3902 = vmand %vm3718, %vm3838
    %vm3903 = vmand %vm3719, %vm3839
    %vm3904 = vmand %vm3720, %vm3840
    %vm3905 = vmand %vm3721, %vm3841
    %vm3906 = vmand %vm3722, %vm3842
    %vm3907 = vmand %vm3723, %vm3843
    %vm3908 = vmand %vm3724, %vm3844
    %vm3909 = vmand %vm3717, %vm3845
    %vm3910 = vmand %vm3718, %vm3846
    %vm3911 = vmand %vm3719, %vm3847
    %vm3912 = vmand %vm3720, %vm3848
    %vm3913 = vmand %vm3721, %vm3849
    %vm3914 = vmand %vm3722, %vm3850
    %vm3915 = vmand %vm3723, %vm3851
    %vm3916 = vmand %vm3724, %vm3852
    %vm3917 = vmand %vm3717, %vm3853
    %vm3918 = vmand %vm3718, %vm3854
    %vm3919 = vmand %vm3719, %vm3855
    %vm3920 = vmand %vm3720, %vm3856
    %vm3921 = vmand %vm3721, %vm3857
    %vm3922 = vmand %vm3722, %vm3858
    %vm3923 = vmand %vm3723, %vm3859
    %vm3924 = vmand %vm3724, %vm3860
    %vm3925 = vmand %vm3725, %vm3797
    %vm3926 = vmand %vm3726, %vm3798
    %vm3927 = vmand %vm3727, %vm3799
    %vm3928 = vmand %vm3728, %vm3800
    %vm3929 = vmand %vm3729, %vm3801
    %vm3930 = vmand %vm3730, %vm3802
    %vm3931 = vmand %vm3731, %vm3803
    %vm3932 = vmand %vm3732, %vm3804
    %vm3933 = vmand %vm3725, %vm3805
    %vm3934 = vmand %vm3726, %vm3806
    %vm3935 = vmand %vm3727, %vm3807
    %vm3936 = vmand %vm3728, %vm3808
    %vm3937 = vmand %vm3729, %vm3809
    %vm3938 = vmand %vm3730, %vm3810
    %vm3939 = vmand %vm3731, %vm3811
    %vm3940 = vmand %vm3732, %vm3812
    %vm3941 = vmand %vm3725, %vm3813
    %vm3942 = vmand %vm3726, %vm3814
    %vm3943 = vmand %vm3727, %vm3815
    %vm3944 = vmand %vm3728, %vm3816
    %vm3945 = vmand %vm3729, %vm3817
    %vm3946 = vmand %vm3730, %vm3818
    %vm3947 = vmand %vm3731, %vm3819
    %vm3948 = vmand %vm3732, %vm3820
    %vm3949 = vmand %vm3725, %vm3821
    %vm3950 = vmand %vm3726, %vm3822
    %vm3951 = vmand %vm3727, %vm3823
    %vm3952 = vmand %vm3728, %vm3824
    %vm3953 = vmand %vm3729, %vm3825
    %vm3954 = vmand %vm3730, %vm3826
    %vm3955 = vmand %vm3731, %vm3827
    %vm3956 = vmand %vm3732, %vm3828
    %vm3957 = vmand %vm3725, %vm3829
    %vm3958 = vmand %vm3726, %vm3830
    %vm3959 = vmand %vm3727, %vm3831
    %vm3960 = vmand %vm3728, %vm3832
    %vm3961 = vmand %vm3729, %vm3833
    %vm3962 = vmand %vm3730, %vm3834
    %vm3963 = vmand %vm3731, %vm3835
    %vm3964 = vmand %vm3732, %vm3836
    %vm3965 = vmand %vm3725, %vm3837
    %vm3966 = vmand %vm3726, %vm3838
    %vm3967 = vmand %vm3727, %vm3839
    %vm3968 = vmand %vm3728, %vm3840
    %vm3969 = vmand %vm3729, %vm3841
    %vm3970 = vmand %vm3730, %vm3842
    %vm3971 = vmand %vm3731, %vm3843
    %vm3972 = vmand %vm3732, %vm3844
    %vm3973 = vmand %vm3725, %vm3845
    %vm3974 = vmand %vm3726, %vm3846
    %vm3975 = vmand %vm3727, %vm3847
    %vm3976 = vmand %vm3728, %vm3848
    %vm3977 = vmand %vm3729, %vm3849
    %vm3978 = vmand %vm3730, %vm3850
    %vm3979 = vmand %vm3731, %vm3851
    %vm3980 = vmand %vm3732, %vm3852
    %vm3981 = vmand %vm3725, %vm3853
    %vm3982 = vmand %vm3726, %vm3854
    %vm3983 = vmand %vm3727, %vm3855
    %vm3984 = vmand %vm3728, %vm3856
    %vm3985 = vmand %vm3729, %vm3857
    %vm3986 = vmand %vm3730, %vm3858
    %vm3987 = vmand %vm3731, %vm3859
    %vm3988 = vmand %vm3732, %vm3860
    %v3989 = vsel %vm3861, 1, 0
    %v3990 = vsel %vm3862, 1, 0
    %v3991 = vsel %vm3863, 1, 0
    %v3992 = vsel %vm3864, 1, 0
    %v3993 = vsel %vm3865, 1, 0
    %v3994 = vsel %vm3866, 1, 0
    %v3995 = vsel %vm3867, 1, 0
    %v3996 = vsel %vm3868, 1, 0
    %v3997 = vsel %vm3869, 1, 0
    %v3998 = vsel %vm3870, 1, 0
    %v3999 = vsel %vm3871, 1, 0
    %v4000 = vsel %vm3872, 1, 0
    %v4001 = vsel %vm3873, 1, 0
    %v4002 = vsel %vm3874, 1, 0
    %v4003 = vsel %vm3875, 1, 0
    %v4004 = vsel %vm3876, 1, 0
    %v4005 = vsel %vm3877, 1, 0
    %v4006 = vsel %vm3878, 1, 0
    %v4007 = vsel %vm3879, 1, 0
    %v4008 = vsel %vm3880, 1, 0
    %v4009 = vsel %vm3881, 1, 0
    %v4010 = vsel %vm3882, 1, 0
    %v4011 = vsel %vm3883, 1, 0
    %v4012 = vsel %vm3884, 1, 0
    %v4013 = vsel %vm3885, 1, 0
    %v4014 = vsel %vm3886, 1, 0
    %v4015 = vsel %vm3887, 1, 0
    %v4016 = vsel %vm3888, 1, 0
    %v4017 = vsel %vm3889, 1, 0
    %v4018 = vsel %vm3890, 1, 0
    %v4019 = vsel %vm3891, 1, 0
    %v4020 = vsel %vm3892, 1, 0
    %v4021 = vsel %vm3893, 1, 0
    %v4022 = vsel %vm3894, 1, 0
    %v4023 = vsel %vm3895, 1, 0
    %v4024 = vsel %vm3896, 1, 0
    %v4025 = vsel %vm3897, 1, 0
    %v4026 = vsel %vm3898, 1, 0
    %v4027 = vsel %vm3899, 1, 0
    %v4028 = vsel %vm3900, 1, 0
    %v4029 = vsel %vm3901, 1, 0
    %v4030 = vsel %vm3902, 1, 0
    %v4031 = vsel %vm3903, 1, 0
    %v4032 = vsel %vm3904, 1, 0
    %v4033 = vsel %vm3905, 1, 0
    %v4034 = vsel %vm3906, 1, 0
    %v4035 = vsel %vm3907, 1, 0
    %v4036 = vsel %vm3908, 1, 0
    %v4037 = vsel %vm3909, 1, 0
    %v4038 = vsel %vm3910, 1, 0
    %v4039 = vsel %vm3911, 1, 0
    %v4040 = vsel %vm3912, 1, 0
    %v4041 = vsel %vm3913, 1, 0
    %v4042 = vsel %vm3914, 1, 0
    %v4043 = vsel %vm3915, 1, 0
    %v4044 = vsel %vm3916, 1, 0
    %v4045 = vsel %vm3917, 1, 0
    %v4046 = vsel %vm3918, 1, 0
    %v4047 = vsel %vm3919, 1, 0
    %v4048 = vsel %vm3920, 1, 0
    %v4049 = vsel %vm3921, 1, 0
    %v4050 = vsel %vm3922, 1, 0
    %v4051 = vsel %vm3923, 1, 0
    %v4052 = vsel %vm3924, 1, 0
    %v4053 = vsel %vm3925, 1, 0
    %v4054 = vsel %vm3926, 1, 0
    %v4055 = vsel %vm3927, 1, 0
    %v4056 = vsel %vm3928, 1, 0
    %v4057 = vsel %vm3929, 1, 0
    %v4058 = vsel %vm3930, 1, 0
    %v4059 = vsel %vm3931, 1, 0
    %v4060 = vsel %vm3932, 1, 0
    %v4061 = vsel %vm3933, 1, 0
    %v4062 = vsel %vm3934, 1, 0
    %v4063 = vsel %vm3935, 1, 0
    %v4064 = vsel %vm3936, 1, 0
    %v4065 = vsel %vm3937, 1, 0
    %v4066 = vsel %vm3938, 1, 0
    %v4067 = vsel %vm3939, 1, 0
    %v4068 = vsel %vm3940, 1, 0
    %v4069 = vsel %vm3941, 1, 0
    %v4070 = vsel %vm3942, 1, 0
    %v4071 = vsel %vm3943, 1, 0
    %v4072 = vsel %vm3944, 1, 0
    %v4073 = vsel %vm3945, 1, 0
    %v4074 = vsel %vm3946, 1, 0
    %v4075 = vsel %vm3947, 1, 0
    %v4076 = vsel %vm3948, 1, 0
    %v4077 = vsel %vm3949, 1, 0
    %v4078 = vsel %vm3950, 1, 0
    %v4079 = vsel %vm3951, 1, 0
    %v4080 = vsel %vm3952, 1, 0
    %v4081 = vsel %vm3953, 1, 0
    %v4082 = vsel %vm3954, 1, 0
    %v4083 = vsel %vm3955, 1, 0
    %v4084 = vsel %vm3956, 1, 0
    %v4085 = vsel %vm3957, 1, 0
    %v4086 = vsel %vm3958, 1, 0
    %v4087 = vsel %vm3959, 1, 0
    %v4088 = vsel %vm3960, 1, 0
    %v4089 = vsel %vm3961, 1, 0
    %v4090 = vsel %vm3962, 1, 0
    %v4091 = vsel %vm3963, 1, 0
    %v4092 = vsel %vm3964, 1, 0
    %v4093 = vsel %vm3965, 1, 0
    %v4094 = vsel %vm3966, 1, 0
    %v4095 = vsel %vm3967, 1, 0
    %v4096 = vsel %vm3968, 1, 0
    %v4097 = vsel %vm3969, 1, 0
    %v4098 = vsel %vm3970, 1, 0
    %v4099 = vsel %vm3971, 1, 0
    %v4100 = vsel %vm3972, 1, 0
    %v4101 = vsel %vm3973, 1, 0
    %v4102 = vsel %vm3974, 1, 0
    %v4103 = vsel %vm3975, 1, 0
    %v4104 = vsel %vm3976, 1, 0
    %v4105 = vsel %vm3977, 1, 0
    %v4106 = vsel %vm3978, 1, 0
    %v4107 = vsel %vm3979, 1, 0
    %v4108 = vsel %vm3980, 1, 0
    %v4109 = vsel %vm3981, 1, 0
    %v4110 = vsel %vm3982, 1, 0
    %v4111 = vsel %vm3983, 1, 0
    %v4112 = vsel %vm3984, 1, 0
    %v4113 = vsel %vm3985, 1, 0
    %v4114 = vsel %vm3986, 1, 0
    %v4115 = vsel %vm3987, 1, 0
    %v4116 = vsel %vm3988, 1, 0
    %v4117 = vsel %vm3429, %v3989, 0
    %v4118 = vsel %vm3429, %v3990, 0
    %v4119 = vadd.s32 %v4117, %v4118
    %v4120 = vsel %vm3429, %v3991, 0
    %v4121 = vadd.s32 %v4119, %v4120
    %v4122 = vsel %vm3429, %v3992, 0
    %v4123 = vadd.s32 %v4121, %v4122
    %v4124 = vsel %vm3429, %v3993, 0
    %v4125 = vadd.s32 %v4123, %v4124
    %v4126 = vsel %vm3429, %v3994, 0
    %v4127 = vadd.s32 %v4125, %v4126
    %v4128 = vsel %vm3429, %v3995, 0
    %v4129 = vadd.s32 %v4127, %v4128
    %v4130 = vsel %vm3429, %v3996, 0
    %v4131 = vadd.s32 %v4129, %v4130
    %v4132 = vsel %vm3429, %v3997, 0
    %v4133 = vsel %vm3429, %v3998, 0
    %v4134 = vadd.s32 %v4132, %v4133
    %v4135 = vsel %vm3429, %v3999, 0
    %v4136 = vadd.s32 %v4134, %v4135
    %v4137 = vsel %vm3429, %v4000, 0
    %v4138 = vadd.s32 %v4136, %v4137
    %v4139 = vsel %vm3429, %v4001, 0
    %v4140 = vadd.s32 %v4138, %v4139
    %v4141 = vsel %vm3429, %v4002, 0
    %v4142 = vadd.s32 %v4140, %v4141
    %v4143 = vsel %vm3429, %v4003, 0
    %v4144 = vadd.s32 %v4142, %v4143
    %v4145 = vsel %vm3429, %v4004, 0
    %v4146 = vadd.s32 %v4144, %v4145
    %v4147 = vsel %vm3429, %v4005, 0
    %v4148 = vsel %vm3429, %v4006, 0
    %v4149 = vadd.s32 %v4147, %v4148
    %v4150 = vsel %vm3429, %v4007, 0
    %v4151 = vadd.s32 %v4149, %v4150
    %v4152 = vsel %vm3429, %v4008, 0
    %v4153 = vadd.s32 %v4151, %v4152
    %v4154 = vsel %vm3429, %v4009, 0
    %v4155 = vadd.s32 %v4153, %v4154
    %v4156 = vsel %vm3429, %v4010, 0
    %v4157 = vadd.s32 %v4155, %v4156
    %v4158 = vsel %vm3429, %v4011, 0
    %v4159 = vadd.s32 %v4157, %v4158
    %v4160 = vsel %vm3429, %v4012, 0
    %v4161 = vadd.s32 %v4159, %v4160
    %v4162 = vsel %vm3429, %v4013, 0
    %v4163 = vsel %vm3429, %v4014, 0
    %v4164 = vadd.s32 %v4162, %v4163
    %v4165 = vsel %vm3429, %v4015, 0
    %v4166 = vadd.s32 %v4164, %v4165
    %v4167 = vsel %vm3429, %v4016, 0
    %v4168 = vadd.s32 %v4166, %v4167
    %v4169 = vsel %vm3429, %v4017, 0
    %v4170 = vadd.s32 %v4168, %v4169
    %v4171 = vsel %vm3429, %v4018, 0
    %v4172 = vadd.s32 %v4170, %v4171
    %v4173 = vsel %vm3429, %v4019, 0
    %v4174 = vadd.s32 %v4172, %v4173
    %v4175 = vsel %vm3429, %v4020, 0
    %v4176 = vadd.s32 %v4174, %v4175
    %v4177 = vsel %vm3429, %v4021, 0
    %v4178 = vsel %vm3429, %v4022, 0
    %v4179 = vadd.s32 %v4177, %v4178
    %v4180 = vsel %vm3429, %v4023, 0
    %v4181 = vadd.s32 %v4179, %v4180
    %v4182 = vsel %vm3429, %v4024, 0
    %v4183 = vadd.s32 %v4181, %v4182
    %v4184 = vsel %vm3429, %v4025, 0
    %v4185 = vadd.s32 %v4183, %v4184
    %v4186 = vsel %vm3429, %v4026, 0
    %v4187 = vadd.s32 %v4185, %v4186
    %v4188 = vsel %vm3429, %v4027, 0
    %v4189 = vadd.s32 %v4187, %v4188
    %v4190 = vsel %vm3429, %v4028, 0
    %v4191 = vadd.s32 %v4189, %v4190
    %v4192 = vsel %vm3429, %v4029, 0
    %v4193 = vsel %vm3429, %v4030, 0
    %v4194 = vadd.s32 %v4192, %v4193
    %v4195 = vsel %vm3429, %v4031, 0
    %v4196 = vadd.s32 %v4194, %v4195
    %v4197 = vsel %vm3429, %v4032, 0
    %v4198 = vadd.s32 %v4196, %v4197
    %v4199 = vsel %vm3429, %v4033, 0
    %v4200 = vadd.s32 %v4198, %v4199
    %v4201 = vsel %vm3429, %v4034, 0
    %v4202 = vadd.s32 %v4200, %v4201
    %v4203 = vsel %vm3429, %v4035, 0
    %v4204 = vadd.s32 %v4202, %v4203
    %v4205 = vsel %vm3429, %v4036, 0
    %v4206 = vadd.s32 %v4204, %v4205
    %v4207 = vsel %vm3429, %v4037, 0
    %v4208 = vsel %vm3429, %v4038, 0
    %v4209 = vadd.s32 %v4207, %v4208
    %v4210 = vsel %vm3429, %v4039, 0
    %v4211 = vadd.s32 %v4209, %v4210
    %v4212 = vsel %vm3429, %v4040, 0
    %v4213 = vadd.s32 %v4211, %v4212
    %v4214 = vsel %vm3429, %v4041, 0
    %v4215 = vadd.s32 %v4213, %v4214
    %v4216 = vsel %vm3429, %v4042, 0
    %v4217 = vadd.s32 %v4215, %v4216
    %v4218 = vsel %vm3429, %v4043, 0
    %v4219 = vadd.s32 %v4217, %v4218
    %v4220 = vsel %vm3429, %v4044, 0
    %v4221 = vadd.s32 %v4219, %v4220
    %v4222 = vsel %vm3429, %v4045, 0
    %v4223 = vsel %vm3429, %v4046, 0
    %v4224 = vadd.s32 %v4222, %v4223
    %v4225 = vsel %vm3429, %v4047, 0
    %v4226 = vadd.s32 %v4224, %v4225
    %v4227 = vsel %vm3429, %v4048, 0
    %v4228 = vadd.s32 %v4226, %v4227
    %v4229 = vsel %vm3429, %v4049, 0
    %v4230 = vadd.s32 %v4228, %v4229
    %v4231 = vsel %vm3429, %v4050, 0
    %v4232 = vadd.s32 %v4230, %v4231
    %v4233 = vsel %vm3429, %v4051, 0
    %v4234 = vadd.s32 %v4232, %v4233
    %v4235 = vsel %vm3429, %v4052, 0
    %v4236 = vadd.s32 %v4234, %v4235
    %v4237 = vsel %vm3429, %v4053, 0
    %v4238 = vsel %vm3429, %v4054, 0
    %v4239 = vadd.s32 %v4237, %v4238
    %v4240 = vsel %vm3429, %v4055, 0
    %v4241 = vadd.s32 %v4239, %v4240
    %v4242 = vsel %vm3429, %v4056, 0
    %v4243 = vadd.s32 %v4241, %v4242
    %v4244 = vsel %vm3429, %v4057, 0
    %v4245 = vadd.s32 %v4243, %v4244
    %v4246 = vsel %vm3429, %v4058, 0
    %v4247 = vadd.s32 %v4245, %v4246
    %v4248 = vsel %vm3429, %v4059, 0
    %v4249 = vadd.s32 %v4247, %v4248
    %v4250 = vsel %vm3429, %v4060, 0
    %v4251 = vadd.s32 %v4249, %v4250
    %v4252 = vsel %vm3429, %v4061, 0
    %v4253 = vsel %vm3429, %v4062, 0
    %v4254 = vadd.s32 %v4252, %v4253
    %v4255 = vsel %vm3429, %v4063, 0
    %v4256 = vadd.s32 %v4254, %v4255
    %v4257 = vsel %vm3429, %v4064, 0
    %v4258 = vadd.s32 %v4256, %v4257
    %v4259 = vsel %vm3429, %v4065, 0
    %v4260 = vadd.s32 %v4258, %v4259
    %v4261 = vsel %vm3429, %v4066, 0
    %v4262 = vadd.s32 %v4260, %v4261
    %v4263 = vsel %vm3429, %v4067, 0
    %v4264 = vadd.s32 %v4262, %v4263
    %v4265 = vsel %vm3429, %v4068, 0
    %v4266 = vadd.s32 %v4264, %v4265
    %v4267 = vsel %vm3429, %v4069, 0
    %v4268 = vsel %vm3429, %v4070, 0
    %v4269 = vadd.s32 %v4267, %v4268
    %v4270 = vsel %vm3429, %v4071, 0
    %v4271 = vadd.s32 %v4269, %v4270
    %v4272 = vsel %vm3429, %v4072, 0
    %v4273 = vadd.s32 %v4271, %v4272
    %v4274 = vsel %vm3429, %v4073, 0
    %v4275 = vadd.s32 %v4273, %v4274
    %v4276 = vsel %vm3429, %v4074, 0
    %v4277 = vadd.s32 %v4275, %v4276
    %v4278 = vsel %vm3429, %v4075, 0
    %v4279 = vadd.s32 %v4277, %v4278
    %v4280 = vsel %vm3429, %v4076, 0
    %v4281 = vadd.s32 %v4279, %v4280
    %v4282 = vsel %vm3429, %v4077, 0
    %v4283 = vsel %vm3429, %v4078, 0
    %v4284 = vadd.s32 %v4282, %v4283
    %v4285 = vsel %vm3429, %v4079, 0
    %v4286 = vadd.s32 %v4284, %v4285
    %v4287 = vsel %vm3429, %v4080, 0
    %v4288 = vadd.s32 %v4286, %v4287
    %v4289 = vsel %vm3429, %v4081, 0
    %v4290 = vadd.s32 %v4288, %v4289
    %v4291 = vsel %vm3429, %v4082, 0
    %v4292 = vadd.s32 %v4290, %v4291
    %v4293 = vsel %vm3429, %v4083, 0
    %v4294 = vadd.s32 %v4292, %v4293
    %v4295 = vsel %vm3429, %v4084, 0
    %v4296 = vadd.s32 %v4294, %v4295
    %v4297 = vsel %vm3429, %v4085, 0
    %v4298 = vsel %vm3429, %v4086, 0
    %v4299 = vadd.s32 %v4297, %v4298
    %v4300 = vsel %vm3429, %v4087, 0
    %v4301 = vadd.s32 %v4299, %v4300
    %v4302 = vsel %vm3429, %v4088, 0
    %v4303 = vadd.s32 %v4301, %v4302
    %v4304 = vsel %vm3429, %v4089, 0
    %v4305 = vadd.s32 %v4303, %v4304
    %v4306 = vsel %vm3429, %v4090, 0
    %v4307 = vadd.s32 %v4305, %v4306
    %v4308 = vsel %vm3429, %v4091, 0
    %v4309 = vadd.s32 %v4307, %v4308
    %v4310 = vsel %vm3429, %v4092, 0
    %v4311 = vadd.s32 %v4309, %v4310
    %v4312 = vsel %vm3429, %v4093, 0
    %v4313 = vsel %vm3429, %v4094, 0
    %v4314 = vadd.s32 %v4312, %v4313
    %v4315 = vsel %vm3429, %v4095, 0
    %v4316 = vadd.s32 %v4314, %v4315
    %v4317 = vsel %vm3429, %v4096, 0
    %v4318 = vadd.s32 %v4316, %v4317
    %v4319 = vsel %vm3429, %v4097, 0
    %v4320 = vadd.s32 %v4318, %v4319
    %v4321 = vsel %vm3429, %v4098, 0
    %v4322 = vadd.s32 %v4320, %v4321
    %v4323 = vsel %vm3429, %v4099, 0
    %v4324 = vadd.s32 %v4322, %v4323
    %v4325 = vsel %vm3429, %v4100, 0
    %v4326 = vadd.s32 %v4324, %v4325
    %v4327 = vsel %vm3429, %v4101, 0
    %v4328 = vsel %vm3429, %v4102, 0
    %v4329 = vadd.s32 %v4327, %v4328
    %v4330 = vsel %vm3429, %v4103, 0
    %v4331 = vadd.s32 %v4329, %v4330
    %v4332 = vsel %vm3429, %v4104, 0
    %v4333 = vadd.s32 %v4331, %v4332
    %v4334 = vsel %vm3429, %v4105, 0
    %v4335 = vadd.s32 %v4333, %v4334
    %v4336 = vsel %vm3429, %v4106, 0
    %v4337 = vadd.s32 %v4335, %v4336
    %v4338 = vsel %vm3429, %v4107, 0
    %v4339 = vadd.s32 %v4337, %v4338
    %v4340 = vsel %vm3429, %v4108, 0
    %v4341 = vadd.s32 %v4339, %v4340
    %v4342 = vsel %vm3429, %v4109, 0
    %v4343 = vsel %vm3429, %v4110, 0
    %v4344 = vadd.s32 %v4342, %v4343
    %v4345 = vsel %vm3429, %v4111, 0
    %v4346 = vadd.s32 %v4344, %v4345
    %v4347 = vsel %vm3429, %v4112, 0
    %v4348 = vadd.s32 %v4346, %v4347
    %v4349 = vsel %vm3429, %v4113, 0
    %v4350 = vadd.s32 %v4348, %v4349
    %v4351 = vsel %vm3429, %v4114, 0
    %v4352 = vadd.s32 %v4350, %v4351
    %v4353 = vsel %vm3429, %v4115, 0
    %v4354 = vadd.s32 %v4352, %v4353
    %v4355 = vsel %vm3429, %v4116, 0
    %v4356 = vadd.s32 %v4354, %v4355
    %vm4357 = vcmp.eq.s32.totalorder %v4131, 0
    %vm4358 = vcmp.eq.s32.totalorder %v4146, 0
    %vm4359 = vcmp.eq.s32.totalorder %v4161, 0
    %vm4360 = vcmp.eq.s32.totalorder %v4176, 0
    %vm4361 = vcmp.eq.s32.totalorder %v4191, 0
    %vm4362 = vcmp.eq.s32.totalorder %v4206, 0
    %vm4363 = vcmp.eq.s32.totalorder %v4221, 0
    %vm4364 = vcmp.eq.s32.totalorder %v4236, 0
    %vm4365 = vcmp.eq.s32.totalorder %v4251, 0
    %vm4366 = vcmp.eq.s32.totalorder %v4266, 0
    %vm4367 = vcmp.eq.s32.totalorder %v4281, 0
    %vm4368 = vcmp.eq.s32.totalorder %v4296, 0
    %vm4369 = vcmp.eq.s32.totalorder %v4311, 0
    %vm4370 = vcmp.eq.s32.totalorder %v4326, 0
    %vm4371 = vcmp.eq.s32.totalorder %v4341, 0
    %vm4372 = vcmp.eq.s32.totalorder %v4356, 0
    %vm4373 = vmand %vm3685, %vm4357
    %vm4374 = vmand %vm3686, %vm4358
    %vm4375 = vmand %vm3687, %vm4359
    %vm4376 = vmand %vm3688, %vm4360
    %vm4377 = vmand %vm3689, %vm4361
    %vm4378 = vmand %vm3690, %vm4362
    %vm4379 = vmand %vm3691, %vm4363
    %vm4380 = vmand %vm3692, %vm4364
    %vm4381 = vmand %vm3693, %vm4365
    %vm4382 = vmand %vm3694, %vm4366
    %vm4383 = vmand %vm3695, %vm4367
    %vm4384 = vmand %vm3696, %vm4368
    %vm4385 = vmand %vm3697, %vm4369
    %vm4386 = vmand %vm3698, %vm4370
    %vm4387 = vmand %vm3699, %vm4371
    %vm4388 = vmand %vm3700, %vm4372
    %v4405 = vsel %vm4373, %v3449, 0.0
    %v4406 = vsel %vm4374, %v3453, 0.0
    %v4407 = vsel %vm4375, %v3454, 0.0
    %v4408 = vsel %vm4376, %v3455, 0.0
    %v4409 = vsel %vm4377, %v3456, 0.0
    %v4410 = vsel %vm4378, %v3457, 0.0
    %v4411 = vsel %vm4379, %v3458, 0.0
    %v4412 = vsel %vm4380, %v3459, 0.0
    %v4413 = vsel %vm4381, %v3450, 0.0
    %v4414 = vsel %vm4382, %v3460, 0.0
    %v4415 = vsel %vm4383, %v3461, 0.0
    %v4416 = vsel %vm4384, %v3462, 0.0
    %v4417 = vsel %vm4385, %v3463, 0.0
    %v4418 = vsel %vm4386, %v3464, 0.0
    %v4419 = vsel %vm4387, %v3465, 0.0
    %v4420 = vsel %vm4388, %v3466, 0.0
    %v4437 = vrot.slane %v4406, 7
    %v4438 = vsel %vm1012, %v4437, %v4405
    %v4439 = vrot.slane %v4407, 6
    %vm4440 = vcmask 1042434
    %v4441 = vsel %vm4440, %v4439, %v4438
    %v4442 = vrot.slane %v4408, 5
    %v4443 = vsel %vm1034, %v4442, %v4441
    %v4444 = vrot.slane %v4409, 4
    %vm4445 = vcmask 1044484
    %v4446 = vsel %vm4445, %v4444, %v4443
    %v4447 = vrot.slane %v4410, 3
    %vm4448 = vcmask 1045509
    %v4449 = vsel %vm4448, %v4447, %v4446
    %v4450 = vrot.slane %v4411, 2
    %vm4451 = vcmask 1046534
    %v4452 = vsel %vm4451, %v4450, %v4449
    %v4453 = vrot.slane %v4412, 1
    %vm4454 = vcmask 1047559
    %v4455 = vsel %vm4454, %v4453, %v4452
    %v4456 = vrot.slane %v4414, 7
    %v4457 = vsel %vm1012, %v4456, %v4413
    %v4458 = vrot.slane %v4415, 6
    %v4459 = vsel %vm4440, %v4458, %v4457
    %v4460 = vrot.slane %v4416, 5
    %v4461 = vsel %vm1034, %v4460, %v4459
    %v4462 = vrot.slane %v4417, 4
    %v4463 = vsel %vm4445, %v4462, %v4461
    %v4464 = vrot.slane %v4418, 3
    %v4465 = vsel %vm4448, %v4464, %v4463
    %v4466 = vrot.slane %v4419, 2
    %v4467 = vsel %vm4451, %v4466, %v4465
    %v4468 = vrot.slane %v4420, 1
    %v4469 = vsel %vm4454, %v4468, %v4467
    %v4472 = vrot.slane %v4455, 4
    %v4473 = vadd.f32 %v4455, %v4472
    %v4474 = vrot.slane %v4473, 2
    %v4475 = vadd.f32 %v4473, %v4474
    %v4476 = vrot.slane %v4475, 1
    %v4477 = vadd.f32 %v4475, %v4476
    %v4478 = vrot.slane %v4469, 4
    %v4479 = vadd.f32 %v4469, %v4478
    %v4480 = vrot.slane %v4479, 2
    %v4481 = vadd.f32 %v4479, %v4480
    %v4482 = vrot.slane %v4481, 1
    %v4483 = vadd.f32 %v4481, %v4482
    %vm4484 = vcmp.eq.s32.totalorder %v4131, 1
    %vm4485 = vcmp.eq.s32.totalorder %v4146, 1
    %vm4486 = vcmp.eq.s32.totalorder %v4161, 1
    %vm4487 = vcmp.eq.s32.totalorder %v4176, 1
    %vm4488 = vcmp.eq.s32.totalorder %v4191, 1
    %vm4489 = vcmp.eq.s32.totalorder %v4206, 1
    %vm4490 = vcmp.eq.s32.totalorder %v4221, 1
    %vm4491 = vcmp.eq.s32.totalorder %v4236, 1
    %vm4492 = vcmp.eq.s32.totalorder %v4251, 1
    %vm4493 = vcmp.eq.s32.totalorder %v4266, 1
    %vm4494 = vcmp.eq.s32.totalorder %v4281, 1
    %vm4495 = vcmp.eq.s32.totalorder %v4296, 1
    %vm4496 = vcmp.eq.s32.totalorder %v4311, 1
    %vm4497 = vcmp.eq.s32.totalorder %v4326, 1
    %vm4498 = vcmp.eq.s32.totalorder %v4341, 1
    %vm4499 = vcmp.eq.s32.totalorder %v4356, 1
    %vm4500 = vmand %vm3685, %vm4484
    %vm4501 = vmand %vm3686, %vm4485
    %vm4502 = vmand %vm3687, %vm4486
    %vm4503 = vmand %vm3688, %vm4487
    %vm4504 = vmand %vm3689, %vm4488
    %vm4505 = vmand %vm3690, %vm4489
    %vm4506 = vmand %vm3691, %vm4490
    %vm4507 = vmand %vm3692, %vm4491
    %vm4508 = vmand %vm3693, %vm4492
    %vm4509 = vmand %vm3694, %vm4493
    %vm4510 = vmand %vm3695, %vm4494
    %vm4511 = vmand %vm3696, %vm4495
    %vm4512 = vmand %vm3697, %vm4496
    %vm4513 = vmand %vm3698, %vm4497
    %vm4514 = vmand %vm3699, %vm4498
    %vm4515 = vmand %vm3700, %vm4499
    %v4516 = vsel %vm4500, %v3449, 0.0
    %v4517 = vsel %vm4501, %v3453, 0.0
    %v4518 = vsel %vm4502, %v3454, 0.0
    %v4519 = vsel %vm4503, %v3455, 0.0
    %v4520 = vsel %vm4504, %v3456, 0.0
    %v4521 = vsel %vm4505, %v3457, 0.0
    %v4522 = vsel %vm4506, %v3458, 0.0
    %v4523 = vsel %vm4507, %v3459, 0.0
    %v4524 = vsel %vm4508, %v3450, 0.0
    %v4525 = vsel %vm4509, %v3460, 0.0
    %v4526 = vsel %vm4510, %v3461, 0.0
    %v4527 = vsel %vm4511, %v3462, 0.0
    %v4528 = vsel %vm4512, %v3463, 0.0
    %v4529 = vsel %vm4513, %v3464, 0.0
    %v4530 = vsel %vm4514, %v3465, 0.0
    %v4531 = vsel %vm4515, %v3466, 0.0
    %v4548 = vrot.slane %v4517, 7
    %v4549 = vsel %vm1012, %v4548, %v4516
    %v4550 = vrot.slane %v4518, 6
    %v4551 = vsel %vm4440, %v4550, %v4549
    %v4552 = vrot.slane %v4519, 5
    %v4553 = vsel %vm1034, %v4552, %v4551
    %v4554 = vrot.slane %v4520, 4
    %v4555 = vsel %vm4445, %v4554, %v4553
    %v4556 = vrot.slane %v4521, 3
    %v4557 = vsel %vm4448, %v4556, %v4555
    %v4558 = vrot.slane %v4522, 2
    %v4559 = vsel %vm4451, %v4558, %v4557
    %v4560 = vrot.slane %v4523, 1
    %v4561 = vsel %vm4454, %v4560, %v4559
    %v4562 = vrot.slane %v4525, 7
    %v4563 = vsel %vm1012, %v4562, %v4524
    %v4564 = vrot.slane %v4526, 6
    %v4565 = vsel %vm4440, %v4564, %v4563
    %v4566 = vrot.slane %v4527, 5
    %v4567 = vsel %vm1034, %v4566, %v4565
    %v4568 = vrot.slane %v4528, 4
    %v4569 = vsel %vm4445, %v4568, %v4567
    %v4570 = vrot.slane %v4529, 3
    %v4571 = vsel %vm4448, %v4570, %v4569
    %v4572 = vrot.slane %v4530, 2
    %v4573 = vsel %vm4451, %v4572, %v4571
    %v4574 = vrot.slane %v4531, 1
    %v4575 = vsel %vm4454, %v4574, %v4573
    %v4578 = vrot.slane %v4561, 4
    %v4579 = vadd.f32 %v4561, %v4578
    %v4580 = vrot.slane %v4579, 2
    %v4581 = vadd.f32 %v4579, %v4580
    %v4582 = vrot.slane %v4581, 1
    %v4583 = vadd.f32 %v4581, %v4582
    %v4584 = vrot.slane %v4575, 4
    %v4585 = vadd.f32 %v4575, %v4584
    %v4586 = vrot.slane %v4585, 2
    %v4587 = vadd.f32 %v4585, %v4586
    %v4588 = vrot.slane %v4587, 1
    %v4589 = vadd.f32 %v4587, %v4588
    %vm4590 = vcmp.eq.s32.totalorder %v4131, 2
    %vm4591 = vcmp.eq.s32.totalorder %v4146, 2
    %vm4592 = vcmp.eq.s32.totalorder %v4161, 2
    %vm4593 = vcmp.eq.s32.totalorder %v4176, 2
    %vm4594 = vcmp.eq.s32.totalorder %v4191, 2
    %vm4595 = vcmp.eq.s32.totalorder %v4206, 2
    %vm4596 = vcmp.eq.s32.totalorder %v4221, 2
    %vm4597 = vcmp.eq.s32.totalorder %v4236, 2
    %vm4598 = vcmp.eq.s32.totalorder %v4251, 2
    %vm4599 = vcmp.eq.s32.totalorder %v4266, 2
    %vm4600 = vcmp.eq.s32.totalorder %v4281, 2
    %vm4601 = vcmp.eq.s32.totalorder %v4296, 2
    %vm4602 = vcmp.eq.s32.totalorder %v4311, 2
    %vm4603 = vcmp.eq.s32.totalorder %v4326, 2
    %vm4604 = vcmp.eq.s32.totalorder %v4341, 2
    %vm4605 = vcmp.eq.s32.totalorder %v4356, 2
    %vm4606 = vmand %vm3685, %vm4590
    %vm4607 = vmand %vm3686, %vm4591
    %vm4608 = vmand %vm3687, %vm4592
    %vm4609 = vmand %vm3688, %vm4593
    %vm4610 = vmand %vm3689, %vm4594
    %vm4611 = vmand %vm3690, %vm4595
    %vm4612 = vmand %vm3691, %vm4596
    %vm4613 = vmand %vm3692, %vm4597
    %vm4614 = vmand %vm3693, %vm4598
    %vm4615 = vmand %vm3694, %vm4599
    %vm4616 = vmand %vm3695, %vm4600
    %vm4617 = vmand %vm3696, %vm4601
    %vm4618 = vmand %vm3697, %vm4602
    %vm4619 = vmand %vm3698, %vm4603
    %vm4620 = vmand %vm3699, %vm4604
    %vm4621 = vmand %vm3700, %vm4605
    %v4622 = vsel %vm4606, %v3449, 0.0
    %v4623 = vsel %vm4607, %v3453, 0.0
    %v4624 = vsel %vm4608, %v3454, 0.0
    %v4625 = vsel %vm4609, %v3455, 0.0
    %v4626 = vsel %vm4610, %v3456, 0.0
    %v4627 = vsel %vm4611, %v3457, 0.0
    %v4628 = vsel %vm4612, %v3458, 0.0
    %v4629 = vsel %vm4613, %v3459, 0.0
    %v4630 = vsel %vm4614, %v3450, 0.0
    %v4631 = vsel %vm4615, %v3460, 0.0
    %v4632 = vsel %vm4616, %v3461, 0.0
    %v4633 = vsel %vm4617, %v3462, 0.0
    %v4634 = vsel %vm4618, %v3463, 0.0
    %v4635 = vsel %vm4619, %v3464, 0.0
    %v4636 = vsel %vm4620, %v3465, 0.0
    %v4637 = vsel %vm4621, %v3466, 0.0
    %v4654 = vrot.slane %v4623, 7
    %v4655 = vsel %vm1012, %v4654, %v4622
    %v4656 = vrot.slane %v4624, 6
    %v4657 = vsel %vm4440, %v4656, %v4655
    %v4658 = vrot.slane %v4625, 5
    %v4659 = vsel %vm1034, %v4658, %v4657
    %v4660 = vrot.slane %v4626, 4
    %v4661 = vsel %vm4445, %v4660, %v4659
    %v4662 = vrot.slane %v4627, 3
    %v4663 = vsel %vm4448, %v4662, %v4661
    %v4664 = vrot.slane %v4628, 2
    %v4665 = vsel %vm4451, %v4664, %v4663
    %v4666 = vrot.slane %v4629, 1
    %v4667 = vsel %vm4454, %v4666, %v4665
    %v4668 = vrot.slane %v4631, 7
    %v4669 = vsel %vm1012, %v4668, %v4630
    %v4670 = vrot.slane %v4632, 6
    %v4671 = vsel %vm4440, %v4670, %v4669
    %v4672 = vrot.slane %v4633, 5
    %v4673 = vsel %vm1034, %v4672, %v4671
    %v4674 = vrot.slane %v4634, 4
    %v4675 = vsel %vm4445, %v4674, %v4673
    %v4676 = vrot.slane %v4635, 3
    %v4677 = vsel %vm4448, %v4676, %v4675
    %v4678 = vrot.slane %v4636, 2
    %v4679 = vsel %vm4451, %v4678, %v4677
    %v4680 = vrot.slane %v4637, 1
    %v4681 = vsel %vm4454, %v4680, %v4679
    %v4684 = vrot.slane %v4667, 4
    %v4685 = vadd.f32 %v4667, %v4684
    %v4686 = vrot.slane %v4685, 2
    %v4687 = vadd.f32 %v4685, %v4686
    %v4688 = vrot.slane %v4687, 1
    %v4689 = vadd.f32 %v4687, %v4688
    %v4690 = vrot.slane %v4681, 4
    %v4691 = vadd.f32 %v4681, %v4690
    %v4692 = vrot.slane %v4691, 2
    %v4693 = vadd.f32 %v4691, %v4692
    %v4694 = vrot.slane %v4693, 1
    %v4695 = vadd.f32 %v4693, %v4694
    %vm4696 = vcmp.eq.s32.totalorder %v4131, 3
    %vm4697 = vcmp.eq.s32.totalorder %v4146, 3
    %vm4698 = vcmp.eq.s32.totalorder %v4161, 3
    %vm4699 = vcmp.eq.s32.totalorder %v4176, 3
    %vm4700 = vcmp.eq.s32.totalorder %v4191, 3
    %vm4701 = vcmp.eq.s32.totalorder %v4206, 3
    %vm4702 = vcmp.eq.s32.totalorder %v4221, 3
    %vm4703 = vcmp.eq.s32.totalorder %v4236, 3
    %vm4704 = vcmp.eq.s32.totalorder %v4251, 3
    %vm4705 = vcmp.eq.s32.totalorder %v4266, 3
    %vm4706 = vcmp.eq.s32.totalorder %v4281, 3
    %vm4707 = vcmp.eq.s32.totalorder %v4296, 3
    %vm4708 = vcmp.eq.s32.totalorder %v4311, 3
    %vm4709 = vcmp.eq.s32.totalorder %v4326, 3
    %vm4710 = vcmp.eq.s32.totalorder %v4341, 3
    %vm4711 = vcmp.eq.s32.totalorder %v4356, 3
    %vm4712 = vmand %vm3685, %vm4696
    %vm4713 = vmand %vm3686, %vm4697
    %vm4714 = vmand %vm3687, %vm4698
    %vm4715 = vmand %vm3688, %vm4699
    %vm4716 = vmand %vm3689, %vm4700
    %vm4717 = vmand %vm3690, %vm4701
    %vm4718 = vmand %vm3691, %vm4702
    %vm4719 = vmand %vm3692, %vm4703
    %vm4720 = vmand %vm3693, %vm4704
    %vm4721 = vmand %vm3694, %vm4705
    %vm4722 = vmand %vm3695, %vm4706
    %vm4723 = vmand %vm3696, %vm4707
    %vm4724 = vmand %vm3697, %vm4708
    %vm4725 = vmand %vm3698, %vm4709
    %vm4726 = vmand %vm3699, %vm4710
    %vm4727 = vmand %vm3700, %vm4711
    %v4728 = vsel %vm4712, %v3449, 0.0
    %v4729 = vsel %vm4713, %v3453, 0.0
    %v4730 = vsel %vm4714, %v3454, 0.0
    %v4731 = vsel %vm4715, %v3455, 0.0
    %v4732 = vsel %vm4716, %v3456, 0.0
    %v4733 = vsel %vm4717, %v3457, 0.0
    %v4734 = vsel %vm4718, %v3458, 0.0
    %v4735 = vsel %vm4719, %v3459, 0.0
    %v4736 = vsel %vm4720, %v3450, 0.0
    %v4737 = vsel %vm4721, %v3460, 0.0
    %v4738 = vsel %vm4722, %v3461, 0.0
    %v4739 = vsel %vm4723, %v3462, 0.0
    %v4740 = vsel %vm4724, %v3463, 0.0
    %v4741 = vsel %vm4725, %v3464, 0.0
    %v4742 = vsel %vm4726, %v3465, 0.0
    %v4743 = vsel %vm4727, %v3466, 0.0
    %v4760 = vrot.slane %v4729, 7
    %v4761 = vsel %vm1012, %v4760, %v4728
    %v4762 = vrot.slane %v4730, 6
    %v4763 = vsel %vm4440, %v4762, %v4761
    %v4764 = vrot.slane %v4731, 5
    %v4765 = vsel %vm1034, %v4764, %v4763
    %v4766 = vrot.slane %v4732, 4
    %v4767 = vsel %vm4445, %v4766, %v4765
    %v4768 = vrot.slane %v4733, 3
    %v4769 = vsel %vm4448, %v4768, %v4767
    %v4770 = vrot.slane %v4734, 2
    %v4771 = vsel %vm4451, %v4770, %v4769
    %v4772 = vrot.slane %v4735, 1
    %v4773 = vsel %vm4454, %v4772, %v4771
    %v4774 = vrot.slane %v4737, 7
    %v4775 = vsel %vm1012, %v4774, %v4736
    %v4776 = vrot.slane %v4738, 6
    %v4777 = vsel %vm4440, %v4776, %v4775
    %v4778 = vrot.slane %v4739, 5
    %v4779 = vsel %vm1034, %v4778, %v4777
    %v4780 = vrot.slane %v4740, 4
    %v4781 = vsel %vm4445, %v4780, %v4779
    %v4782 = vrot.slane %v4741, 3
    %v4783 = vsel %vm4448, %v4782, %v4781
    %v4784 = vrot.slane %v4742, 2
    %v4785 = vsel %vm4451, %v4784, %v4783
    %v4786 = vrot.slane %v4743, 1
    %v4787 = vsel %vm4454, %v4786, %v4785
    %v4790 = vrot.slane %v4773, 4
    %v4791 = vadd.f32 %v4773, %v4790
    %v4792 = vrot.slane %v4791, 2
    %v4793 = vadd.f32 %v4791, %v4792
    %v4794 = vrot.slane %v4793, 1
    %v4795 = vadd.f32 %v4793, %v4794
    %v4796 = vrot.slane %v4787, 4
    %v4797 = vadd.f32 %v4787, %v4796
    %v4798 = vrot.slane %v4797, 2
    %v4799 = vadd.f32 %v4797, %v4798
    %v4800 = vrot.slane %v4799, 1
    %v4801 = vadd.f32 %v4799, %v4800
    %vm4802 = vcmp.eq.s32.totalorder %v4131, 4
    %vm4803 = vcmp.eq.s32.totalorder %v4146, 4
    %vm4804 = vcmp.eq.s32.totalorder %v4161, 4
    %vm4805 = vcmp.eq.s32.totalorder %v4176, 4
    %vm4806 = vcmp.eq.s32.totalorder %v4191, 4
    %vm4807 = vcmp.eq.s32.totalorder %v4206, 4
    %vm4808 = vcmp.eq.s32.totalorder %v4221, 4
    %vm4809 = vcmp.eq.s32.totalorder %v4236, 4
    %vm4810 = vcmp.eq.s32.totalorder %v4251, 4
    %vm4811 = vcmp.eq.s32.totalorder %v4266, 4
    %vm4812 = vcmp.eq.s32.totalorder %v4281, 4
    %vm4813 = vcmp.eq.s32.totalorder %v4296, 4
    %vm4814 = vcmp.eq.s32.totalorder %v4311, 4
    %vm4815 = vcmp.eq.s32.totalorder %v4326, 4
    %vm4816 = vcmp.eq.s32.totalorder %v4341, 4
    %vm4817 = vcmp.eq.s32.totalorder %v4356, 4
    %vm4818 = vmand %vm3685, %vm4802
    %vm4819 = vmand %vm3686, %vm4803
    %vm4820 = vmand %vm3687, %vm4804
    %vm4821 = vmand %vm3688, %vm4805
    %vm4822 = vmand %vm3689, %vm4806
    %vm4823 = vmand %vm3690, %vm4807
    %vm4824 = vmand %vm3691, %vm4808
    %vm4825 = vmand %vm3692, %vm4809
    %vm4826 = vmand %vm3693, %vm4810
    %vm4827 = vmand %vm3694, %vm4811
    %vm4828 = vmand %vm3695, %vm4812
    %vm4829 = vmand %vm3696, %vm4813
    %vm4830 = vmand %vm3697, %vm4814
    %vm4831 = vmand %vm3698, %vm4815
    %vm4832 = vmand %vm3699, %vm4816
    %vm4833 = vmand %vm3700, %vm4817
    %v4834 = vsel %vm4818, %v3449, 0.0
    %v4835 = vsel %vm4819, %v3453, 0.0
    %v4836 = vsel %vm4820, %v3454, 0.0
    %v4837 = vsel %vm4821, %v3455, 0.0
    %v4838 = vsel %vm4822, %v3456, 0.0
    %v4839 = vsel %vm4823, %v3457, 0.0
    %v4840 = vsel %vm4824, %v3458, 0.0
    %v4841 = vsel %vm4825, %v3459, 0.0
    %v4842 = vsel %vm4826, %v3450, 0.0
    %v4843 = vsel %vm4827, %v3460, 0.0
    %v4844 = vsel %vm4828, %v3461, 0.0
    %v4845 = vsel %vm4829, %v3462, 0.0
    %v4846 = vsel %vm4830, %v3463, 0.0
    %v4847 = vsel %vm4831, %v3464, 0.0
    %v4848 = vsel %vm4832, %v3465, 0.0
    %v4849 = vsel %vm4833, %v3466, 0.0
    %v4866 = vrot.slane %v4835, 7
    %v4867 = vsel %vm1012, %v4866, %v4834
    %v4868 = vrot.slane %v4836, 6
    %v4869 = vsel %vm4440, %v4868, %v4867
    %v4870 = vrot.slane %v4837, 5
    %v4871 = vsel %vm1034, %v4870, %v4869
    %v4872 = vrot.slane %v4838, 4
    %v4873 = vsel %vm4445, %v4872, %v4871
    %v4874 = vrot.slane %v4839, 3
    %v4875 = vsel %vm4448, %v4874, %v4873
    %v4876 = vrot.slane %v4840, 2
    %v4877 = vsel %vm4451, %v4876, %v4875
    %v4878 = vrot.slane %v4841, 1
    %v4879 = vsel %vm4454, %v4878, %v4877
    %v4880 = vrot.slane %v4843, 7
    %v4881 = vsel %vm1012, %v4880, %v4842
    %v4882 = vrot.slane %v4844, 6
    %v4883 = vsel %vm4440, %v4882, %v4881
    %v4884 = vrot.slane %v4845, 5
    %v4885 = vsel %vm1034, %v4884, %v4883
    %v4886 = vrot.slane %v4846, 4
    %v4887 = vsel %vm4445, %v4886, %v4885
    %v4888 = vrot.slane %v4847, 3
    %v4889 = vsel %vm4448, %v4888, %v4887
    %v4890 = vrot.slane %v4848, 2
    %v4891 = vsel %vm4451, %v4890, %v4889
    %v4892 = vrot.slane %v4849, 1
    %v4893 = vsel %vm4454, %v4892, %v4891
    %v4896 = vrot.slane %v4879, 4
    %v4897 = vadd.f32 %v4879, %v4896
    %v4898 = vrot.slane %v4897, 2
    %v4899 = vadd.f32 %v4897, %v4898
    %v4900 = vrot.slane %v4899, 1
    %v4901 = vadd.f32 %v4899, %v4900
    %v4902 = vrot.slane %v4893, 4
    %v4903 = vadd.f32 %v4893, %v4902
    %v4904 = vrot.slane %v4903, 2
    %v4905 = vadd.f32 %v4903, %v4904
    %v4906 = vrot.slane %v4905, 1
    %v4907 = vadd.f32 %v4905, %v4906
    %v4910 = vrot.slane %v4483, 7
    %v4911 = vsel %vm1012, %v4910, %v4477
    %v4915 = vrot.slane %v4589, 7
    %v4916 = vsel %vm1012, %v4915, %v4583
    %v4920 = vrot.slane %v4695, 7
    %v4921 = vsel %vm1012, %v4920, %v4689
    %v4925 = vrot.slane %v4801, 7
    %v4926 = vsel %vm1012, %v4925, %v4795
    %v4930 = vrot.slane %v4907, 7
    %v4931 = vsel %vm1012, %v4930, %v4901
    %v4933 = vld [vmem:[%s10] sm:$0xff]
    %v4934 = vld [vmem:[%s10 + $0x8] sm:$0xff]
    %v4935 = vld [vmem:[%s10 + $0x10] sm:$0xff]
    %v4936 = vld [vmem:[%s10 + $0x18] sm:$0xff]
    %v4937 = vld [vmem:[%s10 + $0x20] sm:$0xff]
    %v4938 = vld [vmem:[%s10 + $0x28] sm:$0xff]
    %v4939 = vld [vmem:[%s10 + $0x30] sm:$0xff]
    %v4940 = vld [vmem:[%s10 + $0x38] sm:$0xff]
    %v4941 = vld [vmem:[%s10 + $0x40] sm:$0xff]
    %v4942 = vld [vmem:[%s10 + $0x48] sm:$0xff]
    %v4943 = vld [vmem:[%s10 + $0x50] sm:$0xff]
    %v4944 = vld [vmem:[%s10 + $0x58] sm:$0xff]
    %v4945 = vld [vmem:[%s10 + $0x60] sm:$0xff]
    %v4946 = vld [vmem:[%s10 + $0x68] sm:$0xff]
    %v4947 = vld [vmem:[%s10 + $0x70] sm:$0xff]
    %v4948 = vld [vmem:[%s10 + $0x78] sm:$0xff]
    %v4949 = vld [vmem:[%s10 + $0x80] sm:$0xff]
    %v4950 = vld [vmem:[%s10 + $0x88] sm:$0xff]
    %v4951 = vld [vmem:[%s10 + $0x90] sm:$0xff]
    %v4952 = vld [vmem:[%s10 + $0x98] sm:$0xff]
    %v4953 = vld [vmem:[%s10 + $0xa0] sm:$0xff]
    %v4954 = vld [vmem:[%s10 + $0xa8] sm:$0xff]
    %v4955 = vld [vmem:[%s10 + $0xb0] sm:$0xff]
    %v4956 = vld [vmem:[%s10 + $0xb8] sm:$0xff]
    %v4957 = vld [vmem:[%s10 + $0xc0] sm:$0xff]
    %v4958 = vld [vmem:[%s10 + $0xc8] sm:$0xff]
    %v4959 = vld [vmem:[%s10 + $0xd0] sm:$0xff]
    %v4960 = vld [vmem:[%s10 + $0xd8] sm:$0xff]
    %v4961 = vld [vmem:[%s10 + $0xe0] sm:$0xff]
    %v4962 = vld [vmem:[%s10 + $0xe8] sm:$0xff]
    %v4963 = vld [vmem:[%s10 + $0xf0] sm:$0xff]
    %v4964 = vld [vmem:[%s10 + $0xf8] sm:$0xff]
    %v4965 = vld [vmem:[%s10 + $0x100] sm:$0xff]
    %v4966 = vld [vmem:[%s10 + $0x108] sm:$0xff]
    %v4967 = vld [vmem:[%s10 + $0x110] sm:$0xff]
    %v4968 = vld [vmem:[%s10 + $0x118] sm:$0xff]
    %v4969 = vld [vmem:[%s10 + $0x120] sm:$0xff]
    %v4970 = vld [vmem:[%s10 + $0x128] sm:$0xff]
    %v4971 = vld [vmem:[%s10 + $0x130] sm:$0xff]
    %v4972 = vld [vmem:[%s10 + $0x138] sm:$0xff]
    %v4973 = vld [vmem:[%s10 + $0x140] sm:$0xff]
    %v4974 = vld [vmem:[%s10 + $0x148] sm:$0xff]
    %v4975 = vld [vmem:[%s10 + $0x150] sm:$0xff]
    %v4976 = vld [vmem:[%s10 + $0x158] sm:$0xff]
    %v4977 = vld [vmem:[%s10 + $0x160] sm:$0xff]
    %v4978 = vld [vmem:[%s10 + $0x168] sm:$0xff]
    %v4979 = vld [vmem:[%s10 + $0x170] sm:$0xff]
    %v4980 = vld [vmem:[%s10 + $0x178] sm:$0xff]
    %v4981 = vld [vmem:[%s10 + $0x180] sm:$0xff]
    %v4982 = vld [vmem:[%s10 + $0x188] sm:$0xff]
    %v4983 = vld [vmem:[%s10 + $0x190] sm:$0xff]
    %v4984 = vld [vmem:[%s10 + $0x198] sm:$0xff]
    %v4985 = vld [vmem:[%s10 + $0x1a0] sm:$0xff]
    %v4986 = vld [vmem:[%s10 + $0x1a8] sm:$0xff]
    %v4987 = vld [vmem:[%s10 + $0x1b0] sm:$0xff]
    %v4988 = vld [vmem:[%s10 + $0x1b8] sm:$0xff]
    %v4989 = vld [vmem:[%s10 + $0x1c0] sm:$0xff]
    %v4990 = vld [vmem:[%s10 + $0x1c8] sm:$0xff]
    %v4991 = vld [vmem:[%s10 + $0x1d0] sm:$0xff]
    %v4992 = vld [vmem:[%s10 + $0x1d8] sm:$0xff]
    %v4993 = vld [vmem:[%s10 + $0x1e0] sm:$0xff]
    %v4994 = vld [vmem:[%s10 + $0x1e8] sm:$0xff]
    %v4995 = vld [vmem:[%s10 + $0x1f0] sm:$0xff]
    %v4996 = vld [vmem:[%s10 + $0x1f8] sm:$0xff]
    %v4997 = vld [vmem:[%s10 + $0x200] sm:$0xff]
    %v4998 = vld [vmem:[%s10 + $0x208] sm:$0xff]
    %v4999 = vld [vmem:[%s10 + $0x210] sm:$0xff]
    %v5000 = vld [vmem:[%s10 + $0x218] sm:$0xff]
    %v5001 = vld [vmem:[%s10 + $0x220] sm:$0xff]
    %v5002 = vld [vmem:[%s10 + $0x228] sm:$0xff]
    %v5003 = vld [vmem:[%s10 + $0x230] sm:$0xff]
    %v5004 = vld [vmem:[%s10 + $0x238] sm:$0xff]
    %v5005 = vld [vmem:[%s10 + $0x240] sm:$0xff]
    %v5006 = vld [vmem:[%s10 + $0x248] sm:$0xff]
    %v5007 = vld [vmem:[%s10 + $0x250] sm:$0xff]
    %v5008 = vld [vmem:[%s10 + $0x258] sm:$0xff]
    %v5009 = vld [vmem:[%s10 + $0x260] sm:$0xff]
    %v5010 = vld [vmem:[%s10 + $0x268] sm:$0xff]
    %v5011 = vld [vmem:[%s10 + $0x270] sm:$0xff]
    %v5012 = vld [vmem:[%s10 + $0x278] sm:$0xff]
    %v5013 = vld [vmem:[%s11] sm:$0x1]
    %v5015 = vperm.slane %v5013, 0
    %5017 = vmatpush.msra.mxu0 %v4948
    %5018 = vmatpush.msra.mxu0 %v4947
    %5019 = vmatpush.msra.mxu0 %v4946
    %5020 = vmatpush.msra.mxu0 %v4945
    %5021 = vmatpush.msra.mxu0 %v4944
    %5022 = vmatpush.msra.mxu0 %v4943
    %5023 = vmatpush.msra.mxu0 %v4942
    %5024 = vmatpush.msra.mxu0 %v4941
    %5025 = vmatpush.msra.mxu0 %v4940
    %5026 = vmatpush.msra.mxu0 %v4939
    %5027 = vmatpush.msra.mxu0 %v4938
    %5028 = vmatpush.msra.mxu0 %v4937
    %5029 = vmatpush.msra.mxu0 %v4936
    %5030 = vmatpush.msra.mxu0 %v4935
    %5031 = vmatpush.msra.mxu0 %v4934
    %5032 = vmatpush.msra.mxu0 %v4933
    %5033 = vmatmul.f32.gmra.mxu0 %v4911
    %v5034 = vpop.f32.mrf.mxu0
    %v5035 = vadd.f32 %v5015, %v5034
    %5036 = vdwg.mxu0
    %5037 = vmatpush.msra.mxu0 %v4964
    %5038 = vmatpush.msra.mxu0 %v4963
    %5039 = vmatpush.msra.mxu0 %v4962
    %5040 = vmatpush.msra.mxu0 %v4961
    %5041 = vmatpush.msra.mxu0 %v4960
    %5042 = vmatpush.msra.mxu0 %v4959
    %5043 = vmatpush.msra.mxu0 %v4958
    %5044 = vmatpush.msra.mxu0 %v4957
    %5045 = vmatpush.msra.mxu0 %v4956
    %5046 = vmatpush.msra.mxu0 %v4955
    %5047 = vmatpush.msra.mxu0 %v4954
    %5048 = vmatpush.msra.mxu0 %v4953
    %5049 = vmatpush.msra.mxu0 %v4952
    %5050 = vmatpush.msra.mxu0 %v4951
    %5051 = vmatpush.msra.mxu0 %v4950
    %5052 = vmatpush.msra.mxu0 %v4949
    %5053 = vmatmul.f32.gmra.mxu0 %v4916
    %v5054 = vpop.f32.mrf.mxu0
    %v5055 = vadd.f32 %v5035, %v5054
    %5056 = vdwg.mxu0
    %5057 = vmatpush.msra.mxu0 %v4980
    %5058 = vmatpush.msra.mxu0 %v4979
    %5059 = vmatpush.msra.mxu0 %v4978
    %5060 = vmatpush.msra.mxu0 %v4977
    %5061 = vmatpush.msra.mxu0 %v4976
    %5062 = vmatpush.msra.mxu0 %v4975
    %5063 = vmatpush.msra.mxu0 %v4974
    %5064 = vmatpush.msra.mxu0 %v4973
    %5065 = vmatpush.msra.mxu0 %v4972
    %5066 = vmatpush.msra.mxu0 %v4971
    %5067 = vmatpush.msra.mxu0 %v4970
    %5068 = vmatpush.msra.mxu0 %v4969
    %5069 = vmatpush.msra.mxu0 %v4968
    %5070 = vmatpush.msra.mxu0 %v4967
    %5071 = vmatpush.msra.mxu0 %v4966
    %5072 = vmatpush.msra.mxu0 %v4965
    %5073 = vmatmul.f32.gmra.mxu0 %v4921
    %v5074 = vpop.f32.mrf.mxu0
    %v5075 = vadd.f32 %v5055, %v5074
    %5076 = vdwg.mxu0
    %5077 = vmatpush.msra.mxu0 %v4996
    %5078 = vmatpush.msra.mxu0 %v4995
    %5079 = vmatpush.msra.mxu0 %v4994
    %5080 = vmatpush.msra.mxu0 %v4993
    %5081 = vmatpush.msra.mxu0 %v4992
    %5082 = vmatpush.msra.mxu0 %v4991
    %5083 = vmatpush.msra.mxu0 %v4990
    %5084 = vmatpush.msra.mxu0 %v4989
    %5085 = vmatpush.msra.mxu0 %v4988
    %5086 = vmatpush.msra.mxu0 %v4987
    %5087 = vmatpush.msra.mxu0 %v4986
    %5088 = vmatpush.msra.mxu0 %v4985
    %5089 = vmatpush.msra.mxu0 %v4984
    %5090 = vmatpush.msra.mxu0 %v4983
    %5091 = vmatpush.msra.mxu0 %v4982
    %5092 = vmatpush.msra.mxu0 %v4981
    %5093 = vmatmul.f32.gmra.mxu0 %v4926
    %v5094 = vpop.f32.mrf.mxu0
    %v5095 = vadd.f32 %v5075, %v5094
    %5096 = vdwg.mxu0
    %5097 = vmatpush.msra.mxu0 %v5012
    %5098 = vmatpush.msra.mxu0 %v5011
    %5099 = vmatpush.msra.mxu0 %v5010
    %5100 = vmatpush.msra.mxu0 %v5009
    %5101 = vmatpush.msra.mxu0 %v5008
    %5102 = vmatpush.msra.mxu0 %v5007
    %5103 = vmatpush.msra.mxu0 %v5006
    %5104 = vmatpush.msra.mxu0 %v5005
    %5105 = vmatpush.msra.mxu0 %v5004
    %5106 = vmatpush.msra.mxu0 %v5003
    %5107 = vmatpush.msra.mxu0 %v5002
    %5108 = vmatpush.msra.mxu0 %v5001
    %5109 = vmatpush.msra.mxu0 %v5000
    %5110 = vmatpush.msra.mxu0 %v4999
    %5111 = vmatpush.msra.mxu0 %v4998
    %5112 = vmatpush.msra.mxu0 %v4997
    %5113 = vmatmul.f32.gmra.mxu0 %v4931
    %v5114 = vpop.f32.mrf.mxu0
    %v5115 = vadd.f32 %v5095, %v5114
    %5116 = vdwg.mxu0
    %v5117 = vld [vmem:[%s14] sm:$0xff]
    %v5118 = vld [vmem:[%s14 + $0x8] sm:$0xff]
    %v5119 = vld [vmem:[%s14 + $0x10] sm:$0xff]
    %v5120 = vld [vmem:[%s14 + $0x18] sm:$0xff]
    %v5121 = vld [vmem:[%s14 + $0x20] sm:$0xff]
    %v5122 = vld [vmem:[%s14 + $0x28] sm:$0xff]
    %v5123 = vld [vmem:[%s14 + $0x30] sm:$0xff]
    %v5124 = vld [vmem:[%s14 + $0x38] sm:$0xff]
    %v5125 = vld [vmem:[%s14 + $0x40] sm:$0xff]
    %v5126 = vld [vmem:[%s14 + $0x48] sm:$0xff]
    %v5127 = vld [vmem:[%s14 + $0x50] sm:$0xff]
    %v5128 = vld [vmem:[%s14 + $0x58] sm:$0xff]
    %v5129 = vld [vmem:[%s14 + $0x60] sm:$0xff]
    %v5130 = vld [vmem:[%s14 + $0x68] sm:$0xff]
    %v5131 = vld [vmem:[%s14 + $0x70] sm:$0xff]
    %v5132 = vld [vmem:[%s14 + $0x78] sm:$0xff]
    %v5133 = vld [vmem:[%s15] sm:$0x1]
    %v5135 = vperm.slane %v5133, 0
    %v5139 = vsel %vm1012, %v662, %v661
    %5141 = vmatpush.msra.mxu0 %v5132
    %5142 = vmatpush.msra.mxu0 %v5131
    %5143 = vmatpush.msra.mxu0 %v5130
    %5144 = vmatpush.msra.mxu0 %v5129
    %5145 = vmatpush.msra.mxu0 %v5128
    %5146 = vmatpush.msra.mxu0 %v5127
    %5147 = vmatpush.msra.mxu0 %v5126
    %5148 = vmatpush.msra.mxu0 %v5125
    %5149 = vmatpush.msra.mxu0 %v5124
    %5150 = vmatpush.msra.mxu0 %v5123
    %5151 = vmatpush.msra.mxu0 %v5122
    %5152 = vmatpush.msra.mxu0 %v5121
    %5153 = vmatpush.msra.mxu0 %v5120
    %5154 = vmatpush.msra.mxu0 %v5119
    %5155 = vmatpush.msra.mxu0 %v5118
    %5156 = vmatpush.msra.mxu0 %v5117
    %5157 = vmatmul.f32.gmra.mxu0 %v5139
    %v5158 = vpop.f32.mrf.mxu0
    %v5159 = vadd.f32 %v5135, %v5158
    %5160 = vdwg.mxu0
    %v5162 = vrot.slane %v3421, 6
    %v5165 = vrot.slane %v5159, 4
    %v5167 = vsel %vm1049, %v5115, %v5162
    %vm5168 = vcmask 1043456
    %v5169 = vsel %vm5168, %v5167, %v5165
    %v5170 = vld [vmem:[%s16] sm:$0x1]
    %v5171 = vld [vmem:[%s17] sm:$0x1]
    %vm5172 = vcmask 1045504
    %v5173 = vsel %vm5172, %v5169, 0.0
    %5174 = vadd.xlane.f32.xlu0 %v5173
    %v5175 = vpop.xlane.xlu0 %5174
    %v5176 = vmul.f32 %v5175, %v99
    %v5177 = vsub.f32 %v5169, %v5176
    %v5178 = vmul.f32 %v5177, %v5177
    %v5179 = vsel %vm5172, %v5178, 0.0
    %5180 = vadd.xlane.f32.xlu0 %v5179
    %v5181 = vpop.xlane.xlu0 %5180
    %v5182 = vmul.f32 %v5181, %v99
    %v5183 = vadd.f32 %v5182, 1e-05
    %v5184 = vrsqrt.pop %v5183
    %v5185 = vmul.f32 %v5184, %v5183
    %v5186 = vmul.f32 %v5185, %v5184
    %v5187 = vmul.f32 0.5, %v5186
    %v5188 = vsub.f32 1.5, %v5187
    %v5189 = vmul.f32 %v5184, %v5188
    %vm5190 = vweird.f32 %v5183
    %vm5191 = vweird.f32 %v5184
    %vm5192 = vmor %vm5190, %vm5191
    %v5193 = vsel %vm5192, %v5184, %v5189
    %v5194 = vmul.f32 %v5177, %v5193
    %v5196 = vperm.slane %v5170, 0
    %v5198 = vmul.f32 %v5194, %v5196
    %v5200 = vperm.slane %v5171, 0
    %v5202 = vadd.f32 %v5198, %v5200
    %v5203 = vld [vmem:[%s18] sm:$0x1]
    %v5205 = vperm.slane %v5203, 0
    %v5207 = vmul.f32 %v5202, %v5205
    %v5208 = vsel %vm5172, %v5207, 0.0
    %5209 = vadd.xlane.f32.xlu0 %v5208
    %v5210 = vpop.xlane.xlu0 %5209
    %v5211 = vmul.f32 %v5210, 0.57735026
    %v5213 = vrot.slane %v5211, 2
    %v5215 = vmax.f32 %v5211, %v5213
    %v5216 = vrot.slane %v5211, 4
    %v5218 = vmax.f32 %v5215, %v5216
    %v5219 = vsub.f32 %v5211, %v5218
    %v5220 = vmul.f32 %v5219, 1.442695
    %v5221 = vpow.pop %v5220
    %v5223 = vrot.slane %v5218, 6
    %v5225 = vsub.f32 %v5211, %v5223
    %v5226 = vmul.f32 %v5225, 1.442695
    %v5227 = vpow.pop %v5226
    %v5228 = vrot.slane %v5218, 4
    %v5230 = vsub.f32 %v5211, %v5228
    %v5231 = vmul.f32 %v5230, 1.442695
    %v5232 = vpow.pop %v5231
    %v5234 = vrot.slane %v5227, 2
    %v5236 = vadd.f32 %v5221, %v5234
    %v5238 = vrot.slane %v5232, 4
    %v5240 = vadd.f32 %v5236, %v5238
    %v5241 = vrcp.pop %v5240
    %v5242 = vmul.f32 %v5221, %v5241
    %5244 = vset.pattern.permute.xlu0 0
    %5245 = vperm.xlu0 %5244, %v5242
    %v5246 = vpop.permute.xlu0 %5245
    %v5248 = vmul.f32 %v5115, %v5246
    %v5250 = vrot.slane %v5241, 6
    %v5252 = vmul.f32 %v5227, %v5250
    %5254 = vset.pattern.permute.xlu0 0
    %5255 = vperm.xlu0 %5254, %v5252
    %v5256 = vpop.permute.xlu0 %5255
    %v5257 = vrot.slane %v5256, 2
    %v5259 = vmul.f32 %v3421, %v5257
    %v5260 = vadd.f32 %v5248, %v5259
    %v5261 = vrot.slane %v5241, 4
    %v5263 = vmul.f32 %v5232, %v5261
    %5265 = vset.pattern.permute.xlu0 0
    %5266 = vperm.xlu0 %5265, %v5263
    %v5267 = vpop.permute.xlu0 %5266
    %v5268 = vrot.slane %v5267, 4
    %v5270 = vmul.f32 %v5159, %v5268
    %v5271 = vadd.f32 %v5260, %v5270
    %v5272 = vld [vmem:[%s19] sm:$0xff]
    %v5273 = vld [vmem:[%s19 + $0x8] sm:$0xff]
    %v5274 = vld [vmem:[%s19 + $0x10] sm:$0xff]
    %v5275 = vld [vmem:[%s19 + $0x18] sm:$0xff]
    %v5276 = vld [vmem:[%s19 + $0x20] sm:$0xff]
    %v5277 = vld [vmem:[%s19 + $0x28] sm:$0xff]
    %v5278 = vld [vmem:[%s19 + $0x30] sm:$0xff]
    %v5279 = vld [vmem:[%s19 + $0x38] sm:$0xff]
    %v5280 = vld [vmem:[%s19 + $0x40] sm:$0xff]
    %v5281 = vld [vmem:[%s19 + $0x48] sm:$0xff]
    %v5282 = vld [vmem:[%s19 + $0x50] sm:$0xff]
    %v5283 = vld [vmem:[%s19 + $0x58] sm:$0xff]
    %v5284 = vld [vmem:[%s19 + $0x60] sm:$0xff]
    %v5285 = vld [vmem:[%s19 + $0x68] sm:$0xff]
    %v5286 = vld [vmem:[%s19 + $0x70] sm:$0xff]
    %v5287 = vld [vmem:[%s19 + $0x78] sm:$0xff]
    %v5288 = vld [vmem:[%s20] sm:$0x1]
    %v5290 = vperm.slane %v5288, 0
    %5292 = vmatpush.msra.mxu0 %v5287
    %5293 = vmatpush.msra.mxu0 %v5286
    %5294 = vmatpush.msra.mxu0 %v5285
    %5295 = vmatpush.msra.mxu0 %v5284
    %5296 = vmatpush.msra.mxu0 %v5283
    %5297 = vmatpush.msra.mxu0 %v5282
    %5298 = vmatpush.msra.mxu0 %v5281
    %5299 = vmatpush.msra.mxu0 %v5280
    %5300 = vmatpush.msra.mxu0 %v5279
    %5301 = vmatpush.msra.mxu0 %v5278
    %5302 = vmatpush.msra.mxu0 %v5277
    %5303 = vmatpush.msra.mxu0 %v5276
    %5304 = vmatpush.msra.mxu0 %v5275
    %5305 = vmatpush.msra.mxu0 %v5274
    %5306 = vmatpush.msra.mxu0 %v5273
    %5307 = vmatpush.msra.mxu0 %v5272
    %5308 = vmatmul.f32.gmra.mxu0 %v5271
    %v5309 = vpop.f32.mrf.mxu0
    %v5310 = vadd.f32 %v5290, %v5309
    %5311 = vdwg.mxu0
    %vm5312 = vcmask 9216
    %5313 = vst.msk [vmem:[#allocation2] sm:$0x3] %vm5312, %v5310
    %v5314 = vlaneseq
    %v5315 = vand.u32 %v5314, 127
    %vm5316 = vcmp.eq.s32.totalorder %v5315, 0
    %v5317 = vsel %vm5316, %v5211, 0.0
    %vm5318 = vcmp.eq.s32.totalorder %v5315, 1
    %v5319 = vsel %vm5318, %v5211, 0.0
    %v5321 = vrot.slane %v5319, 2
    %v5323 = vadd.f32 %v5317, %v5321
    %vm5324 = vcmp.eq.s32.totalorder %v5315, 2
    %v5325 = vsel %vm5324, %v5211, 0.0
    %v5327 = vrot.slane %v5325, 4
    %v5329 = vadd.f32 %v5323, %v5327
    %vm5330 = vcmask 17408
    %v5331 = vsel %vm5330, %v5329, -inf
    %v5332 = vrot.slane %v5331, 4
    %v5333 = vmax.f32 %v5331, %v5332
    %v5334 = vrot.slane %v5333, 2
    %v5335 = vmax.f32 %v5333, %v5334
    %v5336 = vrot.slane %v5335, 1
    %v5337 = vmax.f32 %v5335, %v5336
    %v5338 = vsub.f32 %v5329, %v5337
    %v5339 = vmul.f32 %v5338, 1.442695
    %v5340 = vpow.pop %v5339
    %v5341 = vsel %vm5330, %v5340, 0.0
    %v5342 = vrot.slane %v5341, 4
    %v5343 = vadd.f32 %v5341, %v5342
    %v5344 = vrot.slane %v5343, 2
    %v5345 = vadd.f32 %v5343, %v5344
    %v5346 = vrot.slane %v5345, 1
    %v5347 = vadd.f32 %v5345, %v5346
    %v5348 = vrcp.pop %v5347
    %v5349 = vmul.f32 %v5340, %v5348
    %5350 = vst.msk [vmem:[#allocation4] sm:$0x3] %vm5330, %v5349
    // Predicated region
    $region86: #{block_forward.1} parent=1 // pred_check
      _
    $region87: #{block_forward.1} parent=1 // pred_check_branch
      %5352 = sbr.rel (0) target = $region89
    $region88: #{block_forward.1} parent=1 // pred_region
      %5354 = vsyncadd [#allocation3], 0
      %s5356 = sshll.u32 [#allocation2], 4
      %s5357 = int_to_ptr.vmem [resolvable:$true] %s5356
      %s5358 = sshll.u32 %s21, 4
      %s5359 = int_to_ptr.hbm [resolvable:$true] %s5358
      %5361 = dma.vmem_to_hbm [thread:$0]  %s5357, 32, %s5359, [#allocation3]
    $region89: #{block_forward.1} parent=1 // pred_fallthru
      _
    // Predicated region
    $region90: #{block_forward.1} parent=1 // pred_check
      _
    $region91: #{block_forward.1} parent=1 // pred_check_branch
      %5363 = sbr.rel (0) target = $region93
    $region92: #{block_forward.1} parent=1 // pred_region
      %5365 = vsyncadd [#allocation5], 0
      %s5367 = sshll.u32 [#allocation4], 4
      %s5368 = int_to_ptr.vmem [resolvable:$true] %s5367
      %s5369 = sshll.u32 %s22, 4
      %s5370 = int_to_ptr.hbm [resolvable:$true] %s5369
      %5372 = dma.vmem_to_hbm [thread:$0]  %s5368, 32, %s5370, [#allocation5]
    $region93: #{block_forward.1} parent=1 // pred_fallthru
      _
    // Predicated region
    $region94: #{block_forward.1} parent=1 // pred_check
      _
    $region95: #{block_forward.1} parent=1 // pred_check_branch
      %5374 = sbr.rel (0) target = $region97
    $region96: #{block_forward.1} parent=1 // pred_region
      %5376 = dma.done [#allocation3], 32
    $region97: #{block_forward.1} parent=1 // pred_fallthru
      _
    // Predicated region
    $region98: #{block_forward.1} parent=1 // pred_check
      _
    $region99: #{block_forward.1} parent=1 // pred_check_branch
      %5378 = sbr.rel (0) target = $region101
    $region100: #{block_forward.1} parent=1 // pred_region
      %5380 = dma.done [#allocation5], 32
    $region101: #{block_forward.1} parent=1 // pred_fallthru
      _
    %5381 = vsyncpa [#allocation3], 1
    %5382 = vsyncpa [#allocation5], 1

</llo_original>
